<compile_context>
chip_gen: v6e
topology: v6e:2x2x1
jax: 0.10.0
libtpu: 0.0.40
codegen_flags: <defaults>
</compile_context>

<pallas_src>
import jax
import jax.numpy as jnp
from jax.experimental import pallas as pl
from jax.experimental.pallas import tpu as pltpu


# --------------------------------------------------------------------------- #
# Pallas kernel: fused (mask*text) -> Linear -> SiLU -> Linear -> SiLU -> Linear
# --------------------------------------------------------------------------- #
def _silu(x):
    # x * sigmoid(x): logistic uses the EUP slot instead of a precise VALU divide.
    return x * jax.nn.sigmoid(x)


def _text_embed_kernel(text_ref, mask_ref, hobj_ref,
                       w1t_ref, w2_ref, b2_ref, w3_ref, b3_ref,
                       o_ref):
    BB, Lp, Dt = text_ref.shape
    Hd = w2_ref.shape[0]
    Do = o_ref.shape[-1]

    # Masked text; the bbox/null/bias per-object contribution of the first
    # Linear is pre-folded into hobj (wrapper) by linearity.
    m3 = mask_ref[...][:, :, None]                            # [BB,1,1] f32
    tm = (text_ref[...] * m3).reshape(BB * Lp, Dt)            # f32 rows

    h1 = jnp.dot(tm.astype(jnp.bfloat16), w1t_ref[...],
                 preferred_element_type=jnp.float32)          # [BB*Lp, Hd]
    h1 = h1.reshape(BB, Lp, Hd) + hobj_ref[...][:, None, :]
    h1 = _silu(h1).reshape(BB * Lp, Hd)

    h2 = jnp.dot(h1.astype(jnp.bfloat16), w2_ref[...],
                 preferred_element_type=jnp.float32) + b2_ref[...]
    h2 = _silu(h2)

    out = jnp.dot(h2.astype(jnp.bfloat16), w3_ref[...],
                  preferred_element_type=jnp.float32) + b3_ref[...]
    o_ref[...] = out.reshape(BB, Lp, Do).astype(o_ref.dtype)


# --------------------------------------------------------------------------- #
# Wrapper helpers
# --------------------------------------------------------------------------- #
def _round_up(x, m):
    return (x + m - 1) // m * m


def get_fourier_embeds_from_boundingbox(embed_dim, box):
    """box: [G, Nb, 4] -> [G, Nb, embed_dim*2*4] (matches the PyTorch helper)."""
    G, Nb = box.shape[:2]
    freqs = 100.0 ** (jnp.arange(embed_dim, dtype=box.dtype) / embed_dim)     # [F]
    emb = freqs[None, None, None, :] * box[..., None]                         # [G,Nb,4,F]
    emb = jnp.stack([jnp.sin(emb), jnp.cos(emb)], axis=-1)                    # [G,Nb,4,F,2]
    emb = jnp.transpose(emb, (0, 1, 3, 4, 2)).reshape(G, Nb, embed_dim * 2 * 4)
    return emb


_ROW_TARGET = 1024    # MXU rows per grid step (BB * Lp)


def _choose_block(G, Lp):
    """Pick the number of (batch*object) pairs processed per grid step."""
    bb = max(8, _round_up(pl.cdiv(_ROW_TARGET, Lp), 8))
    if G <= bb:
        return G                                   # one full block, no padding
    # keep >= 2 grid steps so both v7x TensorCores get work on the parallel axis
    bb = min(bb, _round_up(pl.cdiv(G, 2), 8))
    # prefer a BB (multiple of 8) that divides G -> every block is full
    for cand in range(bb, 7, -8):
        if G % cand == 0:
            return cand
    return bb                                      # ragged tail: Pallas clips it


def _vmem_limit_bytes(BB, Lp, Dt, Hd, Do, io_bytes):
    rows = BB * Lp
    blocks = 2 * (BB * Lp * Dt * io_bytes          # text (double buffered)
                  + BB * 4                         # mask
                  + BB * Hd * 4                    # h_obj
                  + BB * Lp * Do * io_bytes)       # output
    weights = 2 * ((Dt * Hd + Hd * Hd + Hd * Do) * 2 + (Hd + Do) * 4)
    interm = 4 * rows * Hd * 4                     # live f32 intermediates
    est = int((blocks + weights + interm) * 1.5)
    return min(max(est, 32 << 20), 48 << 20)


# --------------------------------------------------------------------------- #
# Forward
# --------------------------------------------------------------------------- #
def text_embedding_net_instdiff(object_masks, bbox_embeddings, text_embeddings,
                                params):
    """object_masks: [B,N]; bbox_embeddings: [B,N,L,4]; text_embeddings: [B,N,L,Dt]."""
    B, N, L, Dt = text_embeddings.shape
    F = params['fourier_freqs']
    P = F * 2 * 4
    W1, b1 = params['w1'], params['b1']
    W2, b2 = params['w2'], params['b2']
    W3, b3 = params['w3'], params['b3']
    Hd = W1.shape[1]
    Do = W3.shape[1]
    null = params['null_text_feature']                        # [Dt + P]
    hp = jax.lax.Precision.HIGHEST

    G = B * N
    # TODO(synk): the original torch.cat needs matching token counts (77 vs 1);
    # we broadcast the single first-token bbox embedding across all L tokens.
    box = bbox_embeddings.reshape(G, L, 4)[:, :1]              # [G,1,4]
    pos = get_fourier_embeds_from_boundingbox(F, box).reshape(G, P)
    pos = pos.astype(jnp.float32)

    mask = object_masks.reshape(G, 1).astype(jnp.float32)      # [G,1]

    # Hoisted per-object part of the first Linear (exact by linearity):
    #   h_obj = (pos*m + (1-m)*null_p) @ W1p + b1 + (1-m) * (null_t @ W1t)
    W1t, W1p = W1[:Dt], W1[Dt:]
    null_t, null_p = null[:Dt], null[Dt:]
    pm = pos * mask + (1.0 - mask) * null_p[None, :]
    h_obj = (jnp.dot(pm, W1p, precision=hp) + b1[None, :]
             + (1.0 - mask) * jnp.dot(null_t, W1t, precision=hp)[None, :])
    h_obj = h_obj.astype(jnp.float32)                          # [G, Hd]

    # Pad the token axis to a sublane multiple (no-op when L % 8 == 0).
    Lp = _round_up(L, 8)
    text_flat = text_embeddings.reshape(G, L, Dt)
    if Lp != L:
        text_flat = jnp.pad(text_flat, ((0, 0), (0, Lp - L), (0, 0)))

    BB = _choose_block(G, Lp)
    grid = pl.cdiv(G, BB)

    # bf16 MXU operands (f32 accumulation inside the kernel).
    w1t_bf = W1t.astype(jnp.bfloat16)
    w2_bf = W2.astype(jnp.bfloat16)
    w3_bf = W3.astype(jnp.bfloat16)
    b2r = b2.reshape(1, Hd).astype(jnp.float32)
    b3r = b3.reshape(1, Do).astype(jnp.float32)

    io_bytes = jnp.dtype(text_embeddings.dtype).itemsize
    vmem_limit = _vmem_limit_bytes(BB, Lp, Dt, Hd, Do, io_bytes)

    def _run(single_buffer_weights):
        def _const(shape):
            n = len(shape)

            def idx(i):
                return (0,) * n

            if single_buffer_weights:
                return pl.BlockSpec(shape, idx, pipeline_mode=pl.Buffered(1))
            return pl.BlockSpec(shape, idx)

        return pl.pallas_call(
            _text_embed_kernel,
            out_shape=jax.ShapeDtypeStruct((G, Lp, Do), text_embeddings.dtype),
            grid_spec=pltpu.PrefetchScalarGridSpec(
                num_scalar_prefetch=0,
                grid=(grid,),
                in_specs=[
                    pl.BlockSpec((BB, Lp, Dt), lambda i: (i, 0, 0)),   # text
                    pl.BlockSpec((BB, 1), lambda i: (i, 0)),           # object mask
                    pl.BlockSpec((BB, Hd), lambda i: (i, 0)),          # hoisted h_obj
                    _const((Dt, Hd)),                                  # W1 text rows (bf16)
                    _const((Hd, Hd)),                                  # W2 (bf16)
                    _const((1, Hd)),                                   # b2
                    _const((Hd, Do)),                                  # W3 (bf16)
                    _const((1, Do)),                                   # b3
                ],
                out_specs=pl.BlockSpec((BB, Lp, Do), lambda i: (i, 0, 0)),
            ),
            compiler_params=pltpu.CompilerParams(
                dimension_semantics=("parallel",),
                vmem_limit_bytes=vmem_limit),
        )(text_flat, mask, h_obj, w1t_bf, w2_bf, b2r, w3_bf, b3r)

    try:
        out = _run(single_buffer_weights=True)
    except Exception:
        # pl.Buffered(1) not supported by this JAX version -> default buffering.
        out = _run(single_buffer_weights=False)

    return out[:, :L, :].reshape(B, N, L, Do)


# --------------------------------------------------------------------------- #
# Parameters
# --------------------------------------------------------------------------- #
def init_params(key, text_feat_dim, out_dim, fourier_freqs=8, hidden=512):
    P = fourier_freqs * 2 * 4
    d_in = text_feat_dim + P
    ks = jax.random.split(key, 6)

    def rnd(k, shape, s=0.05):
        return jax.random.normal(k, shape, jnp.float32) * s

    return dict(
        fourier_freqs=fourier_freqs,
        w1=rnd(ks[0], (d_in, hidden)), b1=rnd(ks[1], (hidden,)),
        w2=rnd(ks[2], (hidden, hidden)), b2=rnd(ks[3], (hidden,)),
        w3=rnd(ks[4], (hidden, out_dim)), b3=rnd(ks[5], (out_dim,)),
        # matches nn.Parameter(torch.zeros(...)) in the original module
        null_text_feature=jnp.zeros((d_in,), jnp.float32),
    )


# --------------------------------------------------------------------------- #
# Pure-JAX reference (f32, HIGHEST precision)
# --------------------------------------------------------------------------- #
def reference_forward(object_masks, bbox_embeddings, text_embeddings, params):
    hp = jax.lax.Precision.HIGHEST
    B, N, L, Dt = text_embeddings.shape
    F = params['fourier_freqs']
    P = F * 2 * 4
    box = bbox_embeddings.reshape(B * N, L, 4)[:, :1]
    pos = get_fourier_embeds_from_boundingbox(F, box).reshape(B, N, 1, P)
    pos = jnp.broadcast_to(pos, (B, N, L, P)).astype(text_embeddings.dtype)
    emb = jnp.concatenate([text_embeddings, pos], axis=-1)
    m = object_masks[:, :, None, None].astype(emb.dtype)
    null = params['null_text_feature'][None, None, None, :]
    emb = emb * m + (1.0 - m) * null

    def silu(x):
        return x * jax.nn.sigmoid(x)

    h = silu(jnp.dot(emb, params['w1'], precision=hp) + params['b1'])
    h = silu(jnp.dot(h, params['w2'], precision=hp) + params['b2'])
    return jnp.dot(h, params['w3'], precision=hp) + params['b3']


# --------------------------------------------------------------------------- #
if __name__ == "__main__":
    key = jax.random.PRNGKey(0)
    B, N, L = 2, 3, 8               # batch, num_objs, tokens (77 in production)
    text_feat_dim, out_dim = 64, 128
    fourier_freqs = 8               # -> position_dim = 64

    k1, k2, k3, kp, kn = jax.random.split(key, 5)
    text_embeddings = jax.random.normal(k1, (B, N, L, text_feat_dim), jnp.float32)
    bbox_embeddings = jax.random.uniform(k2, (B, N, L, 4), jnp.float32)
    object_masks = (jax.random.uniform(k3, (B, N)) > 0.3).astype(jnp.float32)

    params = init_params(kp, text_feat_dim, out_dim, fourier_freqs)
    # The module zero-initializes null_text_feature; use a nonzero value here so
    # the masked (null) path is actually exercised by the check.
    params['null_text_feature'] = 0.05 * jax.random.normal(
        kn, params['null_text_feature'].shape, jnp.float32)

    out = text_embedding_net_instdiff(object_masks, bbox_embeddings,
                                      text_embeddings, params)
    out = jax.block_until_ready(out)

    ref = reference_forward(object_masks, bbox_embeddings, text_embeddings, params)
    ref = jax.block_until_ready(ref)

    assert out.shape == (B, N, L, out_dim)
    max_diff = float(jnp.max(jnp.abs(out - ref)))
    # bf16 matmul operands vs an f32 HIGHEST-precision reference -> loose tol.
    assert max_diff < 5e-2, f"mismatch vs reference: max |diff| = {max_diff}"

    print("KERNEL_OK")
</pallas_src>

<mosaic_0001>
module attributes {stable_mosaic.version = 11 : i64} {
  func.func @_text_embed_kernel(%arg0: i32, %arg1: memref<6x8x64xf32, #tpu.memory_space<vmem>>, %arg2: memref<6x1xf32, #tpu.memory_space<vmem>>, %arg3: memref<6x512xf32, #tpu.memory_space<vmem>>, %arg4: memref<64x512xbf16, #tpu.memory_space<vmem>>, %arg5: memref<512x512xbf16, #tpu.memory_space<vmem>>, %arg6: memref<1x512xf32, #tpu.memory_space<vmem>>, %arg7: memref<512x128xbf16, #tpu.memory_space<vmem>>, %arg8: memref<1x128xf32, #tpu.memory_space<vmem>>, %arg9: memref<6x8x128xf32, #tpu.memory_space<vmem>>) attributes {dimension_semantics = [#tpu.dimension_semantics<parallel>], iteration_bounds = array<i64: 1>, scalar_prefetch = 0 : i64, scratch_operands = 0 : i64, tpu.core_type = #tpu.core_type<tc>, window_params = [{transform_indices = @transform_0, window_bounds = array<i64: 6, 8, 64>}, {transform_indices = @transform_1, window_bounds = array<i64: 6, 1>}, {transform_indices = @transform_2, window_bounds = array<i64: 6, 512>}, {pipeline_mode = #tpu.pipeline_mode<synchronous>, transform_indices = @transform_3, window_bounds = array<i64: 64, 512>}, {pipeline_mode = #tpu.pipeline_mode<synchronous>, transform_indices = @transform_4, window_bounds = array<i64: 512, 512>}, {pipeline_mode = #tpu.pipeline_mode<synchronous>, transform_indices = @transform_5, window_bounds = array<i64: 1, 512>}, {pipeline_mode = #tpu.pipeline_mode<synchronous>, transform_indices = @transform_6, window_bounds = array<i64: 512, 128>}, {pipeline_mode = #tpu.pipeline_mode<synchronous>, transform_indices = @transform_7, window_bounds = array<i64: 1, 128>}, {transform_indices = @transform_8, window_bounds = array<i64: 6, 8, 128>}]} {
    %c0 = arith.constant 0 : index
    %c0_0 = arith.constant 0 : index
    %0 = vector.load %arg2[%c0, %c0_0] : memref<6x1xf32, #tpu.memory_space<vmem>>, vector<6x1xf32>
    %1 = vector.shape_cast %0 : vector<6x1xf32> to vector<6x1x1xf32>
    %c0_1 = arith.constant 0 : index
    %c0_2 = arith.constant 0 : index
    %c0_3 = arith.constant 0 : index
    %2 = vector.load %arg1[%c0_1, %c0_2, %c0_3] : memref<6x8x64xf32, #tpu.memory_space<vmem>>, vector<6x8x64xf32>
    %3 = vector.broadcast %1 : vector<6x1x1xf32> to vector<6x8x64xf32>
    %4 = arith.mulf %2, %3 : vector<6x8x64xf32>
    %5 = vector.shape_cast %4 : vector<6x8x64xf32> to vector<48x64xf32>
    %6 = arith.truncf %5 : vector<48x64xf32> to vector<48x64xbf16>
    %c0_4 = arith.constant 0 : index
    %c0_5 = arith.constant 0 : index
    %7 = vector.load %arg4[%c0_4, %c0_5] : memref<64x512xbf16, #tpu.memory_space<vmem>>, vector<64x512xbf16>
    %cst = arith.constant dense<0.000000e+00> : vector<48x512xf32>
    %8 = tpu.matmul %6, %7, %cst {dimension_numbers = #tpu.dot_dimension_numbers<[1], [0], [0], [1], [0, 0, 1, 1], [], []>} : vector<48x64xbf16>, vector<64x512xbf16>, vector<48x512xf32> -> vector<48x512xf32>
    %9 = vector.shape_cast %8 : vector<48x512xf32> to vector<6x8x512xf32>
    %c0_6 = arith.constant 0 : index
    %c0_7 = arith.constant 0 : index
    %10 = vector.load %arg3[%c0_6, %c0_7] : memref<6x512xf32, #tpu.memory_space<vmem>>, vector<6x512xf32>
    %11 = vector.shape_cast %10 : vector<6x512xf32> to vector<6x1x512xf32>
    %12 = vector.broadcast %11 : vector<6x1x512xf32> to vector<6x8x512xf32>
    %13 = arith.addf %9, %12 : vector<6x8x512xf32>
    %14 = arith.negf %13 : vector<6x8x512xf32>
    %15 = math.exp %14 : vector<6x8x512xf32>
    %cst_8 = arith.constant 1.000000e+00 : f32
    %16 = vector.broadcast %cst_8 : f32 to vector<6x8x512xf32>
    %17 = arith.addf %16, %15 : vector<6x8x512xf32>
    %18 = arith.divf %16, %17 : vector<6x8x512xf32>
    %19 = arith.mulf %13, %18 : vector<6x8x512xf32>
    %20 = vector.shape_cast %19 : vector<6x8x512xf32> to vector<48x512xf32>
    %21 = arith.truncf %20 : vector<48x512xf32> to vector<48x512xbf16>
    %c0_9 = arith.constant 0 : index
    %c0_10 = arith.constant 0 : index
    %22 = vector.load %arg5[%c0_9, %c0_10] : memref<512x512xbf16, #tpu.memory_space<vmem>>, vector<512x512xbf16>
    %cst_11 = arith.constant dense<0.000000e+00> : vector<48x512xf32>
    %23 = tpu.matmul %21, %22, %cst_11 {dimension_numbers = #tpu.dot_dimension_numbers<[1], [0], [0], [1], [0, 0, 1, 1], [], []>} : vector<48x512xbf16>, vector<512x512xbf16>, vector<48x512xf32> -> vector<48x512xf32>
    %c0_12 = arith.constant 0 : index
    %c0_13 = arith.constant 0 : index
    %24 = vector.load %arg6[%c0_12, %c0_13] : memref<1x512xf32, #tpu.memory_space<vmem>>, vector<1x512xf32>
    %25 = vector.broadcast %24 : vector<1x512xf32> to vector<48x512xf32>
    %26 = arith.addf %23, %25 : vector<48x512xf32>
    %27 = arith.negf %26 : vector<48x512xf32>
    %28 = math.exp %27 : vector<48x512xf32>
    %cst_14 = arith.constant 1.000000e+00 : f32
    %29 = vector.broadcast %cst_14 : f32 to vector<48x512xf32>
    %30 = arith.addf %29, %28 : vector<48x512xf32>
    %31 = arith.divf %29, %30 : vector<48x512xf32>
    %32 = arith.mulf %26, %31 : vector<48x512xf32>
    %33 = arith.truncf %32 : vector<48x512xf32> to vector<48x512xbf16>
    %c0_15 = arith.constant 0 : index
    %c0_16 = arith.constant 0 : index
    %34 = vector.load %arg7[%c0_15, %c0_16] : memref<512x128xbf16, #tpu.memory_space<vmem>>, vector<512x128xbf16>
    %cst_17 = arith.constant dense<0.000000e+00> : vector<48x128xf32>
    %35 = tpu.matmul %33, %34, %cst_17 {dimension_numbers = #tpu.dot_dimension_numbers<[1], [0], [0], [1], [0, 0, 1, 1], [], []>} : vector<48x512xbf16>, vector<512x128xbf16>, vector<48x128xf32> -> vector<48x128xf32>
    %c0_18 = arith.constant 0 : index
    %c0_19 = arith.constant 0 : index
    %36 = vector.load %arg8[%c0_18, %c0_19] : memref<1x128xf32, #tpu.memory_space<vmem>>, vector<1x128xf32>
    %37 = vector.broadcast %36 : vector<1x128xf32> to vector<48x128xf32>
    %38 = arith.addf %35, %37 : vector<48x128xf32>
    %39 = vector.shape_cast %38 : vector<48x128xf32> to vector<6x8x128xf32>
    %c0_20 = arith.constant 0 : index
    %c0_21 = arith.constant 0 : index
    %c0_22 = arith.constant 0 : index
    %40 = vector.load %arg9[%c0_20, %c0_21, %c0_22] : memref<6x8x128xf32, #tpu.memory_space<vmem>>, vector<6x8x128xf32>
    tpu.vector_store %arg9[%c0_20, %c0_21, %c0_22], %39 {strides = array<i32>} : memref<6x8x128xf32, #tpu.memory_space<vmem>>, vector<6x8x128xf32>,
    return
  }
  func.func @transform_0(%arg0: i32) -> (i32, i32, i32) {
    %c0_i32 = arith.constant 0 : i32
    %c0_i32_0 = arith.constant 0 : i32
    %c0_i32_1 = arith.constant 0 : i32
    return %arg0, %c0_i32, %c0_i32_0 : i32, i32, i32
  }
  func.func @transform_1(%arg0: i32) -> (i32, i32) {
    %c0_i32 = arith.constant 0 : i32
    %c0_i32_0 = arith.constant 0 : i32
    return %arg0, %c0_i32 : i32, i32
  }
  func.func @transform_2(%arg0: i32) -> (i32, i32) {
    %c0_i32 = arith.constant 0 : i32
    %c0_i32_0 = arith.constant 0 : i32
    return %arg0, %c0_i32 : i32, i32
  }
  func.func @transform_3(%arg0: i32) -> (i32, i32) {
    %c0_i32 = arith.constant 0 : i32
    %c0_i32_0 = arith.constant 0 : i32
    %c0_i32_1 = arith.constant 0 : i32
    return %c0_i32, %c0_i32_0 : i32, i32
  }
  func.func @transform_4(%arg0: i32) -> (i32, i32) {
    %c0_i32 = arith.constant 0 : i32
    %c0_i32_0 = arith.constant 0 : i32
    %c0_i32_1 = arith.constant 0 : i32
    return %c0_i32, %c0_i32_0 : i32, i32
  }
  func.func @transform_5(%arg0: i32) -> (i32, i32) {
    %c0_i32 = arith.constant 0 : i32
    %c0_i32_0 = arith.constant 0 : i32
    %c0_i32_1 = arith.constant 0 : i32
    return %c0_i32, %c0_i32_0 : i32, i32
  }
  func.func @transform_6(%arg0: i32) -> (i32, i32) {
    %c0_i32 = arith.constant 0 : i32
    %c0_i32_0 = arith.constant 0 : i32
    %c0_i32_1 = arith.constant 0 : i32
    return %c0_i32, %c0_i32_0 : i32, i32
  }
  func.func @transform_7(%arg0: i32) -> (i32, i32) {
    %c0_i32 = arith.constant 0 : i32
    %c0_i32_0 = arith.constant 0 : i32
    %c0_i32_1 = arith.constant 0 : i32
    return %c0_i32, %c0_i32_0 : i32, i32
  }
  func.func @transform_8(%arg0: i32) -> (i32, i32, i32) {
    %c0_i32 = arith.constant 0 : i32
    %c0_i32_0 = arith.constant 0 : i32
    %c0_i32_1 = arith.constant 0 : i32
    return %arg0, %c0_i32, %c0_i32_0 : i32, i32, i32
  }
}

module attributes {stable_mosaic.version = 11 : i64} {
  func.func @_text_embed_kernel(%arg0: i32, %arg1: memref<6x8x64xf32, #tpu.memory_space<vmem>>, %arg2: memref<6x1xf32, #tpu.memory_space<vmem>>, %arg3: memref<6x512xf32, #tpu.memory_space<vmem>>, %arg4: memref<64x512xbf16, #tpu.memory_space<vmem>>, %arg5: memref<512x512xbf16, #tpu.memory_space<vmem>>, %arg6: memref<1x512xf32, #tpu.memory_space<vmem>>, %arg7: memref<512x128xbf16, #tpu.memory_space<vmem>>, %arg8: memref<1x128xf32, #tpu.memory_space<vmem>>, %arg9: memref<6x8x128xf32, #tpu.memory_space<vmem>>) attributes {dimension_semantics = [#tpu.dimension_semantics<parallel>], iteration_bounds = array<i64: 1>, scalar_prefetch = 0 : i64, scratch_operands = 0 : i64, tpu.core_type = #tpu.core_type<tc>, window_params = [{transform_indices = @transform_0, window_bounds = array<i64: 6, 8, 64>}, {transform_indices = @transform_1, window_bounds = array<i64: 6, 1>}, {transform_indices = @transform_2, window_bounds = array<i64: 6, 512>}, {pipeline_mode = #tpu.pipeline_mode<synchronous>, transform_indices = @transform_3, window_bounds = array<i64: 64, 512>}, {pipeline_mode = #tpu.pipeline_mode<synchronous>, transform_indices = @transform_4, window_bounds = array<i64: 512, 512>}, {pipeline_mode = #tpu.pipeline_mode<synchronous>, transform_indices = @transform_5, window_bounds = array<i64: 1, 512>}, {pipeline_mode = #tpu.pipeline_mode<synchronous>, transform_indices = @transform_6, window_bounds = array<i64: 512, 128>}, {pipeline_mode = #tpu.pipeline_mode<synchronous>, transform_indices = @transform_7, window_bounds = array<i64: 1, 128>}, {transform_indices = @transform_8, window_bounds = array<i64: 6, 8, 128>}]} {
    %c0 = arith.constant 0 : index
    %c0_0 = arith.constant 0 : index
    %0 = vector.load %arg2[%c0, %c0_0] : memref<6x1xf32, #tpu.memory_space<vmem>>, vector<6x1xf32>
    %1 = vector.shape_cast %0 : vector<6x1xf32> to vector<6x1x1xf32>
    %c0_1 = arith.constant 0 : index
    %c0_2 = arith.constant 0 : index
    %c0_3 = arith.constant 0 : index
    %2 = vector.load %arg1[%c0_1, %c0_2, %c0_3] : memref<6x8x64xf32, #tpu.memory_space<vmem>>, vector<6x8x64xf32>
    %3 = vector.broadcast %1 : vector<6x1x1xf32> to vector<6x8x64xf32>
    %4 = arith.mulf %2, %3 : vector<6x8x64xf32>
    %5 = vector.shape_cast %4 : vector<6x8x64xf32> to vector<48x64xf32>
    %6 = arith.truncf %5 : vector<48x64xf32> to vector<48x64xbf16>
    %c0_4 = arith.constant 0 : index
    %c0_5 = arith.constant 0 : index
    %7 = vector.load %arg4[%c0_4, %c0_5] : memref<64x512xbf16, #tpu.memory_space<vmem>>, vector<64x512xbf16>
    %cst = arith.constant dense<0.000000e+00> : vector<48x512xf32>
    %8 = tpu.matmul %6, %7, %cst {dimension_numbers = #tpu.dot_dimension_numbers<[1], [0], [0], [1], [0, 0, 1, 1], [], []>} : vector<48x64xbf16>, vector<64x512xbf16>, vector<48x512xf32> -> vector<48x512xf32>
    %9 = vector.shape_cast %8 : vector<48x512xf32> to vector<6x8x512xf32>
    %c0_6 = arith.constant 0 : index
    %c0_7 = arith.constant 0 : index
    %10 = vector.load %arg3[%c0_6, %c0_7] : memref<6x512xf32, #tpu.memory_space<vmem>>, vector<6x512xf32>
    %11 = vector.shape_cast %10 : vector<6x512xf32> to vector<6x1x512xf32>
    %12 = vector.broadcast %11 : vector<6x1x512xf32> to vector<6x8x512xf32>
    %13 = arith.addf %9, %12 : vector<6x8x512xf32>
    %14 = arith.negf %13 : vector<6x8x512xf32>
    %15 = math.exp %14 : vector<6x8x512xf32>
    %cst_8 = arith.constant 1.000000e+00 : f32
    %16 = vector.broadcast %cst_8 : f32 to vector<6x8x512xf32>
    %17 = arith.addf %16, %15 : vector<6x8x512xf32>
    %18 = arith.divf %16, %17 : vector<6x8x512xf32>
    %19 = arith.mulf %13, %18 : vector<6x8x512xf32>
    %20 = vector.shape_cast %19 : vector<6x8x512xf32> to vector<48x512xf32>
    %21 = arith.truncf %20 : vector<48x512xf32> to vector<48x512xbf16>
    %c0_9 = arith.constant 0 : index
    %c0_10 = arith.constant 0 : index
    %22 = vector.load %arg5[%c0_9, %c0_10] : memref<512x512xbf16, #tpu.memory_space<vmem>>, vector<512x512xbf16>
    %cst_11 = arith.constant dense<0.000000e+00> : vector<48x512xf32>
    %23 = tpu.matmul %21, %22, %cst_11 {dimension_numbers = #tpu.dot_dimension_numbers<[1], [0], [0], [1], [0, 0, 1, 1], [], []>} : vector<48x512xbf16>, vector<512x512xbf16>, vector<48x512xf32> -> vector<48x512xf32>
    %c0_12 = arith.constant 0 : index
    %c0_13 = arith.constant 0 : index
    %24 = vector.load %arg6[%c0_12, %c0_13] : memref<1x512xf32, #tpu.memory_space<vmem>>, vector<1x512xf32>
    %25 = vector.broadcast %24 : vector<1x512xf32> to vector<48x512xf32>
    %26 = arith.addf %23, %25 : vector<48x512xf32>
    %27 = arith.negf %26 : vector<48x512xf32>
    %28 = math.exp %27 : vector<48x512xf32>
    %cst_14 = arith.constant 1.000000e+00 : f32
    %29 = vector.broadcast %cst_14 : f32 to vector<48x512xf32>
    %30 = arith.addf %29, %28 : vector<48x512xf32>
    %31 = arith.divf %29, %30 : vector<48x512xf32>
    %32 = arith.mulf %26, %31 : vector<48x512xf32>
    %33 = arith.truncf %32 : vector<48x512xf32> to vector<48x512xbf16>
    %c0_15 = arith.constant 0 : index
    %c0_16 = arith.constant 0 : index
    %34 = vector.load %arg7[%c0_15, %c0_16] : memref<512x128xbf16, #tpu.memory_space<vmem>>, vector<512x128xbf16>
    %cst_17 = arith.constant dense<0.000000e+00> : vector<48x128xf32>
    %35 = tpu.matmul %33, %34, %cst_17 {dimension_numbers = #tpu.dot_dimension_numbers<[1], [0], [0], [1], [0, 0, 1, 1], [], []>} : vector<48x512xbf16>, vector<512x128xbf16>, vector<48x128xf32> -> vector<48x128xf32>
    %c0_18 = arith.constant 0 : index
    %c0_19 = arith.constant 0 : index
    %36 = vector.load %arg8[%c0_18, %c0_19] : memref<1x128xf32, #tpu.memory_space<vmem>>, vector<1x128xf32>
    %37 = vector.broadcast %36 : vector<1x128xf32> to vector<48x128xf32>
    %38 = arith.addf %35, %37 : vector<48x128xf32>
    %39 = vector.shape_cast %38 : vector<48x128xf32> to vector<6x8x128xf32>
    %c0_20 = arith.constant 0 : index
    %c0_21 = arith.constant 0 : index
    %c0_22 = arith.constant 0 : index
    %40 = vector.load %arg9[%c0_20, %c0_21, %c0_22] : memref<6x8x128xf32, #tpu.memory_space<vmem>>, vector<6x8x128xf32>
    tpu.vector_store %arg9[%c0_20, %c0_21, %c0_22], %39 {strides = array<i32>} : memref<6x8x128xf32, #tpu.memory_space<vmem>>, vector<6x8x128xf32>,
    return
  }
  func.func @transform_0(%arg0: i32) -> (i32, i32, i32) {
    %c0_i32 = arith.constant 0 : i32
    %c0_i32_0 = arith.constant 0 : i32
    %c0_i32_1 = arith.constant 0 : i32
    return %arg0, %c0_i32, %c0_i32_0 : i32, i32, i32
  }
  func.func @transform_1(%arg0: i32) -> (i32, i32) {
    %c0_i32 = arith.constant 0 : i32
    %c0_i32_0 = arith.constant 0 : i32
    return %arg0, %c0_i32 : i32, i32
  }
  func.func @transform_2(%arg0: i32) -> (i32, i32) {
    %c0_i32 = arith.constant 0 : i32
    %c0_i32_0 = arith.constant 0 : i32
    return %arg0, %c0_i32 : i32, i32
  }
  func.func @transform_3(%arg0: i32) -> (i32, i32) {
    %c0_i32 = arith.constant 0 : i32
    %c0_i32_0 = arith.constant 0 : i32
    %c0_i32_1 = arith.constant 0 : i32
    return %c0_i32, %c0_i32_0 : i32, i32
  }
  func.func @transform_4(%arg0: i32) -> (i32, i32) {
    %c0_i32 = arith.constant 0 : i32
    %c0_i32_0 = arith.constant 0 : i32
    %c0_i32_1 = arith.constant 0 : i32
    return %c0_i32, %c0_i32_0 : i32, i32
  }
  func.func @transform_5(%arg0: i32) -> (i32, i32) {
    %c0_i32 = arith.constant 0 : i32
    %c0_i32_0 = arith.constant 0 : i32
    %c0_i32_1 = arith.constant 0 : i32
    return %c0_i32, %c0_i32_0 : i32, i32
  }
  func.func @transform_6(%arg0: i32) -> (i32, i32) {
    %c0_i32 = arith.constant 0 : i32
    %c0_i32_0 = arith.constant 0 : i32
    %c0_i32_1 = arith.constant 0 : i32
    return %c0_i32, %c0_i32_0 : i32, i32
  }
  func.func @transform_7(%arg0: i32) -> (i32, i32) {
    %c0_i32 = arith.constant 0 : i32
    %c0_i32_0 = arith.constant 0 : i32
    %c0_i32_1 = arith.constant 0 : i32
    return %c0_i32, %c0_i32_0 : i32, i32
  }
  func.func @transform_8(%arg0: i32) -> (i32, i32, i32) {
    %c0_i32 = arith.constant 0 : i32
    %c0_i32_0 = arith.constant 0 : i32
    %c0_i32_1 = arith.constant 0 : i32
    return %arg0, %c0_i32, %c0_i32_0 : i32, i32, i32
  }
}

</mosaic_0001>

<llo_original>
// kernel: tpu_custom_call.1
$region0: #{tpu_custom_call.1}
  #allocation0 [shape = 'u32[]', space=smem, size = 0x4, offset = 0x4, fixed_abs, tag = 'smem constant byte address 0x4 - core index']
  #allocation1 [shape = 'u32[144,128]{1,0:T(1,128)}', space=vmem, size = 0x12000, scoped, tag = 'internal scratch']
  %s0 = inlined_call_operand.hbm [shape: f32[6,8,64], index: 0, kind: input, shape index: {}]
  %s1 = inlined_call_operand.vmem [shape: f32[6,1], index: 1, kind: input, shape index: {}]
  %s2 = inlined_call_operand.hbm [shape: f32[6,512], index: 2, kind: input, shape index: {}]
  %s3 = inlined_call_operand.hbm [shape: bf16[64,512], index: 3, kind: input, shape index: {}]
  %s4 = inlined_call_operand.hbm [shape: bf16[512,512], index: 4, kind: input, shape index: {}]
  %s5 = inlined_call_operand.vmem [shape: f32[1,512], index: 5, kind: input, shape index: {}]
  %s6 = inlined_call_operand.hbm [shape: bf16[512,128], index: 6, kind: input, shape index: {}]
  %s7 = inlined_call_operand.vmem [shape: f32[1,128], index: 7, kind: input, shape index: {}]
  %s8 = inlined_call_operand.hbm [shape: f32[6,8,128], index: 8, kind: output, shape index: {}]
  %s9 = sld [smem:[#allocation0]]
  $region62: #{tpu_custom_call.1} parent=0
    _
  %s11 = ssub.s32 1, %s9
  %s12 = scalar_select 0, %s11, %s9
  $region1: #{tpu_custom_call.1} parent=0
    #allocation2 [shape = 'u8[24576]{0}', space=vmem, size = 0x6000, scoped, tag = 'input window, operand 0, single buffered']
    #allocation3 [shape = 's32[1]{0}', space=sflag, size = 0x4, scoped, tag = 'scoped memory for tpu_custom_call.1']
    #allocation4 [shape = 's32[1]{0}', space=sflag, size = 0x4, scoped, tag = 'scoped memory for tpu_custom_call.1']
    #allocation5 [shape = 'u8[16384]{0}', space=vmem, size = 0x4000, scoped, tag = 'input window, operand 2, single buffered']
    #allocation6 [shape = 's32[1]{0}', space=sflag, size = 0x4, scoped, tag = 'scoped memory for tpu_custom_call.1']
    #allocation7 [shape = 'u8[65536]{0}', space=vmem, size = 0x10000, scoped, tag = 'input window, operand 3, single buffered']
    #allocation8 [shape = 'u8[524288]{0}', space=vmem, size = 0x80000, scoped, tag = 'input window, operand 4, single buffered']
    #allocation9 [shape = 's32[1]{0}', space=sflag, size = 0x4, scoped, tag = 'scoped memory for tpu_custom_call.1']
    #allocation10 [shape = 'u8[131072]{0}', space=vmem, size = 0x20000, scoped, tag = 'input window, operand 6, single buffered']
    #allocation11 [shape = 'u8[24576]{0}', space=vmem, size = 0x6000, scoped, tag = 'output window, operand 0, single buffered']
    %13 = vsyncpa [#allocation3], 0
    %14 = vsyncpa [#allocation6], 0
    %15 = vsyncpa [#allocation9], 0
    %16 = vsyncpa [#allocation4], 0
    // Predicated region
    $region2: #{tpu_custom_call.1} parent=1 // pred_check
      _
    $region3: #{tpu_custom_call.1} parent=1 // pred_check_branch
      %18 = sbr.rel (0) target = $region5
    $region4: #{tpu_custom_call.1} parent=1 // pred_region
      %s20 = ssub.s32 768, 768
      %21 = vsyncadd [#allocation3], %s20
      %s22 = sshll.u32 [#allocation2], 4
      %s23 = int_to_ptr.vmem [resolvable:$true] %s22
      %28 = dma.hbm_to_vmem [thread:$0]  %s0, 768, %s23, [#allocation3], 128, 128, 8
    $region5: #{tpu_custom_call.1} parent=1 // pred_fallthru
      _
    // Predicated region
    $region6: #{tpu_custom_call.1} parent=1 // pred_check
      _
    $region7: #{tpu_custom_call.1} parent=1 // pred_check_branch
      %30 = sbr.rel (0) target = $region9
    $region8: #{tpu_custom_call.1} parent=1 // pred_region
      _
    $region9: #{tpu_custom_call.1} parent=1 // pred_fallthru
      _
    // Predicated region
    $region10: #{tpu_custom_call.1} parent=1 // pred_check
      _
    $region11: #{tpu_custom_call.1} parent=1 // pred_check_branch
      %32 = sbr.rel (0) target = $region13
    $region12: #{tpu_custom_call.1} parent=1 // pred_region
      %s34 = ssub.s32 512, 512
      %35 = vsyncadd [#allocation6], %s34
      %s37 = sshll.u32 [#allocation5], 4
      %s38 = int_to_ptr.vmem [resolvable:$true] %s37
      %40 = dma.hbm_to_vmem [thread:$0]  %s2, 512, %s38, [#allocation6]
    $region13: #{tpu_custom_call.1} parent=1 // pred_fallthru
      _
    // Predicated region
    $region14: #{tpu_custom_call.1} parent=1 // pred_check
      _
    $region15: #{tpu_custom_call.1} parent=1 // pred_check_branch
      %42 = sbr.rel (0) target = $region17
    $region16: #{tpu_custom_call.1} parent=1 // pred_region
      %s44 = ssub.s32 2048, 2048
      %45 = vsyncadd [#allocation6], %s44
      %s46 = sshll.u32 [#allocation7], 4
      %s47 = int_to_ptr.vmem [resolvable:$true] %s46
      %52 = dma.hbm_to_vmem [thread:$0]  %s3, 2048, %s47, [#allocation6], 256, 256, 16
    $region17: #{tpu_custom_call.1} parent=1 // pred_fallthru
      _
    // Predicated region
    $region18: #{tpu_custom_call.1} parent=1 // pred_check
      _
    $region19: #{tpu_custom_call.1} parent=1 // pred_check_branch
      %54 = sbr.rel (0) target = $region21
    $region20: #{tpu_custom_call.1} parent=1 // pred_region
      %s56 = ssub.s32 16384, 16384
      %57 = vsyncadd [#allocation9], %s56
      %s58 = sshll.u32 [#allocation8], 4
      %s59 = int_to_ptr.vmem [resolvable:$true] %s58
      %64 = dma.hbm_to_vmem [thread:$0]  %s4, 16384, %s59, [#allocation9], 256, 256, 16
    $region21: #{tpu_custom_call.1} parent=1 // pred_fallthru
      _
    // Predicated region
    $region22: #{tpu_custom_call.1} parent=1 // pred_check
      _
    $region23: #{tpu_custom_call.1} parent=1 // pred_check_branch
      %66 = sbr.rel (0) target = $region25
    $region24: #{tpu_custom_call.1} parent=1 // pred_region
      _
    $region25: #{tpu_custom_call.1} parent=1 // pred_fallthru
      _
    // Predicated region
    $region26: #{tpu_custom_call.1} parent=1 // pred_check
      _
    $region27: #{tpu_custom_call.1} parent=1 // pred_check_branch
      %68 = sbr.rel (0) target = $region29
    $region28: #{tpu_custom_call.1} parent=1 // pred_region
      %s70 = ssub.s32 4096, 4096
      %71 = vsyncadd [#allocation9], %s70
      %s72 = sshll.u32 [#allocation10], 4
      %s73 = int_to_ptr.vmem [resolvable:$true] %s72
      %78 = dma.hbm_to_vmem [thread:$0]  %s6, 4096, %s73, [#allocation9], 64, 64, 4
    $region29: #{tpu_custom_call.1} parent=1 // pred_fallthru
      _
    // Predicated region
    $region30: #{tpu_custom_call.1} parent=1 // pred_check
      _
    $region31: #{tpu_custom_call.1} parent=1 // pred_check_branch
      %80 = sbr.rel (0) target = $region33
    $region32: #{tpu_custom_call.1} parent=1 // pred_region
      _
    $region33: #{tpu_custom_call.1} parent=1 // pred_fallthru
      _
    // Predicated region
    $region34: #{tpu_custom_call.1} parent=1 // pred_check
      _
    $region35: #{tpu_custom_call.1} parent=1 // pred_check_branch
      %82 = sbr.rel (0) target = $region37
    $region36: #{tpu_custom_call.1} parent=1 // pred_region
      %83 = dma.done [#allocation3], 768
    $region37: #{tpu_custom_call.1} parent=1 // pred_fallthru
      _
    // Predicated region
    $region38: #{tpu_custom_call.1} parent=1 // pred_check
      _
    $region39: #{tpu_custom_call.1} parent=1 // pred_check_branch
      %85 = sbr.rel (0) target = $region41
    $region40: #{tpu_custom_call.1} parent=1 // pred_region
      %86 = dma.done [#allocation6], 512
    $region41: #{tpu_custom_call.1} parent=1 // pred_fallthru
      _
    // Predicated region
    $region42: #{tpu_custom_call.1} parent=1 // pred_check
      _
    $region43: #{tpu_custom_call.1} parent=1 // pred_check_branch
      %88 = sbr.rel (0) target = $region45
    $region44: #{tpu_custom_call.1} parent=1 // pred_region
      %89 = dma.done [#allocation6], 2048
    $region45: #{tpu_custom_call.1} parent=1 // pred_fallthru
      _
    // Predicated region
    $region46: #{tpu_custom_call.1} parent=1 // pred_check
      _
    $region47: #{tpu_custom_call.1} parent=1 // pred_check_branch
      %91 = sbr.rel (0) target = $region49
    $region48: #{tpu_custom_call.1} parent=1 // pred_region
      %92 = dma.done [#allocation9], 16384
    $region49: #{tpu_custom_call.1} parent=1 // pred_fallthru
      _
    // Predicated region
    $region50: #{tpu_custom_call.1} parent=1 // pred_check
      _
    $region51: #{tpu_custom_call.1} parent=1 // pred_check_branch
      %94 = sbr.rel (0) target = $region53
    $region52: #{tpu_custom_call.1} parent=1 // pred_region
      %95 = dma.done [#allocation9], 4096
    $region53: #{tpu_custom_call.1} parent=1 // pred_fallthru
      _
    %v97 = vld [vmem:[%s1] sm:$0x3f]
    %v99 = vcombine.high %v97, %v97
    %v101 = vunpack.c.l.s4 1966171168
    %v102 = vunpack.c.0.s8 %v101
    %v103 = vlaneseq
    %v104 = vshrl.u32 %v103, 7
    %v105 = vsub.s32 %v102, %v104
    %v106 = vrot.slane %v97, %v105
    %v108 = vunpack.c.l.s4 1966171168
    %v109 = vunpack.c.0.s8 %v108
    %v110 = vlaneseq
    %v111 = vshrl.u32 %v110, 7
    %v112 = vsub.s32 %v109, %v111
    %v113 = vrot.slane %v99, %v112
    %v114 = vcombine.high %v106, %v106
    %v115 = vcombine.high %v113, %v113
    %v117 = vunpack.c.l.s4 1966171168
    %v118 = vunpack.c.0.s8 %v117
    %v119 = vlaneseq
    %v120 = vshrl.u32 %v119, 7
    %v121 = vsub.s32 %v118, %v120
    %v122 = vrot.slane %v106, %v121
    %v124 = vunpack.c.l.s4 1966171168
    %v125 = vunpack.c.0.s8 %v124
    %v126 = vlaneseq
    %v127 = vshrl.u32 %v126, 7
    %v128 = vsub.s32 %v125, %v127
    %v129 = vrot.slane %v113, %v128
    %v131 = vunpack.c.l.s4 1966171168
    %v132 = vunpack.c.0.s8 %v131
    %v133 = vlaneseq
    %v134 = vshrl.u32 %v133, 7
    %v135 = vsub.s32 %v132, %v134
    %v136 = vrot.slane %v114, %v135
    %v138 = vunpack.c.l.s4 1966171168
    %v139 = vunpack.c.0.s8 %v138
    %v140 = vlaneseq
    %v141 = vshrl.u32 %v140, 7
    %v142 = vsub.s32 %v139, %v141
    %v143 = vrot.slane %v115, %v142
    %v144 = vcombine.high %v122, %v122
    %v145 = vcombine.high %v136, %v136
    %v146 = vld [vmem:[#allocation2] sm:$0xff]
    %v147 = vld [vmem:[#allocation2 + $0x8] sm:$0xff]
    %v148 = vld [vmem:[#allocation2 + $0x10] sm:$0xff]
    %v149 = vld [vmem:[#allocation2 + $0x18] sm:$0xff]
    %v150 = vld [vmem:[#allocation2 + $0x20] sm:$0xff]
    %v151 = vld [vmem:[#allocation2 + $0x28] sm:$0xff]
    %v152 = vlaneseq
    %v153 = vshrl.u32 %v152, 7
    %v154 = vsub.s32 0, %v153
    %v155 = vrot.slane %v122, %v154
    %v156 = vlaneseq
    %v157 = vshrl.u32 %v156, 7
    %v158 = vsub.s32 0, %v157
    %v159 = vrot.slane %v136, %v158
    %v160 = vlaneseq
    %v161 = vshrl.u32 %v160, 7
    %v162 = vsub.s32 0, %v161
    %v163 = vrot.slane %v144, %v162
    %v164 = vlaneseq
    %v165 = vshrl.u32 %v164, 7
    %v166 = vsub.s32 0, %v165
    %v167 = vrot.slane %v145, %v166
    %v168 = vlaneseq
    %v169 = vshrl.u32 %v168, 7
    %v170 = vsub.s32 0, %v169
    %v171 = vrot.slane %v129, %v170
    %v172 = vlaneseq
    %v173 = vshrl.u32 %v172, 7
    %v174 = vsub.s32 0, %v173
    %v175 = vrot.slane %v143, %v174
    %176 = vset.pattern.permute.xlu0 0
    %177 = vperm.xlu0 %176, %v155
    %v178 = vpop.permute.xlu0 %177
    %180 = vset.pattern.permute.xlu0 0
    %181 = vperm.xlu0 %180, %v159
    %v182 = vpop.permute.xlu0 %181
    %184 = vset.pattern.permute.xlu0 0
    %185 = vperm.xlu0 %184, %v163
    %v186 = vpop.permute.xlu0 %185
    %188 = vset.pattern.permute.xlu0 0
    %189 = vperm.xlu0 %188, %v167
    %v190 = vpop.permute.xlu0 %189
    %192 = vset.pattern.permute.xlu0 0
    %193 = vperm.xlu0 %192, %v171
    %v194 = vpop.permute.xlu0 %193
    %196 = vset.pattern.permute.xlu0 0
    %197 = vperm.xlu0 %196, %v175
    %v198 = vpop.permute.xlu0 %197
    %v200 = vmul.f32 %v146, %v178
    %v201 = vmul.f32 %v147, %v182
    %v202 = vmul.f32 %v148, %v186
    %v203 = vmul.f32 %v149, %v190
    %v204 = vmul.f32 %v150, %v194
    %v205 = vmul.f32 %v151, %v198
    %v206 = vpack.c.bf16 %v201, %v200
    %v207 = vpack.c.bf16 %v203, %v202
    %v208 = vpack.c.bf16 %v205, %v204
    %v209 = vld [vmem:[#allocation7] sm:$0xff]
    %v210 = vld [vmem:[#allocation7 + $0x8] sm:$0xff]
    %v211 = vld [vmem:[#allocation7 + $0x10] sm:$0xff]
    %v212 = vld [vmem:[#allocation7 + $0x18] sm:$0xff]
    %v213 = vld [vmem:[#allocation7 + $0x20] sm:$0xff]
    %v214 = vld [vmem:[#allocation7 + $0x28] sm:$0xff]
    %v215 = vld [vmem:[#allocation7 + $0x30] sm:$0xff]
    %v216 = vld [vmem:[#allocation7 + $0x38] sm:$0xff]
    %v217 = vld [vmem:[#allocation7 + $0x40] sm:$0xff]
    %v218 = vld [vmem:[#allocation7 + $0x48] sm:$0xff]
    %v219 = vld [vmem:[#allocation7 + $0x50] sm:$0xff]
    %v220 = vld [vmem:[#allocation7 + $0x58] sm:$0xff]
    %v221 = vld [vmem:[#allocation7 + $0x60] sm:$0xff]
    %v222 = vld [vmem:[#allocation7 + $0x68] sm:$0xff]
    %v223 = vld [vmem:[#allocation7 + $0x70] sm:$0xff]
    %v224 = vld [vmem:[#allocation7 + $0x78] sm:$0xff]
    %v241 = vunpack.c.l.b16 %v209
    %v242 = vunpack.c.h.b16 %v209
    %v243 = vunpack.c.l.b16 %v210
    %v244 = vunpack.c.h.b16 %v210
    %v245 = vunpack.c.l.b16 %v211
    %v246 = vunpack.c.h.b16 %v211
    %v247 = vunpack.c.l.b16 %v212
    %v248 = vunpack.c.h.b16 %v212
    %v249 = vunpack.c.l.b16 %v213
    %v250 = vunpack.c.h.b16 %v213
    %v251 = vunpack.c.l.b16 %v214
    %v252 = vunpack.c.h.b16 %v214
    %v253 = vunpack.c.l.b16 %v215
    %v254 = vunpack.c.h.b16 %v215
    %v255 = vunpack.c.l.b16 %v216
    %v256 = vunpack.c.h.b16 %v216
    %v257 = vunpack.c.l.b16 %v217
    %v258 = vunpack.c.h.b16 %v217
    %v259 = vunpack.c.l.b16 %v218
    %v260 = vunpack.c.h.b16 %v218
    %v261 = vunpack.c.l.b16 %v219
    %v262 = vunpack.c.h.b16 %v219
    %v263 = vunpack.c.l.b16 %v220
    %v264 = vunpack.c.h.b16 %v220
    %v265 = vunpack.c.l.b16 %v221
    %v266 = vunpack.c.h.b16 %v221
    %v267 = vunpack.c.l.b16 %v222
    %v268 = vunpack.c.h.b16 %v222
    %v269 = vunpack.c.l.b16 %v223
    %v270 = vunpack.c.h.b16 %v223
    %v271 = vunpack.c.l.b16 %v224
    %v272 = vunpack.c.h.b16 %v224
    %v273 = vpack.c.b16 %v245, %v241
    %v274 = vpack.c.b16 %v246, %v242
    %v275 = vpack.c.b16 %v247, %v243
    %v276 = vpack.c.b16 %v248, %v244
    %v277 = vpack.c.b16 %v253, %v249
    %v278 = vpack.c.b16 %v254, %v250
    %v279 = vpack.c.b16 %v255, %v251
    %v280 = vpack.c.b16 %v256, %v252
    %v281 = vpack.c.b16 %v261, %v257
    %v282 = vpack.c.b16 %v262, %v258
    %v283 = vpack.c.b16 %v263, %v259
    %v284 = vpack.c.b16 %v264, %v260
    %v285 = vpack.c.b16 %v269, %v265
    %v286 = vpack.c.b16 %v270, %v266
    %v287 = vpack.c.b16 %v271, %v267
    %v288 = vpack.c.b16 %v272, %v268
    %vm305 = vcmask 523264
    %v307 = vsel %vm305, %v206, 0
    %v310 = vsel %vm305, %v207, 0
    %v313 = vsel %vm305, %v208, 0
    %315 = vmatprep.subr.bf16.mxu0 0
    %316 = vmatpush1.bf16.msra.mxu0 0
    %317 = vmatprep.subr.bf16.mxu0 0
    %318 = vmatpush1.bf16.msra.mxu0 0
    %319 = vmatprep.subr.bf16.mxu0 0
    %320 = vmatpush1.bf16.msra.mxu0 0
    %321 = vmatprep.subr.bf16.mxu0 0
    %322 = vmatpush1.bf16.msra.mxu0 0
    %323 = vmatprep.subr.bf16.mxu0 %v286
    %324 = vmatpush1.bf16.msra.mxu0 %v285
    %325 = vmatprep.subr.bf16.mxu0 %v282
    %326 = vmatpush1.bf16.msra.mxu0 %v281
    %327 = vmatprep.subr.bf16.mxu0 %v278
    %328 = vmatpush1.bf16.msra.mxu0 %v277
    %329 = vmatprep.subr.bf16.mxu0 %v274
    %330 = vmatpush1.bf16.msra.mxu0 %v273
    %331 = vmatprep.subr.bf16.mxu0 0
    %332 = vmatpush2.bf16.msra.mxu0 0
    %333 = vmatprep.subr.bf16.mxu0 0
    %334 = vmatpush2.bf16.msra.mxu0 0
    %335 = vmatprep.subr.bf16.mxu0 0
    %336 = vmatpush2.bf16.msra.mxu0 0
    %337 = vmatprep.subr.bf16.mxu0 0
    %338 = vmatpush2.bf16.msra.mxu0 0
    %339 = vmatprep.subr.bf16.mxu0 0
    %340 = vmatpush2.bf16.msra.mxu0 0
    %341 = vmatprep.subr.bf16.mxu0 0
    %342 = vmatpush2.bf16.msra.mxu0 0
    %343 = vmatprep.subr.bf16.mxu0 0
    %344 = vmatpush2.bf16.msra.mxu0 0
    %345 = vmatprep.subr.bf16.mxu0 0
    %346 = vmatpush2.bf16.msra.mxu0 0
    %347 = vmatprep.mubr.bf16.mxu0 0
    %348 = vmatmul.mubr.bf16.gmra.mxu0 %v307
    %v349 = vpop.f32.mrf.mxu0
    %v350 = vadd.f32 0.0, %v349
    %v351 = vpop.f32.mrf.mxu0
    %v352 = vadd.f32 0.0, %v351
    %v353 = vpop.f32.mrf.mxu0
    %v354 = vadd.f32 0.0, %v353
    %v355 = vpop.f32.mrf.mxu0
    %v356 = vadd.f32 0.0, %v355
    %357 = vmatprep.mubr.bf16.mxu0 0
    %358 = vmatmul.mubr.bf16.gmra.mxu0 %v310
    %v359 = vpop.f32.mrf.mxu0
    %v360 = vadd.f32 0.0, %v359
    %v361 = vpop.f32.mrf.mxu0
    %v362 = vadd.f32 0.0, %v361
    %v363 = vpop.f32.mrf.mxu0
    %v364 = vadd.f32 0.0, %v363
    %v365 = vpop.f32.mrf.mxu0
    %v366 = vadd.f32 0.0, %v365
    %367 = vmatprep.mubr.bf16.mxu0 0
    %368 = vmatmul.mubr.bf16.gmra.mxu0 %v313
    %v369 = vpop.f32.mrf.mxu0
    %v370 = vadd.f32 0.0, %v369
    %v371 = vpop.f32.mrf.mxu0
    %v372 = vadd.f32 0.0, %v371
    %v373 = vpop.f32.mrf.mxu0
    %v374 = vadd.f32 0.0, %v373
    %v375 = vpop.f32.mrf.mxu0
    %v376 = vadd.f32 0.0, %v375
    %377 = vdwg.mxu0
    %378 = vmatprep.subr.bf16.mxu0 0
    %379 = vmatpush1.bf16.msra.mxu0 0
    %380 = vmatprep.subr.bf16.mxu0 0
    %381 = vmatpush1.bf16.msra.mxu0 0
    %382 = vmatprep.subr.bf16.mxu0 0
    %383 = vmatpush1.bf16.msra.mxu0 0
    %384 = vmatprep.subr.bf16.mxu0 0
    %385 = vmatpush1.bf16.msra.mxu0 0
    %386 = vmatprep.subr.bf16.mxu0 %v288
    %387 = vmatpush1.bf16.msra.mxu0 %v287
    %388 = vmatprep.subr.bf16.mxu0 %v284
    %389 = vmatpush1.bf16.msra.mxu0 %v283
    %390 = vmatprep.subr.bf16.mxu0 %v280
    %391 = vmatpush1.bf16.msra.mxu0 %v279
    %392 = vmatprep.subr.bf16.mxu0 %v276
    %393 = vmatpush1.bf16.msra.mxu0 %v275
    %394 = vmatprep.subr.bf16.mxu0 0
    %395 = vmatpush2.bf16.msra.mxu0 0
    %396 = vmatprep.subr.bf16.mxu0 0
    %397 = vmatpush2.bf16.msra.mxu0 0
    %398 = vmatprep.subr.bf16.mxu0 0
    %399 = vmatpush2.bf16.msra.mxu0 0
    %400 = vmatprep.subr.bf16.mxu0 0
    %401 = vmatpush2.bf16.msra.mxu0 0
    %402 = vmatprep.subr.bf16.mxu0 0
    %403 = vmatpush2.bf16.msra.mxu0 0
    %404 = vmatprep.subr.bf16.mxu0 0
    %405 = vmatpush2.bf16.msra.mxu0 0
    %406 = vmatprep.subr.bf16.mxu0 0
    %407 = vmatpush2.bf16.msra.mxu0 0
    %408 = vmatprep.subr.bf16.mxu0 0
    %409 = vmatpush2.bf16.msra.mxu0 0
    %410 = vmatprep.mubr.bf16.mxu0 0
    %411 = vmatmul.mubr.bf16.gmra.mxu0 %v307
    %v412 = vpop.f32.mrf.mxu0
    %v413 = vadd.f32 0.0, %v412
    %v414 = vpop.f32.mrf.mxu0
    %v415 = vadd.f32 0.0, %v414
    %v416 = vpop.f32.mrf.mxu0
    %v417 = vadd.f32 0.0, %v416
    %v418 = vpop.f32.mrf.mxu0
    %v419 = vadd.f32 0.0, %v418
    %420 = vmatprep.mubr.bf16.mxu0 0
    %421 = vmatmul.mubr.bf16.gmra.mxu0 %v310
    %v422 = vpop.f32.mrf.mxu0
    %v423 = vadd.f32 0.0, %v422
    %v424 = vpop.f32.mrf.mxu0
    %v425 = vadd.f32 0.0, %v424
    %v426 = vpop.f32.mrf.mxu0
    %v427 = vadd.f32 0.0, %v426
    %v428 = vpop.f32.mrf.mxu0
    %v429 = vadd.f32 0.0, %v428
    %430 = vmatprep.mubr.bf16.mxu0 0
    %431 = vmatmul.mubr.bf16.gmra.mxu0 %v313
    %v432 = vpop.f32.mrf.mxu0
    %v433 = vadd.f32 0.0, %v432
    %v434 = vpop.f32.mrf.mxu0
    %v435 = vadd.f32 0.0, %v434
    %v436 = vpop.f32.mrf.mxu0
    %v437 = vadd.f32 0.0, %v436
    %v438 = vpop.f32.mrf.mxu0
    %v439 = vadd.f32 0.0, %v438
    %440 = vdwg.mxu0
    %v441 = vld [vmem:[#allocation5] sm:$0x3f]
    %v442 = vld [vmem:[#allocation5 + $0x8] sm:$0x3f]
    %v443 = vld [vmem:[#allocation5 + $0x10] sm:$0x3f]
    %v444 = vld [vmem:[#allocation5 + $0x18] sm:$0x3f]
    %v449 = vcombine.low %v441, %v442
    %v450 = vcombine.high %v441, %v442
    %v451 = vcombine.low %v443, %v444
    %v452 = vcombine.high %v443, %v444
    %v454 = vunpack.c.l.s4 1966171168
    %v455 = vunpack.c.0.s8 %v454
    %v456 = vlaneseq
    %v457 = vshrl.u32 %v456, 7
    %v458 = vsub.s32 %v455, %v457
    %v459 = vrot.slane %v449, %v458
    %v461 = vunpack.c.l.s4 1966171168
    %v462 = vunpack.c.0.s8 %v461
    %v463 = vlaneseq
    %v464 = vshrl.u32 %v463, 7
    %v465 = vsub.s32 %v462, %v464
    %v466 = vrot.slane %v450, %v465
    %v468 = vunpack.c.l.s4 1966171168
    %v469 = vunpack.c.0.s8 %v468
    %v470 = vlaneseq
    %v471 = vshrl.u32 %v470, 7
    %v472 = vsub.s32 %v469, %v471
    %v473 = vrot.slane %v451, %v472
    %v475 = vunpack.c.l.s4 1966171168
    %v476 = vunpack.c.0.s8 %v475
    %v477 = vlaneseq
    %v478 = vshrl.u32 %v477, 7
    %v479 = vsub.s32 %v476, %v478
    %v480 = vrot.slane %v452, %v479
    %v481 = vcombine.low %v459, %v473
    %v482 = vcombine.high %v459, %v473
    %v483 = vcombine.low %v466, %v480
    %v484 = vcombine.high %v466, %v480
    %v486 = vunpack.c.l.s4 1966171168
    %v487 = vunpack.c.0.s8 %v486
    %v488 = vlaneseq
    %v489 = vshrl.u32 %v488, 7
    %v490 = vsub.s32 %v487, %v489
    %v491 = vrot.slane %v481, %v490
    %v493 = vunpack.c.l.s4 1966171168
    %v494 = vunpack.c.0.s8 %v493
    %v495 = vlaneseq
    %v496 = vshrl.u32 %v495, 7
    %v497 = vsub.s32 %v494, %v496
    %v498 = vrot.slane %v483, %v497
    %v500 = vunpack.c.l.s4 1966171168
    %v501 = vunpack.c.0.s8 %v500
    %v502 = vlaneseq
    %v503 = vshrl.u32 %v502, 7
    %v504 = vsub.s32 %v501, %v503
    %v505 = vrot.slane %v482, %v504
    %v507 = vunpack.c.l.s4 1966171168
    %v508 = vunpack.c.0.s8 %v507
    %v509 = vlaneseq
    %v510 = vshrl.u32 %v509, 7
    %v511 = vsub.s32 %v508, %v510
    %v512 = vrot.slane %v484, %v511
    %v513 = vcombine.high %v491, %v491
    %v514 = vcombine.high %v505, %v505
    %v515 = vlaneseq
    %v516 = vshrl.u32 %v515, 7
    %v517 = vsub.s32 0, %v516
    %v518 = vrot.slane %v491, %v517
    %v519 = vlaneseq
    %v520 = vshrl.u32 %v519, 7
    %v521 = vsub.s32 1, %v520
    %v522 = vrot.slane %v491, %v521
    %v523 = vlaneseq
    %v524 = vshrl.u32 %v523, 7
    %v525 = vsub.s32 2, %v524
    %v526 = vrot.slane %v491, %v525
    %v527 = vlaneseq
    %v528 = vshrl.u32 %v527, 7
    %v529 = vsub.s32 3, %v528
    %v530 = vrot.slane %v491, %v529
    %v531 = vlaneseq
    %v532 = vshrl.u32 %v531, 7
    %v533 = vsub.s32 0, %v532
    %v534 = vrot.slane %v505, %v533
    %v535 = vlaneseq
    %v536 = vshrl.u32 %v535, 7
    %v537 = vsub.s32 1, %v536
    %v538 = vrot.slane %v505, %v537
    %v539 = vlaneseq
    %v540 = vshrl.u32 %v539, 7
    %v541 = vsub.s32 2, %v540
    %v542 = vrot.slane %v505, %v541
    %v543 = vlaneseq
    %v544 = vshrl.u32 %v543, 7
    %v545 = vsub.s32 3, %v544
    %v546 = vrot.slane %v505, %v545
    %v547 = vlaneseq
    %v548 = vshrl.u32 %v547, 7
    %v549 = vsub.s32 0, %v548
    %v550 = vrot.slane %v513, %v549
    %v551 = vlaneseq
    %v552 = vshrl.u32 %v551, 7
    %v553 = vsub.s32 1, %v552
    %v554 = vrot.slane %v513, %v553
    %v555 = vlaneseq
    %v556 = vshrl.u32 %v555, 7
    %v557 = vsub.s32 2, %v556
    %v558 = vrot.slane %v513, %v557
    %v559 = vlaneseq
    %v560 = vshrl.u32 %v559, 7
    %v561 = vsub.s32 3, %v560
    %v562 = vrot.slane %v513, %v561
    %v563 = vlaneseq
    %v564 = vshrl.u32 %v563, 7
    %v565 = vsub.s32 0, %v564
    %v566 = vrot.slane %v514, %v565
    %v567 = vlaneseq
    %v568 = vshrl.u32 %v567, 7
    %v569 = vsub.s32 1, %v568
    %v570 = vrot.slane %v514, %v569
    %v571 = vlaneseq
    %v572 = vshrl.u32 %v571, 7
    %v573 = vsub.s32 2, %v572
    %v574 = vrot.slane %v514, %v573
    %v575 = vlaneseq
    %v576 = vshrl.u32 %v575, 7
    %v577 = vsub.s32 3, %v576
    %v578 = vrot.slane %v514, %v577
    %v579 = vlaneseq
    %v580 = vshrl.u32 %v579, 7
    %v581 = vsub.s32 0, %v580
    %v582 = vrot.slane %v498, %v581
    %v583 = vlaneseq
    %v584 = vshrl.u32 %v583, 7
    %v585 = vsub.s32 1, %v584
    %v586 = vrot.slane %v498, %v585
    %v587 = vlaneseq
    %v588 = vshrl.u32 %v587, 7
    %v589 = vsub.s32 2, %v588
    %v590 = vrot.slane %v498, %v589
    %v591 = vlaneseq
    %v592 = vshrl.u32 %v591, 7
    %v593 = vsub.s32 3, %v592
    %v594 = vrot.slane %v498, %v593
    %v595 = vlaneseq
    %v596 = vshrl.u32 %v595, 7
    %v597 = vsub.s32 0, %v596
    %v598 = vrot.slane %v512, %v597
    %v599 = vlaneseq
    %v600 = vshrl.u32 %v599, 7
    %v601 = vsub.s32 1, %v600
    %v602 = vrot.slane %v512, %v601
    %v603 = vlaneseq
    %v604 = vshrl.u32 %v603, 7
    %v605 = vsub.s32 2, %v604
    %v606 = vrot.slane %v512, %v605
    %v607 = vlaneseq
    %v608 = vshrl.u32 %v607, 7
    %v609 = vsub.s32 3, %v608
    %v610 = vrot.slane %v512, %v609
    %v635 = vadd.f32 %v350, %v518
    %v636 = vadd.f32 %v352, %v522
    %v637 = vadd.f32 %v413, %v526
    %v638 = vadd.f32 %v415, %v530
    %v639 = vadd.f32 %v354, %v534
    %v640 = vadd.f32 %v356, %v538
    %v641 = vadd.f32 %v417, %v542
    %v642 = vadd.f32 %v419, %v546
    %v643 = vadd.f32 %v360, %v550
    %v644 = vadd.f32 %v362, %v554
    %v645 = vadd.f32 %v423, %v558
    %v646 = vadd.f32 %v425, %v562
    %v647 = vadd.f32 %v364, %v566
    %v648 = vadd.f32 %v366, %v570
    %v649 = vadd.f32 %v427, %v574
    %v650 = vadd.f32 %v429, %v578
    %v651 = vadd.f32 %v370, %v582
    %v652 = vadd.f32 %v372, %v586
    %v653 = vadd.f32 %v433, %v590
    %v654 = vadd.f32 %v435, %v594
    %v655 = vadd.f32 %v374, %v598
    %v656 = vadd.f32 %v376, %v602
    %v657 = vadd.f32 %v437, %v606
    %v658 = vadd.f32 %v439, %v610
    %v659 = vxor.u32 %v635, 2147483648
    %v660 = vxor.u32 %v636, 2147483648
    %v661 = vxor.u32 %v637, 2147483648
    %v662 = vxor.u32 %v638, 2147483648
    %v663 = vxor.u32 %v639, 2147483648
    %v664 = vxor.u32 %v640, 2147483648
    %v665 = vxor.u32 %v641, 2147483648
    %v666 = vxor.u32 %v642, 2147483648
    %v667 = vxor.u32 %v643, 2147483648
    %v668 = vxor.u32 %v644, 2147483648
    %v669 = vxor.u32 %v645, 2147483648
    %v670 = vxor.u32 %v646, 2147483648
    %v671 = vxor.u32 %v647, 2147483648
    %v672 = vxor.u32 %v648, 2147483648
    %v673 = vxor.u32 %v649, 2147483648
    %v674 = vxor.u32 %v650, 2147483648
    %v675 = vxor.u32 %v651, 2147483648
    %v676 = vxor.u32 %v652, 2147483648
    %v677 = vxor.u32 %v653, 2147483648
    %v678 = vxor.u32 %v654, 2147483648
    %v679 = vxor.u32 %v655, 2147483648
    %v680 = vxor.u32 %v656, 2147483648
    %v681 = vxor.u32 %v657, 2147483648
    %v682 = vxor.u32 %v658, 2147483648
    %v683 = vmul.f32 %v659, 1.442695
    %v684 = vpow.pop %v683
    %v685 = vmul.f32 %v660, 1.442695
    %v686 = vpow.pop %v685
    %v687 = vmul.f32 %v661, 1.442695
    %v688 = vpow.pop %v687
    %v689 = vmul.f32 %v662, 1.442695
    %v690 = vpow.pop %v689
    %v691 = vmul.f32 %v663, 1.442695
    %v692 = vpow.pop %v691
    %v693 = vmul.f32 %v664, 1.442695
    %v694 = vpow.pop %v693
    %v695 = vmul.f32 %v665, 1.442695
    %v696 = vpow.pop %v695
    %v697 = vmul.f32 %v666, 1.442695
    %v698 = vpow.pop %v697
    %v699 = vmul.f32 %v667, 1.442695
    %v700 = vpow.pop %v699
    %v701 = vmul.f32 %v668, 1.442695
    %v702 = vpow.pop %v701
    %v703 = vmul.f32 %v669, 1.442695
    %v704 = vpow.pop %v703
    %v705 = vmul.f32 %v670, 1.442695
    %v706 = vpow.pop %v705
    %v707 = vmul.f32 %v671, 1.442695
    %v708 = vpow.pop %v707
    %v709 = vmul.f32 %v672, 1.442695
    %v710 = vpow.pop %v709
    %v711 = vmul.f32 %v673, 1.442695
    %v712 = vpow.pop %v711
    %v713 = vmul.f32 %v674, 1.442695
    %v714 = vpow.pop %v713
    %v715 = vmul.f32 %v675, 1.442695
    %v716 = vpow.pop %v715
    %v717 = vmul.f32 %v676, 1.442695
    %v718 = vpow.pop %v717
    %v719 = vmul.f32 %v677, 1.442695
    %v720 = vpow.pop %v719
    %v721 = vmul.f32 %v678, 1.442695
    %v722 = vpow.pop %v721
    %v723 = vmul.f32 %v679, 1.442695
    %v724 = vpow.pop %v723
    %v725 = vmul.f32 %v680, 1.442695
    %v726 = vpow.pop %v725
    %v727 = vmul.f32 %v681, 1.442695
    %v728 = vpow.pop %v727
    %v729 = vmul.f32 %v682, 1.442695
    %v730 = vpow.pop %v729
    %v731 = vadd.f32 %v684, 1.0
    %v732 = vadd.f32 %v686, 1.0
    %v733 = vadd.f32 %v688, 1.0
    %v734 = vadd.f32 %v690, 1.0
    %v735 = vadd.f32 %v692, 1.0
    %v736 = vadd.f32 %v694, 1.0
    %v737 = vadd.f32 %v696, 1.0
    %v738 = vadd.f32 %v698, 1.0
    %v739 = vadd.f32 %v700, 1.0
    %v740 = vadd.f32 %v702, 1.0
    %v741 = vadd.f32 %v704, 1.0
    %v742 = vadd.f32 %v706, 1.0
    %v743 = vadd.f32 %v708, 1.0
    %v744 = vadd.f32 %v710, 1.0
    %v745 = vadd.f32 %v712, 1.0
    %v746 = vadd.f32 %v714, 1.0
    %v747 = vadd.f32 %v716, 1.0
    %v748 = vadd.f32 %v718, 1.0
    %v749 = vadd.f32 %v720, 1.0
    %v750 = vadd.f32 %v722, 1.0
    %v751 = vadd.f32 %v724, 1.0
    %v752 = vadd.f32 %v726, 1.0
    %v753 = vadd.f32 %v728, 1.0
    %v754 = vadd.f32 %v730, 1.0
    %v755 = vrcp.pop %v731
    %v756 = vmul.f32 1.0, %v755
    %v757 = vrcp.pop %v732
    %v758 = vmul.f32 1.0, %v757
    %v759 = vrcp.pop %v733
    %v760 = vmul.f32 1.0, %v759
    %v761 = vrcp.pop %v734
    %v762 = vmul.f32 1.0, %v761
    %v763 = vrcp.pop %v735
    %v764 = vmul.f32 1.0, %v763
    %v765 = vrcp.pop %v736
    %v766 = vmul.f32 1.0, %v765
    %v767 = vrcp.pop %v737
    %v768 = vmul.f32 1.0, %v767
    %v769 = vrcp.pop %v738
    %v770 = vmul.f32 1.0, %v769
    %v771 = vrcp.pop %v739
    %v772 = vmul.f32 1.0, %v771
    %v773 = vrcp.pop %v740
    %v774 = vmul.f32 1.0, %v773
    %v775 = vrcp.pop %v741
    %v776 = vmul.f32 1.0, %v775
    %v777 = vrcp.pop %v742
    %v778 = vmul.f32 1.0, %v777
    %v779 = vrcp.pop %v743
    %v780 = vmul.f32 1.0, %v779
    %v781 = vrcp.pop %v744
    %v782 = vmul.f32 1.0, %v781
    %v783 = vrcp.pop %v745
    %v784 = vmul.f32 1.0, %v783
    %v785 = vrcp.pop %v746
    %v786 = vmul.f32 1.0, %v785
    %v787 = vrcp.pop %v747
    %v788 = vmul.f32 1.0, %v787
    %v789 = vrcp.pop %v748
    %v790 = vmul.f32 1.0, %v789
    %v791 = vrcp.pop %v749
    %v792 = vmul.f32 1.0, %v791
    %v793 = vrcp.pop %v750
    %v794 = vmul.f32 1.0, %v793
    %v795 = vrcp.pop %v751
    %v796 = vmul.f32 1.0, %v795
    %v797 = vrcp.pop %v752
    %v798 = vmul.f32 1.0, %v797
    %v799 = vrcp.pop %v753
    %v800 = vmul.f32 1.0, %v799
    %v801 = vrcp.pop %v754
    %v802 = vmul.f32 1.0, %v801
    %v803 = vmul.f32 %v635, %v756
    %v804 = vmul.f32 %v636, %v758
    %v805 = vmul.f32 %v637, %v760
    %v806 = vmul.f32 %v638, %v762
    %v807 = vmul.f32 %v639, %v764
    %v808 = vmul.f32 %v640, %v766
    %v809 = vmul.f32 %v641, %v768
    %v810 = vmul.f32 %v642, %v770
    %v811 = vmul.f32 %v643, %v772
    %v812 = vmul.f32 %v644, %v774
    %v813 = vmul.f32 %v645, %v776
    %v814 = vmul.f32 %v646, %v778
    %v815 = vmul.f32 %v647, %v780
    %v816 = vmul.f32 %v648, %v782
    %v817 = vmul.f32 %v649, %v784
    %v818 = vmul.f32 %v650, %v786
    %v819 = vmul.f32 %v651, %v788
    %v820 = vmul.f32 %v652, %v790
    %v821 = vmul.f32 %v653, %v792
    %v822 = vmul.f32 %v654, %v794
    %v823 = vmul.f32 %v655, %v796
    %v824 = vmul.f32 %v656, %v798
    %v825 = vmul.f32 %v657, %v800
    %v826 = vmul.f32 %v658, %v802
    %v827 = vpack.c.bf16 %v807, %v803
    %v828 = vpack.c.bf16 %v808, %v804
    %v829 = vpack.c.bf16 %v809, %v805
    %v830 = vpack.c.bf16 %v810, %v806
    %v831 = vpack.c.bf16 %v815, %v811
    %v832 = vpack.c.bf16 %v816, %v812
    %v833 = vpack.c.bf16 %v817, %v813
    %v834 = vpack.c.bf16 %v818, %v814
    %v835 = vpack.c.bf16 %v823, %v819
    %v836 = vpack.c.bf16 %v824, %v820
    %v837 = vpack.c.bf16 %v825, %v821
    %v838 = vpack.c.bf16 %v826, %v822
    %v839 = vld [vmem:[#allocation8] sm:$0xff]
    %v840 = vld [vmem:[#allocation8 + $0x8] sm:$0xff]
    %v841 = vld [vmem:[#allocation8 + $0x10] sm:$0xff]
    %v842 = vld [vmem:[#allocation8 + $0x18] sm:$0xff]
    %v843 = vld [vmem:[#allocation8 + $0x20] sm:$0xff]
    %v844 = vld [vmem:[#allocation8 + $0x28] sm:$0xff]
    %v845 = vld [vmem:[#allocation8 + $0x30] sm:$0xff]
    %v846 = vld [vmem:[#allocation8 + $0x38] sm:$0xff]
    %v847 = vld [vmem:[#allocation8 + $0x40] sm:$0xff]
    %v848 = vld [vmem:[#allocation8 + $0x48] sm:$0xff]
    %v849 = vld [vmem:[#allocation8 + $0x50] sm:$0xff]
    %v850 = vld [vmem:[#allocation8 + $0x58] sm:$0xff]
    %v851 = vld [vmem:[#allocation8 + $0x60] sm:$0xff]
    %v852 = vld [vmem:[#allocation8 + $0x68] sm:$0xff]
    %v853 = vld [vmem:[#allocation8 + $0x70] sm:$0xff]
    %v854 = vld [vmem:[#allocation8 + $0x78] sm:$0xff]
    %v855 = vld [vmem:[#allocation8 + $0x80] sm:$0xff]
    %v856 = vld [vmem:[#allocation8 + $0x88] sm:$0xff]
    %v857 = vld [vmem:[#allocation8 + $0x90] sm:$0xff]
    %v858 = vld [vmem:[#allocation8 + $0x98] sm:$0xff]
    %v859 = vld [vmem:[#allocation8 + $0xa0] sm:$0xff]
    %v860 = vld [vmem:[#allocation8 + $0xa8] sm:$0xff]
    %v861 = vld [vmem:[#allocation8 + $0xb0] sm:$0xff]
    %v862 = vld [vmem:[#allocation8 + $0xb8] sm:$0xff]
    %v863 = vld [vmem:[#allocation8 + $0xc0] sm:$0xff]
    %v864 = vld [vmem:[#allocation8 + $0xc8] sm:$0xff]
    %v865 = vld [vmem:[#allocation8 + $0xd0] sm:$0xff]
    %v866 = vld [vmem:[#allocation8 + $0xd8] sm:$0xff]
    %v867 = vld [vmem:[#allocation8 + $0xe0] sm:$0xff]
    %v868 = vld [vmem:[#allocation8 + $0xe8] sm:$0xff]
    %v869 = vld [vmem:[#allocation8 + $0xf0] sm:$0xff]
    %v870 = vld [vmem:[#allocation8 + $0xf8] sm:$0xff]
    %v871 = vld [vmem:[#allocation8 + $0x100] sm:$0xff]
    %v872 = vld [vmem:[#allocation8 + $0x108] sm:$0xff]
    %v873 = vld [vmem:[#allocation8 + $0x110] sm:$0xff]
    %v874 = vld [vmem:[#allocation8 + $0x118] sm:$0xff]
    %v875 = vld [vmem:[#allocation8 + $0x120] sm:$0xff]
    %v876 = vld [vmem:[#allocation8 + $0x128] sm:$0xff]
    %v877 = vld [vmem:[#allocation8 + $0x130] sm:$0xff]
    %v878 = vld [vmem:[#allocation8 + $0x138] sm:$0xff]
    %v879 = vld [vmem:[#allocation8 + $0x140] sm:$0xff]
    %v880 = vld [vmem:[#allocation8 + $0x148] sm:$0xff]
    %v881 = vld [vmem:[#allocation8 + $0x150] sm:$0xff]
    %v882 = vld [vmem:[#allocation8 + $0x158] sm:$0xff]
    %v883 = vld [vmem:[#allocation8 + $0x160] sm:$0xff]
    %v884 = vld [vmem:[#allocation8 + $0x168] sm:$0xff]
    %v885 = vld [vmem:[#allocation8 + $0x170] sm:$0xff]
    %v886 = vld [vmem:[#allocation8 + $0x178] sm:$0xff]
    %v887 = vld [vmem:[#allocation8 + $0x180] sm:$0xff]
    %v888 = vld [vmem:[#allocation8 + $0x188] sm:$0xff]
    %v889 = vld [vmem:[#allocation8 + $0x190] sm:$0xff]
    %v890 = vld [vmem:[#allocation8 + $0x198] sm:$0xff]
    %v891 = vld [vmem:[#allocation8 + $0x1a0] sm:$0xff]
    %v892 = vld [vmem:[#allocation8 + $0x1a8] sm:$0xff]
    %v893 = vld [vmem:[#allocation8 + $0x1b0] sm:$0xff]
    %v894 = vld [vmem:[#allocation8 + $0x1b8] sm:$0xff]
    %v895 = vld [vmem:[#allocation8 + $0x1c0] sm:$0xff]
    %v896 = vld [vmem:[#allocation8 + $0x1c8] sm:$0xff]
    %v897 = vld [vmem:[#allocation8 + $0x1d0] sm:$0xff]
    %v898 = vld [vmem:[#allocation8 + $0x1d8] sm:$0xff]
    %v899 = vld [vmem:[#allocation8 + $0x1e0] sm:$0xff]
    %v900 = vld [vmem:[#allocation8 + $0x1e8] sm:$0xff]
    %v901 = vld [vmem:[#allocation8 + $0x1f0] sm:$0xff]
    %v902 = vld [vmem:[#allocation8 + $0x1f8] sm:$0xff]
    %v903 = vld [vmem:[#allocation8 + $0x200] sm:$0xff]
    %v904 = vld [vmem:[#allocation8 + $0x208] sm:$0xff]
    %v905 = vld [vmem:[#allocation8 + $0x210] sm:$0xff]
    %v906 = vld [vmem:[#allocation8 + $0x218] sm:$0xff]
    %v907 = vld [vmem:[#allocation8 + $0x220] sm:$0xff]
    %v908 = vld [vmem:[#allocation8 + $0x228] sm:$0xff]
    %v909 = vld [vmem:[#allocation8 + $0x230] sm:$0xff]
    %v910 = vld [vmem:[#allocation8 + $0x238] sm:$0xff]
    %v911 = vld [vmem:[#allocation8 + $0x240] sm:$0xff]
    %v912 = vld [vmem:[#allocation8 + $0x248] sm:$0xff]
    %v913 = vld [vmem:[#allocation8 + $0x250] sm:$0xff]
    %v914 = vld [vmem:[#allocation8 + $0x258] sm:$0xff]
    %v915 = vld [vmem:[#allocation8 + $0x260] sm:$0xff]
    %v916 = vld [vmem:[#allocation8 + $0x268] sm:$0xff]
    %v917 = vld [vmem:[#allocation8 + $0x270] sm:$0xff]
    %v918 = vld [vmem:[#allocation8 + $0x278] sm:$0xff]
    %v919 = vld [vmem:[#allocation8 + $0x280] sm:$0xff]
    %v920 = vld [vmem:[#allocation8 + $0x288] sm:$0xff]
    %v921 = vld [vmem:[#allocation8 + $0x290] sm:$0xff]
    %v922 = vld [vmem:[#allocation8 + $0x298] sm:$0xff]
    %v923 = vld [vmem:[#allocation8 + $0x2a0] sm:$0xff]
    %v924 = vld [vmem:[#allocation8 + $0x2a8] sm:$0xff]
    %v925 = vld [vmem:[#allocation8 + $0x2b0] sm:$0xff]
    %v926 = vld [vmem:[#allocation8 + $0x2b8] sm:$0xff]
    %v927 = vld [vmem:[#allocation8 + $0x2c0] sm:$0xff]
    %v928 = vld [vmem:[#allocation8 + $0x2c8] sm:$0xff]
    %v929 = vld [vmem:[#allocation8 + $0x2d0] sm:$0xff]
    %v930 = vld [vmem:[#allocation8 + $0x2d8] sm:$0xff]
    %v931 = vld [vmem:[#allocation8 + $0x2e0] sm:$0xff]
    %v932 = vld [vmem:[#allocation8 + $0x2e8] sm:$0xff]
    %v933 = vld [vmem:[#allocation8 + $0x2f0] sm:$0xff]
    %v934 = vld [vmem:[#allocation8 + $0x2f8] sm:$0xff]
    %v935 = vld [vmem:[#allocation8 + $0x300] sm:$0xff]
    %v936 = vld [vmem:[#allocation8 + $0x308] sm:$0xff]
    %v937 = vld [vmem:[#allocation8 + $0x310] sm:$0xff]
    %v938 = vld [vmem:[#allocation8 + $0x318] sm:$0xff]
    %v939 = vld [vmem:[#allocation8 + $0x320] sm:$0xff]
    %v940 = vld [vmem:[#allocation8 + $0x328] sm:$0xff]
    %v941 = vld [vmem:[#allocation8 + $0x330] sm:$0xff]
    %v942 = vld [vmem:[#allocation8 + $0x338] sm:$0xff]
    %v943 = vld [vmem:[#allocation8 + $0x340] sm:$0xff]
    %v944 = vld [vmem:[#allocation8 + $0x348] sm:$0xff]
    %v945 = vld [vmem:[#allocation8 + $0x350] sm:$0xff]
    %v946 = vld [vmem:[#allocation8 + $0x358] sm:$0xff]
    %v947 = vld [vmem:[#allocation8 + $0x360] sm:$0xff]
    %v948 = vld [vmem:[#allocation8 + $0x368] sm:$0xff]
    %v949 = vld [vmem:[#allocation8 + $0x370] sm:$0xff]
    %v950 = vld [vmem:[#allocation8 + $0x378] sm:$0xff]
    %v951 = vld [vmem:[#allocation8 + $0x380] sm:$0xff]
    %v952 = vld [vmem:[#allocation8 + $0x388] sm:$0xff]
    %v953 = vld [vmem:[#allocation8 + $0x390] sm:$0xff]
    %v954 = vld [vmem:[#allocation8 + $0x398] sm:$0xff]
    %v955 = vld [vmem:[#allocation8 + $0x3a0] sm:$0xff]
    %v956 = vld [vmem:[#allocation8 + $0x3a8] sm:$0xff]
    %v957 = vld [vmem:[#allocation8 + $0x3b0] sm:$0xff]
    %v958 = vld [vmem:[#allocation8 + $0x3b8] sm:$0xff]
    %v959 = vld [vmem:[#allocation8 + $0x3c0] sm:$0xff]
    %v960 = vld [vmem:[#allocation8 + $0x3c8] sm:$0xff]
    %v961 = vld [vmem:[#allocation8 + $0x3d0] sm:$0xff]
    %v962 = vld [vmem:[#allocation8 + $0x3d8] sm:$0xff]
    %v963 = vld [vmem:[#allocation8 + $0x3e0] sm:$0xff]
    %v964 = vld [vmem:[#allocation8 + $0x3e8] sm:$0xff]
    %v965 = vld [vmem:[#allocation8 + $0x3f0] sm:$0xff]
    %v966 = vld [vmem:[#allocation8 + $0x3f8] sm:$0xff]
    %v967 = vld [vmem:[%s5] sm:$0xf]
    %v969 = vlaneseq
    %v970 = vshrl.u32 %v969, 7
    %v971 = vsub.s32 0, %v970
    %v972 = vrot.slane %v967, %v971
    %v973 = vlaneseq
    %v974 = vshrl.u32 %v973, 7
    %v975 = vsub.s32 1, %v974
    %v976 = vrot.slane %v967, %v975
    %v977 = vlaneseq
    %v978 = vshrl.u32 %v977, 7
    %v979 = vsub.s32 2, %v978
    %v980 = vrot.slane %v967, %v979
    %v981 = vlaneseq
    %v982 = vshrl.u32 %v981, 7
    %v983 = vsub.s32 3, %v982
    %v984 = vrot.slane %v967, %v983
    %v1117 = vunpack.c.l.b16 %v839
    %v1118 = vunpack.c.h.b16 %v839
    %v1119 = vunpack.c.l.b16 %v840
    %v1120 = vunpack.c.h.b16 %v840
    %v1121 = vunpack.c.l.b16 %v841
    %v1122 = vunpack.c.h.b16 %v841
    %v1123 = vunpack.c.l.b16 %v842
    %v1124 = vunpack.c.h.b16 %v842
    %v1125 = vunpack.c.l.b16 %v843
    %v1126 = vunpack.c.h.b16 %v843
    %v1127 = vunpack.c.l.b16 %v844
    %v1128 = vunpack.c.h.b16 %v844
    %v1129 = vunpack.c.l.b16 %v845
    %v1130 = vunpack.c.h.b16 %v845
    %v1131 = vunpack.c.l.b16 %v846
    %v1132 = vunpack.c.h.b16 %v846
    %v1133 = vunpack.c.l.b16 %v847
    %v1134 = vunpack.c.h.b16 %v847
    %v1135 = vunpack.c.l.b16 %v848
    %v1136 = vunpack.c.h.b16 %v848
    %v1137 = vunpack.c.l.b16 %v849
    %v1138 = vunpack.c.h.b16 %v849
    %v1139 = vunpack.c.l.b16 %v850
    %v1140 = vunpack.c.h.b16 %v850
    %v1141 = vunpack.c.l.b16 %v851
    %v1142 = vunpack.c.h.b16 %v851
    %v1143 = vunpack.c.l.b16 %v852
    %v1144 = vunpack.c.h.b16 %v852
    %v1145 = vunpack.c.l.b16 %v853
    %v1146 = vunpack.c.h.b16 %v853
    %v1147 = vunpack.c.l.b16 %v854
    %v1148 = vunpack.c.h.b16 %v854
    %v1149 = vunpack.c.l.b16 %v855
    %v1150 = vunpack.c.h.b16 %v855
    %v1151 = vunpack.c.l.b16 %v856
    %v1152 = vunpack.c.h.b16 %v856
    %v1153 = vunpack.c.l.b16 %v857
    %v1154 = vunpack.c.h.b16 %v857
    %v1155 = vunpack.c.l.b16 %v858
    %v1156 = vunpack.c.h.b16 %v858
    %v1157 = vunpack.c.l.b16 %v859
    %v1158 = vunpack.c.h.b16 %v859
    %v1159 = vunpack.c.l.b16 %v860
    %v1160 = vunpack.c.h.b16 %v860
    %v1161 = vunpack.c.l.b16 %v861
    %v1162 = vunpack.c.h.b16 %v861
    %v1163 = vunpack.c.l.b16 %v862
    %v1164 = vunpack.c.h.b16 %v862
    %v1165 = vunpack.c.l.b16 %v863
    %v1166 = vunpack.c.h.b16 %v863
    %v1167 = vunpack.c.l.b16 %v864
    %v1168 = vunpack.c.h.b16 %v864
    %v1169 = vunpack.c.l.b16 %v865
    %v1170 = vunpack.c.h.b16 %v865
    %v1171 = vunpack.c.l.b16 %v866
    %v1172 = vunpack.c.h.b16 %v866
    %v1173 = vunpack.c.l.b16 %v867
    %v1174 = vunpack.c.h.b16 %v867
    %v1175 = vunpack.c.l.b16 %v868
    %v1176 = vunpack.c.h.b16 %v868
    %v1177 = vunpack.c.l.b16 %v869
    %v1178 = vunpack.c.h.b16 %v869
    %v1179 = vunpack.c.l.b16 %v870
    %v1180 = vunpack.c.h.b16 %v870
    %v1181 = vunpack.c.l.b16 %v871
    %v1182 = vunpack.c.h.b16 %v871
    %v1183 = vunpack.c.l.b16 %v872
    %v1184 = vunpack.c.h.b16 %v872
    %v1185 = vunpack.c.l.b16 %v873
    %v1186 = vunpack.c.h.b16 %v873
    %v1187 = vunpack.c.l.b16 %v874
    %v1188 = vunpack.c.h.b16 %v874
    %v1189 = vunpack.c.l.b16 %v875
    %v1190 = vunpack.c.h.b16 %v875
    %v1191 = vunpack.c.l.b16 %v876
    %v1192 = vunpack.c.h.b16 %v876
    %v1193 = vunpack.c.l.b16 %v877
    %v1194 = vunpack.c.h.b16 %v877
    %v1195 = vunpack.c.l.b16 %v878
    %v1196 = vunpack.c.h.b16 %v878
    %v1197 = vunpack.c.l.b16 %v879
    %v1198 = vunpack.c.h.b16 %v879
    %v1199 = vunpack.c.l.b16 %v880
    %v1200 = vunpack.c.h.b16 %v880
    %v1201 = vunpack.c.l.b16 %v881
    %v1202 = vunpack.c.h.b16 %v881
    %v1203 = vunpack.c.l.b16 %v882
    %v1204 = vunpack.c.h.b16 %v882
    %v1205 = vunpack.c.l.b16 %v883
    %v1206 = vunpack.c.h.b16 %v883
    %v1207 = vunpack.c.l.b16 %v884
    %v1208 = vunpack.c.h.b16 %v884
    %v1209 = vunpack.c.l.b16 %v885
    %v1210 = vunpack.c.h.b16 %v885
    %v1211 = vunpack.c.l.b16 %v886
    %v1212 = vunpack.c.h.b16 %v886
    %v1213 = vunpack.c.l.b16 %v887
    %v1214 = vunpack.c.h.b16 %v887
    %v1215 = vunpack.c.l.b16 %v888
    %v1216 = vunpack.c.h.b16 %v888
    %v1217 = vunpack.c.l.b16 %v889
    %v1218 = vunpack.c.h.b16 %v889
    %v1219 = vunpack.c.l.b16 %v890
    %v1220 = vunpack.c.h.b16 %v890
    %v1221 = vunpack.c.l.b16 %v891
    %v1222 = vunpack.c.h.b16 %v891
    %v1223 = vunpack.c.l.b16 %v892
    %v1224 = vunpack.c.h.b16 %v892
    %v1225 = vunpack.c.l.b16 %v893
    %v1226 = vunpack.c.h.b16 %v893
    %v1227 = vunpack.c.l.b16 %v894
    %v1228 = vunpack.c.h.b16 %v894
    %v1229 = vunpack.c.l.b16 %v895
    %v1230 = vunpack.c.h.b16 %v895
    %v1231 = vunpack.c.l.b16 %v896
    %v1232 = vunpack.c.h.b16 %v896
    %v1233 = vunpack.c.l.b16 %v897
    %v1234 = vunpack.c.h.b16 %v897
    %v1235 = vunpack.c.l.b16 %v898
    %v1236 = vunpack.c.h.b16 %v898
    %v1237 = vunpack.c.l.b16 %v899
    %v1238 = vunpack.c.h.b16 %v899
    %v1239 = vunpack.c.l.b16 %v900
    %v1240 = vunpack.c.h.b16 %v900
    %v1241 = vunpack.c.l.b16 %v901
    %v1242 = vunpack.c.h.b16 %v901
    %v1243 = vunpack.c.l.b16 %v902
    %v1244 = vunpack.c.h.b16 %v902
    %v1245 = vunpack.c.l.b16 %v903
    %v1246 = vunpack.c.h.b16 %v903
    %v1247 = vunpack.c.l.b16 %v904
    %v1248 = vunpack.c.h.b16 %v904
    %v1249 = vunpack.c.l.b16 %v905
    %v1250 = vunpack.c.h.b16 %v905
    %v1251 = vunpack.c.l.b16 %v906
    %v1252 = vunpack.c.h.b16 %v906
    %v1253 = vunpack.c.l.b16 %v907
    %v1254 = vunpack.c.h.b16 %v907
    %v1255 = vunpack.c.l.b16 %v908
    %v1256 = vunpack.c.h.b16 %v908
    %v1257 = vunpack.c.l.b16 %v909
    %v1258 = vunpack.c.h.b16 %v909
    %v1259 = vunpack.c.l.b16 %v910
    %v1260 = vunpack.c.h.b16 %v910
    %v1261 = vunpack.c.l.b16 %v911
    %v1262 = vunpack.c.h.b16 %v911
    %v1263 = vunpack.c.l.b16 %v912
    %v1264 = vunpack.c.h.b16 %v912
    %v1265 = vunpack.c.l.b16 %v913
    %v1266 = vunpack.c.h.b16 %v913
    %v1267 = vunpack.c.l.b16 %v914
    %v1268 = vunpack.c.h.b16 %v914
    %v1269 = vunpack.c.l.b16 %v915
    %v1270 = vunpack.c.h.b16 %v915
    %v1271 = vunpack.c.l.b16 %v916
    %v1272 = vunpack.c.h.b16 %v916
    %v1273 = vunpack.c.l.b16 %v917
    %v1274 = vunpack.c.h.b16 %v917
    %v1275 = vunpack.c.l.b16 %v918
    %v1276 = vunpack.c.h.b16 %v918
    %v1277 = vunpack.c.l.b16 %v919
    %v1278 = vunpack.c.h.b16 %v919
    %v1279 = vunpack.c.l.b16 %v920
    %v1280 = vunpack.c.h.b16 %v920
    %v1281 = vunpack.c.l.b16 %v921
    %v1282 = vunpack.c.h.b16 %v921
    %v1283 = vunpack.c.l.b16 %v922
    %v1284 = vunpack.c.h.b16 %v922
    %v1285 = vunpack.c.l.b16 %v923
    %v1286 = vunpack.c.h.b16 %v923
    %v1287 = vunpack.c.l.b16 %v924
    %v1288 = vunpack.c.h.b16 %v924
    %v1289 = vunpack.c.l.b16 %v925
    %v1290 = vunpack.c.h.b16 %v925
    %v1291 = vunpack.c.l.b16 %v926
    %v1292 = vunpack.c.h.b16 %v926
    %v1293 = vunpack.c.l.b16 %v927
    %v1294 = vunpack.c.h.b16 %v927
    %v1295 = vunpack.c.l.b16 %v928
    %v1296 = vunpack.c.h.b16 %v928
    %v1297 = vunpack.c.l.b16 %v929
    %v1298 = vunpack.c.h.b16 %v929
    %v1299 = vunpack.c.l.b16 %v930
    %v1300 = vunpack.c.h.b16 %v930
    %v1301 = vunpack.c.l.b16 %v931
    %v1302 = vunpack.c.h.b16 %v931
    %v1303 = vunpack.c.l.b16 %v932
    %v1304 = vunpack.c.h.b16 %v932
    %v1305 = vunpack.c.l.b16 %v933
    %v1306 = vunpack.c.h.b16 %v933
    %v1307 = vunpack.c.l.b16 %v934
    %v1308 = vunpack.c.h.b16 %v934
    %v1309 = vunpack.c.l.b16 %v935
    %v1310 = vunpack.c.h.b16 %v935
    %v1311 = vunpack.c.l.b16 %v936
    %v1312 = vunpack.c.h.b16 %v936
    %v1313 = vunpack.c.l.b16 %v937
    %v1314 = vunpack.c.h.b16 %v937
    %v1315 = vunpack.c.l.b16 %v938
    %v1316 = vunpack.c.h.b16 %v938
    %v1317 = vunpack.c.l.b16 %v939
    %v1318 = vunpack.c.h.b16 %v939
    %v1319 = vunpack.c.l.b16 %v940
    %v1320 = vunpack.c.h.b16 %v940
    %v1321 = vunpack.c.l.b16 %v941
    %v1322 = vunpack.c.h.b16 %v941
    %v1323 = vunpack.c.l.b16 %v942
    %v1324 = vunpack.c.h.b16 %v942
    %v1325 = vunpack.c.l.b16 %v943
    %v1326 = vunpack.c.h.b16 %v943
    %v1327 = vunpack.c.l.b16 %v944
    %v1328 = vunpack.c.h.b16 %v944
    %v1329 = vunpack.c.l.b16 %v945
    %v1330 = vunpack.c.h.b16 %v945
    %v1331 = vunpack.c.l.b16 %v946
    %v1332 = vunpack.c.h.b16 %v946
    %v1333 = vunpack.c.l.b16 %v947
    %v1334 = vunpack.c.h.b16 %v947
    %v1335 = vunpack.c.l.b16 %v948
    %v1336 = vunpack.c.h.b16 %v948
    %v1337 = vunpack.c.l.b16 %v949
    %v1338 = vunpack.c.h.b16 %v949
    %v1339 = vunpack.c.l.b16 %v950
    %v1340 = vunpack.c.h.b16 %v950
    %v1341 = vunpack.c.l.b16 %v951
    %v1342 = vunpack.c.h.b16 %v951
    %v1343 = vunpack.c.l.b16 %v952
    %v1344 = vunpack.c.h.b16 %v952
    %v1345 = vunpack.c.l.b16 %v953
    %v1346 = vunpack.c.h.b16 %v953
    %v1347 = vunpack.c.l.b16 %v954
    %v1348 = vunpack.c.h.b16 %v954
    %v1349 = vunpack.c.l.b16 %v955
    %v1350 = vunpack.c.h.b16 %v955
    %v1351 = vunpack.c.l.b16 %v956
    %v1352 = vunpack.c.h.b16 %v956
    %v1353 = vunpack.c.l.b16 %v957
    %v1354 = vunpack.c.h.b16 %v957
    %v1355 = vunpack.c.l.b16 %v958
    %v1356 = vunpack.c.h.b16 %v958
    %v1357 = vunpack.c.l.b16 %v959
    %v1358 = vunpack.c.h.b16 %v959
    %v1359 = vunpack.c.l.b16 %v960
    %v1360 = vunpack.c.h.b16 %v960
    %v1361 = vunpack.c.l.b16 %v961
    %v1362 = vunpack.c.h.b16 %v961
    %v1363 = vunpack.c.l.b16 %v962
    %v1364 = vunpack.c.h.b16 %v962
    %v1365 = vunpack.c.l.b16 %v963
    %v1366 = vunpack.c.h.b16 %v963
    %v1367 = vunpack.c.l.b16 %v964
    %v1368 = vunpack.c.h.b16 %v964
    %v1369 = vunpack.c.l.b16 %v965
    %v1370 = vunpack.c.h.b16 %v965
    %v1371 = vunpack.c.l.b16 %v966
    %v1372 = vunpack.c.h.b16 %v966
    %v1373 = vpack.c.b16 %v1121, %v1117
    %v1374 = vpack.c.b16 %v1122, %v1118
    %v1375 = vpack.c.b16 %v1123, %v1119
    %v1376 = vpack.c.b16 %v1124, %v1120
    %v1377 = vpack.c.b16 %v1129, %v1125
    %v1378 = vpack.c.b16 %v1130, %v1126
    %v1379 = vpack.c.b16 %v1131, %v1127
    %v1380 = vpack.c.b16 %v1132, %v1128
    %v1381 = vpack.c.b16 %v1137, %v1133
    %v1382 = vpack.c.b16 %v1138, %v1134
    %v1383 = vpack.c.b16 %v1139, %v1135
    %v1384 = vpack.c.b16 %v1140, %v1136
    %v1385 = vpack.c.b16 %v1145, %v1141
    %v1386 = vpack.c.b16 %v1146, %v1142
    %v1387 = vpack.c.b16 %v1147, %v1143
    %v1388 = vpack.c.b16 %v1148, %v1144
    %v1389 = vpack.c.b16 %v1153, %v1149
    %v1390 = vpack.c.b16 %v1154, %v1150
    %v1391 = vpack.c.b16 %v1155, %v1151
    %v1392 = vpack.c.b16 %v1156, %v1152
    %v1393 = vpack.c.b16 %v1161, %v1157
    %v1394 = vpack.c.b16 %v1162, %v1158
    %v1395 = vpack.c.b16 %v1163, %v1159
    %v1396 = vpack.c.b16 %v1164, %v1160
    %v1397 = vpack.c.b16 %v1169, %v1165
    %v1398 = vpack.c.b16 %v1170, %v1166
    %v1399 = vpack.c.b16 %v1171, %v1167
    %v1400 = vpack.c.b16 %v1172, %v1168
    %v1401 = vpack.c.b16 %v1177, %v1173
    %v1402 = vpack.c.b16 %v1178, %v1174
    %v1403 = vpack.c.b16 %v1179, %v1175
    %v1404 = vpack.c.b16 %v1180, %v1176
    %v1405 = vpack.c.b16 %v1185, %v1181
    %v1406 = vpack.c.b16 %v1186, %v1182
    %v1407 = vpack.c.b16 %v1187, %v1183
    %v1408 = vpack.c.b16 %v1188, %v1184
    %v1409 = vpack.c.b16 %v1193, %v1189
    %v1410 = vpack.c.b16 %v1194, %v1190
    %v1411 = vpack.c.b16 %v1195, %v1191
    %v1412 = vpack.c.b16 %v1196, %v1192
    %v1413 = vpack.c.b16 %v1201, %v1197
    %v1414 = vpack.c.b16 %v1202, %v1198
    %v1415 = vpack.c.b16 %v1203, %v1199
    %v1416 = vpack.c.b16 %v1204, %v1200
    %v1417 = vpack.c.b16 %v1209, %v1205
    %v1418 = vpack.c.b16 %v1210, %v1206
    %v1419 = vpack.c.b16 %v1211, %v1207
    %v1420 = vpack.c.b16 %v1212, %v1208
    %v1421 = vpack.c.b16 %v1217, %v1213
    %v1422 = vpack.c.b16 %v1218, %v1214
    %v1423 = vpack.c.b16 %v1219, %v1215
    %v1424 = vpack.c.b16 %v1220, %v1216
    %v1425 = vpack.c.b16 %v1225, %v1221
    %v1426 = vpack.c.b16 %v1226, %v1222
    %v1427 = vpack.c.b16 %v1227, %v1223
    %v1428 = vpack.c.b16 %v1228, %v1224
    %v1429 = vpack.c.b16 %v1233, %v1229
    %v1430 = vpack.c.b16 %v1234, %v1230
    %v1431 = vpack.c.b16 %v1235, %v1231
    %v1432 = vpack.c.b16 %v1236, %v1232
    %v1433 = vpack.c.b16 %v1241, %v1237
    %v1434 = vpack.c.b16 %v1242, %v1238
    %v1435 = vpack.c.b16 %v1243, %v1239
    %v1436 = vpack.c.b16 %v1244, %v1240
    %v1437 = vpack.c.b16 %v1249, %v1245
    %v1438 = vpack.c.b16 %v1250, %v1246
    %v1439 = vpack.c.b16 %v1251, %v1247
    %v1440 = vpack.c.b16 %v1252, %v1248
    %v1441 = vpack.c.b16 %v1257, %v1253
    %v1442 = vpack.c.b16 %v1258, %v1254
    %v1443 = vpack.c.b16 %v1259, %v1255
    %v1444 = vpack.c.b16 %v1260, %v1256
    %v1445 = vpack.c.b16 %v1265, %v1261
    %v1446 = vpack.c.b16 %v1266, %v1262
    %v1447 = vpack.c.b16 %v1267, %v1263
    %v1448 = vpack.c.b16 %v1268, %v1264
    %v1449 = vpack.c.b16 %v1273, %v1269
    %v1450 = vpack.c.b16 %v1274, %v1270
    %v1451 = vpack.c.b16 %v1275, %v1271
    %v1452 = vpack.c.b16 %v1276, %v1272
    %v1453 = vpack.c.b16 %v1281, %v1277
    %v1454 = vpack.c.b16 %v1282, %v1278
    %v1455 = vpack.c.b16 %v1283, %v1279
    %v1456 = vpack.c.b16 %v1284, %v1280
    %v1457 = vpack.c.b16 %v1289, %v1285
    %v1458 = vpack.c.b16 %v1290, %v1286
    %v1459 = vpack.c.b16 %v1291, %v1287
    %v1460 = vpack.c.b16 %v1292, %v1288
    %v1461 = vpack.c.b16 %v1297, %v1293
    %v1462 = vpack.c.b16 %v1298, %v1294
    %v1463 = vpack.c.b16 %v1299, %v1295
    %v1464 = vpack.c.b16 %v1300, %v1296
    %v1465 = vpack.c.b16 %v1305, %v1301
    %v1466 = vpack.c.b16 %v1306, %v1302
    %v1467 = vpack.c.b16 %v1307, %v1303
    %v1468 = vpack.c.b16 %v1308, %v1304
    %v1469 = vpack.c.b16 %v1313, %v1309
    %v1470 = vpack.c.b16 %v1314, %v1310
    %v1471 = vpack.c.b16 %v1315, %v1311
    %v1472 = vpack.c.b16 %v1316, %v1312
    %v1473 = vpack.c.b16 %v1321, %v1317
    %v1474 = vpack.c.b16 %v1322, %v1318
    %v1475 = vpack.c.b16 %v1323, %v1319
    %v1476 = vpack.c.b16 %v1324, %v1320
    %v1477 = vpack.c.b16 %v1329, %v1325
    %v1478 = vpack.c.b16 %v1330, %v1326
    %v1479 = vpack.c.b16 %v1331, %v1327
    %v1480 = vpack.c.b16 %v1332, %v1328
    %v1481 = vpack.c.b16 %v1337, %v1333
    %v1482 = vpack.c.b16 %v1338, %v1334
    %v1483 = vpack.c.b16 %v1339, %v1335
    %v1484 = vpack.c.b16 %v1340, %v1336
    %v1485 = vpack.c.b16 %v1345, %v1341
    %v1486 = vpack.c.b16 %v1346, %v1342
    %v1487 = vpack.c.b16 %v1347, %v1343
    %v1488 = vpack.c.b16 %v1348, %v1344
    %v1489 = vpack.c.b16 %v1353, %v1349
    %v1490 = vpack.c.b16 %v1354, %v1350
    %v1491 = vpack.c.b16 %v1355, %v1351
    %v1492 = vpack.c.b16 %v1356, %v1352
    %v1493 = vpack.c.b16 %v1361, %v1357
    %v1494 = vpack.c.b16 %v1362, %v1358
    %v1495 = vpack.c.b16 %v1363, %v1359
    %v1496 = vpack.c.b16 %v1364, %v1360
    %v1497 = vpack.c.b16 %v1369, %v1365
    %v1498 = vpack.c.b16 %v1370, %v1366
    %v1499 = vpack.c.b16 %v1371, %v1367
    %v1500 = vpack.c.b16 %v1372, %v1368
    %1629 = vmatprep.subr.bf16.mxu0 %v1402
    %1630 = vmatpush1.bf16.msra.mxu0 %v1401
    %1631 = vmatprep.subr.bf16.mxu0 %v1398
    %1632 = vmatpush1.bf16.msra.mxu0 %v1397
    %1633 = vmatprep.subr.bf16.mxu0 %v1394
    %1634 = vmatpush1.bf16.msra.mxu0 %v1393
    %1635 = vmatprep.subr.bf16.mxu0 %v1390
    %1636 = vmatpush1.bf16.msra.mxu0 %v1389
    %1637 = vmatprep.subr.bf16.mxu0 %v1386
    %1638 = vmatpush1.bf16.msra.mxu0 %v1385
    %1639 = vmatprep.subr.bf16.mxu0 %v1382
    %1640 = vmatpush1.bf16.msra.mxu0 %v1381
    %1641 = vmatprep.subr.bf16.mxu0 %v1378
    %1642 = vmatpush1.bf16.msra.mxu0 %v1377
    %1643 = vmatprep.subr.bf16.mxu0 %v1374
    %1644 = vmatpush1.bf16.msra.mxu0 %v1373
    %1645 = vmatprep.subr.bf16.mxu0 %v1434
    %1646 = vmatpush2.bf16.msra.mxu0 %v1433
    %1647 = vmatprep.subr.bf16.mxu0 %v1430
    %1648 = vmatpush2.bf16.msra.mxu0 %v1429
    %1649 = vmatprep.subr.bf16.mxu0 %v1426
    %1650 = vmatpush2.bf16.msra.mxu0 %v1425
    %1651 = vmatprep.subr.bf16.mxu0 %v1422
    %1652 = vmatpush2.bf16.msra.mxu0 %v1421
    %1653 = vmatprep.subr.bf16.mxu0 %v1418
    %1654 = vmatpush2.bf16.msra.mxu0 %v1417
    %1655 = vmatprep.subr.bf16.mxu0 %v1414
    %1656 = vmatpush2.bf16.msra.mxu0 %v1413
    %1657 = vmatprep.subr.bf16.mxu0 %v1410
    %1658 = vmatpush2.bf16.msra.mxu0 %v1409
    %1659 = vmatprep.subr.bf16.mxu0 %v1406
    %1660 = vmatpush2.bf16.msra.mxu0 %v1405
    %1661 = vmatprep.mubr.bf16.mxu0 %v828
    %1662 = vmatmul.mubr.bf16.gmra.mxu0 %v827
    %v1663 = vpop.f32.mrf.mxu0
    %v1664 = vadd.f32 %v972, %v1663
    %v1665 = vpop.f32.mrf.mxu0
    %v1666 = vadd.f32 %v976, %v1665
    %v1667 = vpop.f32.mrf.mxu0
    %v1668 = vadd.f32 %v972, %v1667
    %v1669 = vpop.f32.mrf.mxu0
    %v1670 = vadd.f32 %v976, %v1669
    %1671 = vmatprep.mubr.bf16.mxu0 %v832
    %1672 = vmatmul.mubr.bf16.gmra.mxu0 %v831
    %v1673 = vpop.f32.mrf.mxu0
    %v1674 = vadd.f32 %v972, %v1673
    %v1675 = vpop.f32.mrf.mxu0
    %v1676 = vadd.f32 %v976, %v1675
    %v1677 = vpop.f32.mrf.mxu0
    %v1678 = vadd.f32 %v972, %v1677
    %v1679 = vpop.f32.mrf.mxu0
    %v1680 = vadd.f32 %v976, %v1679
    %1681 = vmatprep.mubr.bf16.mxu0 %v836
    %1682 = vmatmul.mubr.bf16.gmra.mxu0 %v835
    %v1683 = vpop.f32.mrf.mxu0
    %v1684 = vadd.f32 %v972, %v1683
    %v1685 = vpop.f32.mrf.mxu0
    %v1686 = vadd.f32 %v976, %v1685
    %v1687 = vpop.f32.mrf.mxu0
    %v1688 = vadd.f32 %v972, %v1687
    %v1689 = vpop.f32.mrf.mxu0
    %v1690 = vadd.f32 %v976, %v1689
    %1691 = vdwg.mxu0
    %1692 = vmatprep.subr.bf16.mxu0 %v1466
    %1693 = vmatpush1.bf16.msra.mxu0 %v1465
    %1694 = vmatprep.subr.bf16.mxu0 %v1462
    %1695 = vmatpush1.bf16.msra.mxu0 %v1461
    %1696 = vmatprep.subr.bf16.mxu0 %v1458
    %1697 = vmatpush1.bf16.msra.mxu0 %v1457
    %1698 = vmatprep.subr.bf16.mxu0 %v1454
    %1699 = vmatpush1.bf16.msra.mxu0 %v1453
    %1700 = vmatprep.subr.bf16.mxu0 %v1450
    %1701 = vmatpush1.bf16.msra.mxu0 %v1449
    %1702 = vmatprep.subr.bf16.mxu0 %v1446
    %1703 = vmatpush1.bf16.msra.mxu0 %v1445
    %1704 = vmatprep.subr.bf16.mxu0 %v1442
    %1705 = vmatpush1.bf16.msra.mxu0 %v1441
    %1706 = vmatprep.subr.bf16.mxu0 %v1438
    %1707 = vmatpush1.bf16.msra.mxu0 %v1437
    %1708 = vmatprep.subr.bf16.mxu0 %v1498
    %1709 = vmatpush2.bf16.msra.mxu0 %v1497
    %1710 = vmatprep.subr.bf16.mxu0 %v1494
    %1711 = vmatpush2.bf16.msra.mxu0 %v1493
    %1712 = vmatprep.subr.bf16.mxu0 %v1490
    %1713 = vmatpush2.bf16.msra.mxu0 %v1489
    %1714 = vmatprep.subr.bf16.mxu0 %v1486
    %1715 = vmatpush2.bf16.msra.mxu0 %v1485
    %1716 = vmatprep.subr.bf16.mxu0 %v1482
    %1717 = vmatpush2.bf16.msra.mxu0 %v1481
    %1718 = vmatprep.subr.bf16.mxu0 %v1478
    %1719 = vmatpush2.bf16.msra.mxu0 %v1477
    %1720 = vmatprep.subr.bf16.mxu0 %v1474
    %1721 = vmatpush2.bf16.msra.mxu0 %v1473
    %1722 = vmatprep.subr.bf16.mxu0 %v1470
    %1723 = vmatpush2.bf16.msra.mxu0 %v1469
    %1724 = vmatprep.mubr.bf16.mxu0 %v830
    %1725 = vmatmul.mubr.bf16.gmra.mxu0 %v829
    %v1726 = vpop.f32.mrf.mxu0
    %v1727 = vadd.f32 %v1664, %v1726
    %v1728 = vpop.f32.mrf.mxu0
    %v1729 = vadd.f32 %v1666, %v1728
    %v1730 = vpop.f32.mrf.mxu0
    %v1731 = vadd.f32 %v1668, %v1730
    %v1732 = vpop.f32.mrf.mxu0
    %v1733 = vadd.f32 %v1670, %v1732
    %1734 = vmatprep.mubr.bf16.mxu0 %v834
    %1735 = vmatmul.mubr.bf16.gmra.mxu0 %v833
    %v1736 = vpop.f32.mrf.mxu0
    %v1737 = vadd.f32 %v1674, %v1736
    %v1738 = vpop.f32.mrf.mxu0
    %v1739 = vadd.f32 %v1676, %v1738
    %v1740 = vpop.f32.mrf.mxu0
    %v1741 = vadd.f32 %v1678, %v1740
    %v1742 = vpop.f32.mrf.mxu0
    %v1743 = vadd.f32 %v1680, %v1742
    %1744 = vmatprep.mubr.bf16.mxu0 %v838
    %1745 = vmatmul.mubr.bf16.gmra.mxu0 %v837
    %v1746 = vpop.f32.mrf.mxu0
    %v1747 = vadd.f32 %v1684, %v1746
    %v1748 = vpop.f32.mrf.mxu0
    %v1749 = vadd.f32 %v1686, %v1748
    %v1750 = vpop.f32.mrf.mxu0
    %v1751 = vadd.f32 %v1688, %v1750
    %v1752 = vpop.f32.mrf.mxu0
    %v1753 = vadd.f32 %v1690, %v1752
    %1754 = vdwg.mxu0
    %1755 = vmatprep.subr.bf16.mxu0 %v1404
    %1756 = vmatpush1.bf16.msra.mxu0 %v1403
    %1757 = vmatprep.subr.bf16.mxu0 %v1400
    %1758 = vmatpush1.bf16.msra.mxu0 %v1399
    %1759 = vmatprep.subr.bf16.mxu0 %v1396
    %1760 = vmatpush1.bf16.msra.mxu0 %v1395
    %1761 = vmatprep.subr.bf16.mxu0 %v1392
    %1762 = vmatpush1.bf16.msra.mxu0 %v1391
    %1763 = vmatprep.subr.bf16.mxu0 %v1388
    %1764 = vmatpush1.bf16.msra.mxu0 %v1387
    %1765 = vmatprep.subr.bf16.mxu0 %v1384
    %1766 = vmatpush1.bf16.msra.mxu0 %v1383
    %1767 = vmatprep.subr.bf16.mxu0 %v1380
    %1768 = vmatpush1.bf16.msra.mxu0 %v1379
    %1769 = vmatprep.subr.bf16.mxu0 %v1376
    %1770 = vmatpush1.bf16.msra.mxu0 %v1375
    %1771 = vmatprep.subr.bf16.mxu0 %v1436
    %1772 = vmatpush2.bf16.msra.mxu0 %v1435
    %1773 = vmatprep.subr.bf16.mxu0 %v1432
    %1774 = vmatpush2.bf16.msra.mxu0 %v1431
    %1775 = vmatprep.subr.bf16.mxu0 %v1428
    %1776 = vmatpush2.bf16.msra.mxu0 %v1427
    %1777 = vmatprep.subr.bf16.mxu0 %v1424
    %1778 = vmatpush2.bf16.msra.mxu0 %v1423
    %1779 = vmatprep.subr.bf16.mxu0 %v1420
    %1780 = vmatpush2.bf16.msra.mxu0 %v1419
    %1781 = vmatprep.subr.bf16.mxu0 %v1416
    %1782 = vmatpush2.bf16.msra.mxu0 %v1415
    %1783 = vmatprep.subr.bf16.mxu0 %v1412
    %1784 = vmatpush2.bf16.msra.mxu0 %v1411
    %1785 = vmatprep.subr.bf16.mxu0 %v1408
    %1786 = vmatpush2.bf16.msra.mxu0 %v1407
    %1787 = vmatprep.mubr.bf16.mxu0 %v828
    %1788 = vmatmul.mubr.bf16.gmra.mxu0 %v827
    %v1789 = vpop.f32.mrf.mxu0
    %v1790 = vadd.f32 %v980, %v1789
    %v1791 = vpop.f32.mrf.mxu0
    %v1792 = vadd.f32 %v984, %v1791
    %v1793 = vpop.f32.mrf.mxu0
    %v1794 = vadd.f32 %v980, %v1793
    %v1795 = vpop.f32.mrf.mxu0
    %v1796 = vadd.f32 %v984, %v1795
    %1797 = vmatprep.mubr.bf16.mxu0 %v832
    %1798 = vmatmul.mubr.bf16.gmra.mxu0 %v831
    %v1799 = vpop.f32.mrf.mxu0
    %v1800 = vadd.f32 %v980, %v1799
    %v1801 = vpop.f32.mrf.mxu0
    %v1802 = vadd.f32 %v984, %v1801
    %v1803 = vpop.f32.mrf.mxu0
    %v1804 = vadd.f32 %v980, %v1803
    %v1805 = vpop.f32.mrf.mxu0
    %v1806 = vadd.f32 %v984, %v1805
    %1807 = vmatprep.mubr.bf16.mxu0 %v836
    %1808 = vmatmul.mubr.bf16.gmra.mxu0 %v835
    %v1809 = vpop.f32.mrf.mxu0
    %v1810 = vadd.f32 %v980, %v1809
    %v1811 = vpop.f32.mrf.mxu0
    %v1812 = vadd.f32 %v984, %v1811
    %v1813 = vpop.f32.mrf.mxu0
    %v1814 = vadd.f32 %v980, %v1813
    %v1815 = vpop.f32.mrf.mxu0
    %v1816 = vadd.f32 %v984, %v1815
    %1817 = vdwg.mxu0
    %1818 = vmatprep.subr.bf16.mxu0 %v1468
    %1819 = vmatpush1.bf16.msra.mxu0 %v1467
    %1820 = vmatprep.subr.bf16.mxu0 %v1464
    %1821 = vmatpush1.bf16.msra.mxu0 %v1463
    %1822 = vmatprep.subr.bf16.mxu0 %v1460
    %1823 = vmatpush1.bf16.msra.mxu0 %v1459
    %1824 = vmatprep.subr.bf16.mxu0 %v1456
    %1825 = vmatpush1.bf16.msra.mxu0 %v1455
    %1826 = vmatprep.subr.bf16.mxu0 %v1452
    %1827 = vmatpush1.bf16.msra.mxu0 %v1451
    %1828 = vmatprep.subr.bf16.mxu0 %v1448
    %1829 = vmatpush1.bf16.msra.mxu0 %v1447
    %1830 = vmatprep.subr.bf16.mxu0 %v1444
    %1831 = vmatpush1.bf16.msra.mxu0 %v1443
    %1832 = vmatprep.subr.bf16.mxu0 %v1440
    %1833 = vmatpush1.bf16.msra.mxu0 %v1439
    %1834 = vmatprep.subr.bf16.mxu0 %v1500
    %1835 = vmatpush2.bf16.msra.mxu0 %v1499
    %1836 = vmatprep.subr.bf16.mxu0 %v1496
    %1837 = vmatpush2.bf16.msra.mxu0 %v1495
    %1838 = vmatprep.subr.bf16.mxu0 %v1492
    %1839 = vmatpush2.bf16.msra.mxu0 %v1491
    %1840 = vmatprep.subr.bf16.mxu0 %v1488
    %1841 = vmatpush2.bf16.msra.mxu0 %v1487
    %1842 = vmatprep.subr.bf16.mxu0 %v1484
    %1843 = vmatpush2.bf16.msra.mxu0 %v1483
    %1844 = vmatprep.subr.bf16.mxu0 %v1480
    %1845 = vmatpush2.bf16.msra.mxu0 %v1479
    %1846 = vmatprep.subr.bf16.mxu0 %v1476
    %1847 = vmatpush2.bf16.msra.mxu0 %v1475
    %1848 = vmatprep.subr.bf16.mxu0 %v1472
    %1849 = vmatpush2.bf16.msra.mxu0 %v1471
    %1850 = vmatprep.mubr.bf16.mxu0 %v830
    %1851 = vmatmul.mubr.bf16.gmra.mxu0 %v829
    %v1852 = vpop.f32.mrf.mxu0
    %v1853 = vadd.f32 %v1790, %v1852
    %v1854 = vpop.f32.mrf.mxu0
    %v1855 = vadd.f32 %v1792, %v1854
    %v1856 = vpop.f32.mrf.mxu0
    %v1857 = vadd.f32 %v1794, %v1856
    %v1858 = vpop.f32.mrf.mxu0
    %v1859 = vadd.f32 %v1796, %v1858
    %1860 = vmatprep.mubr.bf16.mxu0 %v834
    %1861 = vmatmul.mubr.bf16.gmra.mxu0 %v833
    %v1862 = vpop.f32.mrf.mxu0
    %v1863 = vadd.f32 %v1800, %v1862
    %v1864 = vpop.f32.mrf.mxu0
    %v1865 = vadd.f32 %v1802, %v1864
    %v1866 = vpop.f32.mrf.mxu0
    %v1867 = vadd.f32 %v1804, %v1866
    %v1868 = vpop.f32.mrf.mxu0
    %v1869 = vadd.f32 %v1806, %v1868
    %1870 = vmatprep.mubr.bf16.mxu0 %v838
    %1871 = vmatmul.mubr.bf16.gmra.mxu0 %v837
    %v1872 = vpop.f32.mrf.mxu0
    %v1873 = vadd.f32 %v1810, %v1872
    %v1874 = vpop.f32.mrf.mxu0
    %v1875 = vadd.f32 %v1812, %v1874
    %v1876 = vpop.f32.mrf.mxu0
    %v1877 = vadd.f32 %v1814, %v1876
    %v1878 = vpop.f32.mrf.mxu0
    %v1879 = vadd.f32 %v1816, %v1878
    %1880 = vdwg.mxu0
    %v1881 = vxor.u32 %v1727, 2147483648
    %v1882 = vxor.u32 %v1729, 2147483648
    %v1883 = vxor.u32 %v1853, 2147483648
    %v1884 = vxor.u32 %v1855, 2147483648
    %v1885 = vxor.u32 %v1731, 2147483648
    %v1886 = vxor.u32 %v1733, 2147483648
    %v1887 = vxor.u32 %v1857, 2147483648
    %v1888 = vxor.u32 %v1859, 2147483648
    %v1889 = vxor.u32 %v1737, 2147483648
    %v1890 = vxor.u32 %v1739, 2147483648
    %v1891 = vxor.u32 %v1863, 2147483648
    %v1892 = vxor.u32 %v1865, 2147483648
    %v1893 = vxor.u32 %v1741, 2147483648
    %v1894 = vxor.u32 %v1743, 2147483648
    %v1895 = vxor.u32 %v1867, 2147483648
    %v1896 = vxor.u32 %v1869, 2147483648
    %v1897 = vxor.u32 %v1747, 2147483648
    %v1898 = vxor.u32 %v1749, 2147483648
    %v1899 = vxor.u32 %v1873, 2147483648
    %v1900 = vxor.u32 %v1875, 2147483648
    %v1901 = vxor.u32 %v1751, 2147483648
    %v1902 = vxor.u32 %v1753, 2147483648
    %v1903 = vxor.u32 %v1877, 2147483648
    %v1904 = vxor.u32 %v1879, 2147483648
    %v1905 = vmul.f32 %v1881, 1.442695
    %v1906 = vpow.pop %v1905
    %v1907 = vmul.f32 %v1882, 1.442695
    %v1908 = vpow.pop %v1907
    %v1909 = vmul.f32 %v1883, 1.442695
    %v1910 = vpow.pop %v1909
    %v1911 = vmul.f32 %v1884, 1.442695
    %v1912 = vpow.pop %v1911
    %v1913 = vmul.f32 %v1885, 1.442695
    %v1914 = vpow.pop %v1913
    %v1915 = vmul.f32 %v1886, 1.442695
    %v1916 = vpow.pop %v1915
    %v1917 = vmul.f32 %v1887, 1.442695
    %v1918 = vpow.pop %v1917
    %v1919 = vmul.f32 %v1888, 1.442695
    %v1920 = vpow.pop %v1919
    %v1921 = vmul.f32 %v1889, 1.442695
    %v1922 = vpow.pop %v1921
    %v1923 = vmul.f32 %v1890, 1.442695
    %v1924 = vpow.pop %v1923
    %v1925 = vmul.f32 %v1891, 1.442695
    %v1926 = vpow.pop %v1925
    %v1927 = vmul.f32 %v1892, 1.442695
    %v1928 = vpow.pop %v1927
    %v1929 = vmul.f32 %v1893, 1.442695
    %v1930 = vpow.pop %v1929
    %v1931 = vmul.f32 %v1894, 1.442695
    %v1932 = vpow.pop %v1931
    %v1933 = vmul.f32 %v1895, 1.442695
    %v1934 = vpow.pop %v1933
    %v1935 = vmul.f32 %v1896, 1.442695
    %v1936 = vpow.pop %v1935
    %v1937 = vmul.f32 %v1897, 1.442695
    %v1938 = vpow.pop %v1937
    %v1939 = vmul.f32 %v1898, 1.442695
    %v1940 = vpow.pop %v1939
    %v1941 = vmul.f32 %v1899, 1.442695
    %v1942 = vpow.pop %v1941
    %v1943 = vmul.f32 %v1900, 1.442695
    %v1944 = vpow.pop %v1943
    %v1945 = vmul.f32 %v1901, 1.442695
    %v1946 = vpow.pop %v1945
    %v1947 = vmul.f32 %v1902, 1.442695
    %v1948 = vpow.pop %v1947
    %v1949 = vmul.f32 %v1903, 1.442695
    %v1950 = vpow.pop %v1949
    %v1951 = vmul.f32 %v1904, 1.442695
    %v1952 = vpow.pop %v1951
    %v1953 = vadd.f32 %v1906, 1.0
    %v1954 = vadd.f32 %v1908, 1.0
    %v1955 = vadd.f32 %v1910, 1.0
    %v1956 = vadd.f32 %v1912, 1.0
    %v1957 = vadd.f32 %v1914, 1.0
    %v1958 = vadd.f32 %v1916, 1.0
    %v1959 = vadd.f32 %v1918, 1.0
    %v1960 = vadd.f32 %v1920, 1.0
    %v1961 = vadd.f32 %v1922, 1.0
    %v1962 = vadd.f32 %v1924, 1.0
    %v1963 = vadd.f32 %v1926, 1.0
    %v1964 = vadd.f32 %v1928, 1.0
    %v1965 = vadd.f32 %v1930, 1.0
    %v1966 = vadd.f32 %v1932, 1.0
    %v1967 = vadd.f32 %v1934, 1.0
    %v1968 = vadd.f32 %v1936, 1.0
    %v1969 = vadd.f32 %v1938, 1.0
    %v1970 = vadd.f32 %v1940, 1.0
    %v1971 = vadd.f32 %v1942, 1.0
    %v1972 = vadd.f32 %v1944, 1.0
    %v1973 = vadd.f32 %v1946, 1.0
    %v1974 = vadd.f32 %v1948, 1.0
    %v1975 = vadd.f32 %v1950, 1.0
    %v1976 = vadd.f32 %v1952, 1.0
    %v1977 = vrcp.pop %v1953
    %v1978 = vmul.f32 1.0, %v1977
    %v1979 = vrcp.pop %v1954
    %v1980 = vmul.f32 1.0, %v1979
    %v1981 = vrcp.pop %v1955
    %v1982 = vmul.f32 1.0, %v1981
    %v1983 = vrcp.pop %v1956
    %v1984 = vmul.f32 1.0, %v1983
    %v1985 = vrcp.pop %v1957
    %v1986 = vmul.f32 1.0, %v1985
    %v1987 = vrcp.pop %v1958
    %v1988 = vmul.f32 1.0, %v1987
    %v1989 = vrcp.pop %v1959
    %v1990 = vmul.f32 1.0, %v1989
    %v1991 = vrcp.pop %v1960
    %v1992 = vmul.f32 1.0, %v1991
    %v1993 = vrcp.pop %v1961
    %v1994 = vmul.f32 1.0, %v1993
    %v1995 = vrcp.pop %v1962
    %v1996 = vmul.f32 1.0, %v1995
    %v1997 = vrcp.pop %v1963
    %v1998 = vmul.f32 1.0, %v1997
    %v1999 = vrcp.pop %v1964
    %v2000 = vmul.f32 1.0, %v1999
    %v2001 = vrcp.pop %v1965
    %v2002 = vmul.f32 1.0, %v2001
    %v2003 = vrcp.pop %v1966
    %v2004 = vmul.f32 1.0, %v2003
    %v2005 = vrcp.pop %v1967
    %v2006 = vmul.f32 1.0, %v2005
    %v2007 = vrcp.pop %v1968
    %v2008 = vmul.f32 1.0, %v2007
    %v2009 = vrcp.pop %v1969
    %v2010 = vmul.f32 1.0, %v2009
    %v2011 = vrcp.pop %v1970
    %v2012 = vmul.f32 1.0, %v2011
    %v2013 = vrcp.pop %v1971
    %v2014 = vmul.f32 1.0, %v2013
    %v2015 = vrcp.pop %v1972
    %v2016 = vmul.f32 1.0, %v2015
    %v2017 = vrcp.pop %v1973
    %v2018 = vmul.f32 1.0, %v2017
    %v2019 = vrcp.pop %v1974
    %v2020 = vmul.f32 1.0, %v2019
    %v2021 = vrcp.pop %v1975
    %v2022 = vmul.f32 1.0, %v2021
    %v2023 = vrcp.pop %v1976
    %v2024 = vmul.f32 1.0, %v2023
    %v2025 = vmul.f32 %v1727, %v1978
    %v2026 = vmul.f32 %v1729, %v1980
    %v2027 = vmul.f32 %v1853, %v1982
    %v2028 = vmul.f32 %v1855, %v1984
    %v2029 = vmul.f32 %v1731, %v1986
    %v2030 = vmul.f32 %v1733, %v1988
    %v2031 = vmul.f32 %v1857, %v1990
    %v2032 = vmul.f32 %v1859, %v1992
    %v2033 = vmul.f32 %v1737, %v1994
    %v2034 = vmul.f32 %v1739, %v1996
    %v2035 = vmul.f32 %v1863, %v1998
    %v2036 = vmul.f32 %v1865, %v2000
    %v2037 = vmul.f32 %v1741, %v2002
    %v2038 = vmul.f32 %v1743, %v2004
    %v2039 = vmul.f32 %v1867, %v2006
    %v2040 = vmul.f32 %v1869, %v2008
    %v2041 = vmul.f32 %v1747, %v2010
    %v2042 = vmul.f32 %v1749, %v2012
    %v2043 = vmul.f32 %v1873, %v2014
    %v2044 = vmul.f32 %v1875, %v2016
    %v2045 = vmul.f32 %v1751, %v2018
    %v2046 = vmul.f32 %v1753, %v2020
    %v2047 = vmul.f32 %v1877, %v2022
    %v2048 = vmul.f32 %v1879, %v2024
    %v2049 = vpack.c.bf16 %v2029, %v2025
    %v2050 = vpack.c.bf16 %v2030, %v2026
    %v2051 = vpack.c.bf16 %v2031, %v2027
    %v2052 = vpack.c.bf16 %v2032, %v2028
    %v2053 = vpack.c.bf16 %v2037, %v2033
    %v2054 = vpack.c.bf16 %v2038, %v2034
    %v2055 = vpack.c.bf16 %v2039, %v2035
    %v2056 = vpack.c.bf16 %v2040, %v2036
    %v2057 = vpack.c.bf16 %v2045, %v2041
    %v2058 = vpack.c.bf16 %v2046, %v2042
    %v2059 = vpack.c.bf16 %v2047, %v2043
    %v2060 = vpack.c.bf16 %v2048, %v2044
    %v2061 = vld [vmem:[#allocation10] sm:$0xf]
    %v2062 = vld [vmem:[#allocation10 + $0x4] sm:$0xf]
    %v2063 = vld [vmem:[#allocation10 + $0x8] sm:$0xf]
    %v2064 = vld [vmem:[#allocation10 + $0xc] sm:$0xf]
    %v2065 = vld [vmem:[#allocation10 + $0x10] sm:$0xf]
    %v2066 = vld [vmem:[#allocation10 + $0x14] sm:$0xf]
    %v2067 = vld [vmem:[#allocation10 + $0x18] sm:$0xf]
    %v2068 = vld [vmem:[#allocation10 + $0x1c] sm:$0xf]
    %v2069 = vld [vmem:[#allocation10 + $0x20] sm:$0xf]
    %v2070 = vld [vmem:[#allocation10 + $0x24] sm:$0xf]
    %v2071 = vld [vmem:[#allocation10 + $0x28] sm:$0xf]
    %v2072 = vld [vmem:[#allocation10 + $0x2c] sm:$0xf]
    %v2073 = vld [vmem:[#allocation10 + $0x30] sm:$0xf]
    %v2074 = vld [vmem:[#allocation10 + $0x34] sm:$0xf]
    %v2075 = vld [vmem:[#allocation10 + $0x38] sm:$0xf]
    %v2076 = vld [vmem:[#allocation10 + $0x3c] sm:$0xf]
    %v2077 = vld [vmem:[#allocation10 + $0x40] sm:$0xf]
    %v2078 = vld [vmem:[#allocation10 + $0x44] sm:$0xf]
    %v2079 = vld [vmem:[#allocation10 + $0x48] sm:$0xf]
    %v2080 = vld [vmem:[#allocation10 + $0x4c] sm:$0xf]
    %v2081 = vld [vmem:[#allocation10 + $0x50] sm:$0xf]
    %v2082 = vld [vmem:[#allocation10 + $0x54] sm:$0xf]
    %v2083 = vld [vmem:[#allocation10 + $0x58] sm:$0xf]
    %v2084 = vld [vmem:[#allocation10 + $0x5c] sm:$0xf]
    %v2085 = vld [vmem:[#allocation10 + $0x60] sm:$0xf]
    %v2086 = vld [vmem:[#allocation10 + $0x64] sm:$0xf]
    %v2087 = vld [vmem:[#allocation10 + $0x68] sm:$0xf]
    %v2088 = vld [vmem:[#allocation10 + $0x6c] sm:$0xf]
    %v2089 = vld [vmem:[#allocation10 + $0x70] sm:$0xf]
    %v2090 = vld [vmem:[#allocation10 + $0x74] sm:$0xf]
    %v2091 = vld [vmem:[#allocation10 + $0x78] sm:$0xf]
    %v2092 = vld [vmem:[#allocation10 + $0x7c] sm:$0xf]
    %v2093 = vld [vmem:[#allocation10 + $0x80] sm:$0xf]
    %v2094 = vld [vmem:[#allocation10 + $0x84] sm:$0xf]
    %v2095 = vld [vmem:[#allocation10 + $0x88] sm:$0xf]
    %v2096 = vld [vmem:[#allocation10 + $0x8c] sm:$0xf]
    %v2097 = vld [vmem:[#allocation10 + $0x90] sm:$0xf]
    %v2098 = vld [vmem:[#allocation10 + $0x94] sm:$0xf]
    %v2099 = vld [vmem:[#allocation10 + $0x98] sm:$0xf]
    %v2100 = vld [vmem:[#allocation10 + $0x9c] sm:$0xf]
    %v2101 = vld [vmem:[#allocation10 + $0xa0] sm:$0xf]
    %v2102 = vld [vmem:[#allocation10 + $0xa4] sm:$0xf]
    %v2103 = vld [vmem:[#allocation10 + $0xa8] sm:$0xf]
    %v2104 = vld [vmem:[#allocation10 + $0xac] sm:$0xf]
    %v2105 = vld [vmem:[#allocation10 + $0xb0] sm:$0xf]
    %v2106 = vld [vmem:[#allocation10 + $0xb4] sm:$0xf]
    %v2107 = vld [vmem:[#allocation10 + $0xb8] sm:$0xf]
    %v2108 = vld [vmem:[#allocation10 + $0xbc] sm:$0xf]
    %v2109 = vld [vmem:[#allocation10 + $0xc0] sm:$0xf]
    %v2110 = vld [vmem:[#allocation10 + $0xc4] sm:$0xf]
    %v2111 = vld [vmem:[#allocation10 + $0xc8] sm:$0xf]
    %v2112 = vld [vmem:[#allocation10 + $0xcc] sm:$0xf]
    %v2113 = vld [vmem:[#allocation10 + $0xd0] sm:$0xf]
    %v2114 = vld [vmem:[#allocation10 + $0xd4] sm:$0xf]
    %v2115 = vld [vmem:[#allocation10 + $0xd8] sm:$0xf]
    %v2116 = vld [vmem:[#allocation10 + $0xdc] sm:$0xf]
    %v2117 = vld [vmem:[#allocation10 + $0xe0] sm:$0xf]
    %v2118 = vld [vmem:[#allocation10 + $0xe4] sm:$0xf]
    %v2119 = vld [vmem:[#allocation10 + $0xe8] sm:$0xf]
    %v2120 = vld [vmem:[#allocation10 + $0xec] sm:$0xf]
    %v2121 = vld [vmem:[#allocation10 + $0xf0] sm:$0xf]
    %v2122 = vld [vmem:[#allocation10 + $0xf4] sm:$0xf]
    %v2123 = vld [vmem:[#allocation10 + $0xf8] sm:$0xf]
    %v2124 = vld [vmem:[#allocation10 + $0xfc] sm:$0xf]
    %v2125 = vld [vmem:[%s7] sm:$0x1]
    %v2127 = vlaneseq
    %v2128 = vshrl.u32 %v2127, 7
    %v2129 = vsub.s32 0, %v2128
    %v2130 = vrot.slane %v2125, %v2129
    %v2196 = vunpack.c.l.b16 %v2061
    %v2197 = vunpack.c.l.b16 %v2062
    %v2198 = vunpack.c.l.b16 %v2063
    %v2199 = vunpack.c.l.b16 %v2064
    %v2200 = vunpack.c.l.b16 %v2065
    %v2201 = vunpack.c.l.b16 %v2066
    %v2202 = vunpack.c.l.b16 %v2067
    %v2203 = vunpack.c.l.b16 %v2068
    %v2204 = vunpack.c.l.b16 %v2069
    %v2205 = vunpack.c.l.b16 %v2070
    %v2206 = vunpack.c.l.b16 %v2071
    %v2207 = vunpack.c.l.b16 %v2072
    %v2208 = vunpack.c.l.b16 %v2073
    %v2209 = vunpack.c.l.b16 %v2074
    %v2210 = vunpack.c.l.b16 %v2075
    %v2211 = vunpack.c.l.b16 %v2076
    %v2212 = vunpack.c.l.b16 %v2077
    %v2213 = vunpack.c.l.b16 %v2078
    %v2214 = vunpack.c.l.b16 %v2079
    %v2215 = vunpack.c.l.b16 %v2080
    %v2216 = vunpack.c.l.b16 %v2081
    %v2217 = vunpack.c.l.b16 %v2082
    %v2218 = vunpack.c.l.b16 %v2083
    %v2219 = vunpack.c.l.b16 %v2084
    %v2220 = vunpack.c.l.b16 %v2085
    %v2221 = vunpack.c.l.b16 %v2086
    %v2222 = vunpack.c.l.b16 %v2087
    %v2223 = vunpack.c.l.b16 %v2088
    %v2224 = vunpack.c.l.b16 %v2089
    %v2225 = vunpack.c.l.b16 %v2090
    %v2226 = vunpack.c.l.b16 %v2091
    %v2227 = vunpack.c.l.b16 %v2092
    %v2228 = vunpack.c.l.b16 %v2093
    %v2229 = vunpack.c.l.b16 %v2094
    %v2230 = vunpack.c.l.b16 %v2095
    %v2231 = vunpack.c.l.b16 %v2096
    %v2232 = vunpack.c.l.b16 %v2097
    %v2233 = vunpack.c.l.b16 %v2098
    %v2234 = vunpack.c.l.b16 %v2099
    %v2235 = vunpack.c.l.b16 %v2100
    %v2236 = vunpack.c.l.b16 %v2101
    %v2237 = vunpack.c.l.b16 %v2102
    %v2238 = vunpack.c.l.b16 %v2103
    %v2239 = vunpack.c.l.b16 %v2104
    %v2240 = vunpack.c.l.b16 %v2105
    %v2241 = vunpack.c.l.b16 %v2106
    %v2242 = vunpack.c.l.b16 %v2107
    %v2243 = vunpack.c.l.b16 %v2108
    %v2244 = vunpack.c.l.b16 %v2109
    %v2245 = vunpack.c.l.b16 %v2110
    %v2246 = vunpack.c.l.b16 %v2111
    %v2247 = vunpack.c.l.b16 %v2112
    %v2248 = vunpack.c.l.b16 %v2113
    %v2249 = vunpack.c.l.b16 %v2114
    %v2250 = vunpack.c.l.b16 %v2115
    %v2251 = vunpack.c.l.b16 %v2116
    %v2252 = vunpack.c.l.b16 %v2117
    %v2253 = vunpack.c.l.b16 %v2118
    %v2254 = vunpack.c.l.b16 %v2119
    %v2255 = vunpack.c.l.b16 %v2120
    %v2256 = vunpack.c.l.b16 %v2121
    %v2257 = vunpack.c.l.b16 %v2122
    %v2258 = vunpack.c.l.b16 %v2123
    %v2259 = vunpack.c.l.b16 %v2124
    %v2260 = vpack.c.b16 %v2197, %v2196
    %v2261 = vpack.c.b16 %v2199, %v2198
    %v2262 = vpack.c.b16 %v2201, %v2200
    %v2263 = vpack.c.b16 %v2203, %v2202
    %v2264 = vpack.c.b16 %v2205, %v2204
    %v2265 = vpack.c.b16 %v2207, %v2206
    %v2266 = vpack.c.b16 %v2209, %v2208
    %v2267 = vpack.c.b16 %v2211, %v2210
    %v2268 = vpack.c.b16 %v2213, %v2212
    %v2269 = vpack.c.b16 %v2215, %v2214
    %v2270 = vpack.c.b16 %v2217, %v2216
    %v2271 = vpack.c.b16 %v2219, %v2218
    %v2272 = vpack.c.b16 %v2221, %v2220
    %v2273 = vpack.c.b16 %v2223, %v2222
    %v2274 = vpack.c.b16 %v2225, %v2224
    %v2275 = vpack.c.b16 %v2227, %v2226
    %v2276 = vpack.c.b16 %v2229, %v2228
    %v2277 = vpack.c.b16 %v2231, %v2230
    %v2278 = vpack.c.b16 %v2233, %v2232
    %v2279 = vpack.c.b16 %v2235, %v2234
    %v2280 = vpack.c.b16 %v2237, %v2236
    %v2281 = vpack.c.b16 %v2239, %v2238
    %v2282 = vpack.c.b16 %v2241, %v2240
    %v2283 = vpack.c.b16 %v2243, %v2242
    %v2284 = vpack.c.b16 %v2245, %v2244
    %v2285 = vpack.c.b16 %v2247, %v2246
    %v2286 = vpack.c.b16 %v2249, %v2248
    %v2287 = vpack.c.b16 %v2251, %v2250
    %v2288 = vpack.c.b16 %v2253, %v2252
    %v2289 = vpack.c.b16 %v2255, %v2254
    %v2290 = vpack.c.b16 %v2257, %v2256
    %v2291 = vpack.c.b16 %v2259, %v2258
    %2324 = vmatprep.subr.bf16.mxu0 0
    %2325 = vmatpush1.bf16.msra.mxu0 %v2267
    %2326 = vmatprep.subr.bf16.mxu0 0
    %2327 = vmatpush1.bf16.msra.mxu0 %v2266
    %2328 = vmatprep.subr.bf16.mxu0 0
    %2329 = vmatpush1.bf16.msra.mxu0 %v2265
    %2330 = vmatprep.subr.bf16.mxu0 0
    %2331 = vmatpush1.bf16.msra.mxu0 %v2264
    %2332 = vmatprep.subr.bf16.mxu0 0
    %2333 = vmatpush1.bf16.msra.mxu0 %v2263
    %2334 = vmatprep.subr.bf16.mxu0 0
    %2335 = vmatpush1.bf16.msra.mxu0 %v2262
    %2336 = vmatprep.subr.bf16.mxu0 0
    %2337 = vmatpush1.bf16.msra.mxu0 %v2261
    %2338 = vmatprep.subr.bf16.mxu0 0
    %2339 = vmatpush1.bf16.msra.mxu0 %v2260
    %2340 = vmatprep.subr.bf16.mxu0 0
    %2341 = vmatpush2.bf16.msra.mxu0 %v2275
    %2342 = vmatprep.subr.bf16.mxu0 0
    %2343 = vmatpush2.bf16.msra.mxu0 %v2274
    %2344 = vmatprep.subr.bf16.mxu0 0
    %2345 = vmatpush2.bf16.msra.mxu0 %v2273
    %2346 = vmatprep.subr.bf16.mxu0 0
    %2347 = vmatpush2.bf16.msra.mxu0 %v2272
    %2348 = vmatprep.subr.bf16.mxu0 0
    %2349 = vmatpush2.bf16.msra.mxu0 %v2271
    %2350 = vmatprep.subr.bf16.mxu0 0
    %2351 = vmatpush2.bf16.msra.mxu0 %v2270
    %2352 = vmatprep.subr.bf16.mxu0 0
    %2353 = vmatpush2.bf16.msra.mxu0 %v2269
    %2354 = vmatprep.subr.bf16.mxu0 0
    %2355 = vmatpush2.bf16.msra.mxu0 %v2268
    %2356 = vmatprep.mubr.bf16.mxu0 %v2050
    %2357 = vmatmul.mubr.bf16.gmra.mxu0 %v2049
    %v2358 = vpop.f32.mrf.mxu0
    %v2359 = vadd.f32 %v2130, %v2358
    %v2360 = vpop.f32.mrf.mxu0
    %v2361 = vpop.f32.mrf.mxu0
    %v2362 = vadd.f32 %v2130, %v2361
    %v2363 = vpop.f32.mrf.mxu0
    %2364 = vmatprep.mubr.bf16.mxu0 %v2054
    %2365 = vmatmul.mubr.bf16.gmra.mxu0 %v2053
    %v2366 = vpop.f32.mrf.mxu0
    %v2367 = vadd.f32 %v2130, %v2366
    %v2368 = vpop.f32.mrf.mxu0
    %v2369 = vpop.f32.mrf.mxu0
    %v2370 = vadd.f32 %v2130, %v2369
    %v2371 = vpop.f32.mrf.mxu0
    %2372 = vmatprep.mubr.bf16.mxu0 %v2058
    %2373 = vmatmul.mubr.bf16.gmra.mxu0 %v2057
    %v2374 = vpop.f32.mrf.mxu0
    %v2375 = vadd.f32 %v2130, %v2374
    %v2376 = vpop.f32.mrf.mxu0
    %v2377 = vpop.f32.mrf.mxu0
    %v2378 = vadd.f32 %v2130, %v2377
    %v2379 = vpop.f32.mrf.mxu0
    %2380 = vdwg.mxu0
    %2381 = vmatprep.subr.bf16.mxu0 0
    %2382 = vmatpush1.bf16.msra.mxu0 %v2283
    %2383 = vmatprep.subr.bf16.mxu0 0
    %2384 = vmatpush1.bf16.msra.mxu0 %v2282
    %2385 = vmatprep.subr.bf16.mxu0 0
    %2386 = vmatpush1.bf16.msra.mxu0 %v2281
    %2387 = vmatprep.subr.bf16.mxu0 0
    %2388 = vmatpush1.bf16.msra.mxu0 %v2280
    %2389 = vmatprep.subr.bf16.mxu0 0
    %2390 = vmatpush1.bf16.msra.mxu0 %v2279
    %2391 = vmatprep.subr.bf16.mxu0 0
    %2392 = vmatpush1.bf16.msra.mxu0 %v2278
    %2393 = vmatprep.subr.bf16.mxu0 0
    %2394 = vmatpush1.bf16.msra.mxu0 %v2277
    %2395 = vmatprep.subr.bf16.mxu0 0
    %2396 = vmatpush1.bf16.msra.mxu0 %v2276
    %2397 = vmatprep.subr.bf16.mxu0 0
    %2398 = vmatpush2.bf16.msra.mxu0 %v2291
    %2399 = vmatprep.subr.bf16.mxu0 0
    %2400 = vmatpush2.bf16.msra.mxu0 %v2290
    %2401 = vmatprep.subr.bf16.mxu0 0
    %2402 = vmatpush2.bf16.msra.mxu0 %v2289
    %2403 = vmatprep.subr.bf16.mxu0 0
    %2404 = vmatpush2.bf16.msra.mxu0 %v2288
    %2405 = vmatprep.subr.bf16.mxu0 0
    %2406 = vmatpush2.bf16.msra.mxu0 %v2287
    %2407 = vmatprep.subr.bf16.mxu0 0
    %2408 = vmatpush2.bf16.msra.mxu0 %v2286
    %2409 = vmatprep.subr.bf16.mxu0 0
    %2410 = vmatpush2.bf16.msra.mxu0 %v2285
    %2411 = vmatprep.subr.bf16.mxu0 0
    %2412 = vmatpush2.bf16.msra.mxu0 %v2284
    %2413 = vmatprep.mubr.bf16.mxu0 %v2052
    %2414 = vmatmul.mubr.bf16.gmra.mxu0 %v2051
    %v2415 = vpop.f32.mrf.mxu0
    %v2416 = vadd.f32 %v2359, %v2415
    %v2417 = vpop.f32.mrf.mxu0
    %v2418 = vpop.f32.mrf.mxu0
    %v2419 = vadd.f32 %v2362, %v2418
    %v2420 = vpop.f32.mrf.mxu0
    %2421 = vmatprep.mubr.bf16.mxu0 %v2056
    %2422 = vmatmul.mubr.bf16.gmra.mxu0 %v2055
    %v2423 = vpop.f32.mrf.mxu0
    %v2424 = vadd.f32 %v2367, %v2423
    %v2425 = vpop.f32.mrf.mxu0
    %v2426 = vpop.f32.mrf.mxu0
    %v2427 = vadd.f32 %v2370, %v2426
    %v2428 = vpop.f32.mrf.mxu0
    %2429 = vmatprep.mubr.bf16.mxu0 %v2060
    %2430 = vmatmul.mubr.bf16.gmra.mxu0 %v2059
    %v2431 = vpop.f32.mrf.mxu0
    %v2432 = vadd.f32 %v2375, %v2431
    %v2433 = vpop.f32.mrf.mxu0
    %v2434 = vpop.f32.mrf.mxu0
    %v2435 = vadd.f32 %v2378, %v2434
    %v2436 = vpop.f32.mrf.mxu0
    %2437 = vdwg.mxu0
    %2438 = vst [vmem:[#allocation11] sm:$0xff] %v2416
    %2439 = vst [vmem:[#allocation11 + $0x8] sm:$0xff] %v2419
    %2440 = vst [vmem:[#allocation11 + $0x10] sm:$0xff] %v2424
    %2441 = vst [vmem:[#allocation11 + $0x18] sm:$0xff] %v2427
    %2442 = vst [vmem:[#allocation11 + $0x20] sm:$0xff] %v2432
    %2443 = vst [vmem:[#allocation11 + $0x28] sm:$0xff] %v2435
    // Predicated region
    $region54: #{tpu_custom_call.1} parent=1 // pred_check
      _
    $region55: #{tpu_custom_call.1} parent=1 // pred_check_branch
      %2445 = sbr.rel (0) target = $region57
    $region56: #{tpu_custom_call.1} parent=1 // pred_region
      %s2447 = ssub.s32 768, 768
      %2448 = vsyncadd [#allocation4], %s2447
      %s2449 = sshll.u32 [#allocation11], 4
      %s2450 = int_to_ptr.vmem [resolvable:$true] %s2449
      %2455 = dma.vmem_to_hbm [thread:$0]  %s2450, 768, %s8, [#allocation4], 128, 128, 8
    $region57: #{tpu_custom_call.1} parent=1 // pred_fallthru
      _
    // Predicated region
    $region58: #{tpu_custom_call.1} parent=1 // pred_check
      _
    $region59: #{tpu_custom_call.1} parent=1 // pred_check_branch
      %2457 = sbr.rel (0) target = $region61
    $region60: #{tpu_custom_call.1} parent=1 // pred_region
      %2458 = dma.done [#allocation4], 768
    $region61: #{tpu_custom_call.1} parent=1 // pred_fallthru
      _
    %2459 = vsyncpa [#allocation3], 1
    %2460 = vsyncpa [#allocation6], 1
    %2461 = vsyncpa [#allocation9], 1
    %2462 = vsyncpa [#allocation4], 1

// kernel: tpu_custom_call.1
$region0: #{tpu_custom_call.1}
  #allocation0 [shape = 'u32[]', space=smem, size = 0x4, offset = 0x4, fixed_abs, tag = 'smem constant byte address 0x4 - core index']
  #allocation1 [shape = 'u32[144,128]{1,0:T(1,128)}', space=vmem, size = 0x12000, scoped, tag = 'internal scratch']
  %s0 = inlined_call_operand.hbm [shape: f32[6,8,64], index: 0, kind: input, shape index: {}]
  %s1 = inlined_call_operand.vmem [shape: f32[6,1], index: 1, kind: input, shape index: {}]
  %s2 = inlined_call_operand.hbm [shape: f32[6,512], index: 2, kind: input, shape index: {}]
  %s3 = inlined_call_operand.hbm [shape: bf16[64,512], index: 3, kind: input, shape index: {}]
  %s4 = inlined_call_operand.hbm [shape: bf16[512,512], index: 4, kind: input, shape index: {}]
  %s5 = inlined_call_operand.vmem [shape: f32[1,512], index: 5, kind: input, shape index: {}]
  %s6 = inlined_call_operand.hbm [shape: bf16[512,128], index: 6, kind: input, shape index: {}]
  %s7 = inlined_call_operand.vmem [shape: f32[1,128], index: 7, kind: input, shape index: {}]
  %s8 = inlined_call_operand.hbm [shape: f32[6,8,128], index: 8, kind: output, shape index: {}]
  %s9 = sld [smem:[#allocation0]]
  $region62: #{tpu_custom_call.1} parent=0
    _
  %s11 = ssub.s32 1, %s9
  %s12 = scalar_select 0, %s11, %s9
  $region1: #{tpu_custom_call.1} parent=0
    #allocation2 [shape = 'u8[24576]{0}', space=vmem, size = 0x6000, scoped, tag = 'input window, operand 0, single buffered']
    #allocation3 [shape = 's32[1]{0}', space=sflag, size = 0x4, scoped, tag = 'scoped memory for tpu_custom_call.1']
    #allocation4 [shape = 's32[1]{0}', space=sflag, size = 0x4, scoped, tag = 'scoped memory for tpu_custom_call.1']
    #allocation5 [shape = 'u8[16384]{0}', space=vmem, size = 0x4000, scoped, tag = 'input window, operand 2, single buffered']
    #allocation6 [shape = 's32[1]{0}', space=sflag, size = 0x4, scoped, tag = 'scoped memory for tpu_custom_call.1']
    #allocation7 [shape = 'u8[65536]{0}', space=vmem, size = 0x10000, scoped, tag = 'input window, operand 3, single buffered']
    #allocation8 [shape = 'u8[524288]{0}', space=vmem, size = 0x80000, scoped, tag = 'input window, operand 4, single buffered']
    #allocation9 [shape = 's32[1]{0}', space=sflag, size = 0x4, scoped, tag = 'scoped memory for tpu_custom_call.1']
    #allocation10 [shape = 'u8[131072]{0}', space=vmem, size = 0x20000, scoped, tag = 'input window, operand 6, single buffered']
    #allocation11 [shape = 'u8[24576]{0}', space=vmem, size = 0x6000, scoped, tag = 'output window, operand 0, single buffered']
    %13 = vsyncpa [#allocation3], 0
    %14 = vsyncpa [#allocation6], 0
    %15 = vsyncpa [#allocation9], 0
    %16 = vsyncpa [#allocation4], 0
    // Predicated region
    $region2: #{tpu_custom_call.1} parent=1 // pred_check
      _
    $region3: #{tpu_custom_call.1} parent=1 // pred_check_branch
      %18 = sbr.rel (0) target = $region5
    $region4: #{tpu_custom_call.1} parent=1 // pred_region
      %s20 = ssub.s32 768, 768
      %21 = vsyncadd [#allocation3], %s20
      %s22 = sshll.u32 [#allocation2], 4
      %s23 = int_to_ptr.vmem [resolvable:$true] %s22
      %28 = dma.hbm_to_vmem [thread:$0]  %s0, 768, %s23, [#allocation3], 128, 128, 8
    $region5: #{tpu_custom_call.1} parent=1 // pred_fallthru
      _
    // Predicated region
    $region6: #{tpu_custom_call.1} parent=1 // pred_check
      _
    $region7: #{tpu_custom_call.1} parent=1 // pred_check_branch
      %30 = sbr.rel (0) target = $region9
    $region8: #{tpu_custom_call.1} parent=1 // pred_region
      _
    $region9: #{tpu_custom_call.1} parent=1 // pred_fallthru
      _
    // Predicated region
    $region10: #{tpu_custom_call.1} parent=1 // pred_check
      _
    $region11: #{tpu_custom_call.1} parent=1 // pred_check_branch
      %32 = sbr.rel (0) target = $region13
    $region12: #{tpu_custom_call.1} parent=1 // pred_region
      %s34 = ssub.s32 512, 512
      %35 = vsyncadd [#allocation6], %s34
      %s37 = sshll.u32 [#allocation5], 4
      %s38 = int_to_ptr.vmem [resolvable:$true] %s37
      %40 = dma.hbm_to_vmem [thread:$0]  %s2, 512, %s38, [#allocation6]
    $region13: #{tpu_custom_call.1} parent=1 // pred_fallthru
      _
    // Predicated region
    $region14: #{tpu_custom_call.1} parent=1 // pred_check
      _
    $region15: #{tpu_custom_call.1} parent=1 // pred_check_branch
      %42 = sbr.rel (0) target = $region17
    $region16: #{tpu_custom_call.1} parent=1 // pred_region
      %s44 = ssub.s32 2048, 2048
      %45 = vsyncadd [#allocation6], %s44
      %s46 = sshll.u32 [#allocation7], 4
      %s47 = int_to_ptr.vmem [resolvable:$true] %s46
      %52 = dma.hbm_to_vmem [thread:$0]  %s3, 2048, %s47, [#allocation6], 256, 256, 16
    $region17: #{tpu_custom_call.1} parent=1 // pred_fallthru
      _
    // Predicated region
    $region18: #{tpu_custom_call.1} parent=1 // pred_check
      _
    $region19: #{tpu_custom_call.1} parent=1 // pred_check_branch
      %54 = sbr.rel (0) target = $region21
    $region20: #{tpu_custom_call.1} parent=1 // pred_region
      %s56 = ssub.s32 16384, 16384
      %57 = vsyncadd [#allocation9], %s56
      %s58 = sshll.u32 [#allocation8], 4
      %s59 = int_to_ptr.vmem [resolvable:$true] %s58
      %64 = dma.hbm_to_vmem [thread:$0]  %s4, 16384, %s59, [#allocation9], 256, 256, 16
    $region21: #{tpu_custom_call.1} parent=1 // pred_fallthru
      _
    // Predicated region
    $region22: #{tpu_custom_call.1} parent=1 // pred_check
      _
    $region23: #{tpu_custom_call.1} parent=1 // pred_check_branch
      %66 = sbr.rel (0) target = $region25
    $region24: #{tpu_custom_call.1} parent=1 // pred_region
      _
    $region25: #{tpu_custom_call.1} parent=1 // pred_fallthru
      _
    // Predicated region
    $region26: #{tpu_custom_call.1} parent=1 // pred_check
      _
    $region27: #{tpu_custom_call.1} parent=1 // pred_check_branch
      %68 = sbr.rel (0) target = $region29
    $region28: #{tpu_custom_call.1} parent=1 // pred_region
      %s70 = ssub.s32 4096, 4096
      %71 = vsyncadd [#allocation9], %s70
      %s72 = sshll.u32 [#allocation10], 4
      %s73 = int_to_ptr.vmem [resolvable:$true] %s72
      %78 = dma.hbm_to_vmem [thread:$0]  %s6, 4096, %s73, [#allocation9], 64, 64, 4
    $region29: #{tpu_custom_call.1} parent=1 // pred_fallthru
      _
    // Predicated region
    $region30: #{tpu_custom_call.1} parent=1 // pred_check
      _
    $region31: #{tpu_custom_call.1} parent=1 // pred_check_branch
      %80 = sbr.rel (0) target = $region33
    $region32: #{tpu_custom_call.1} parent=1 // pred_region
      _
    $region33: #{tpu_custom_call.1} parent=1 // pred_fallthru
      _
    // Predicated region
    $region34: #{tpu_custom_call.1} parent=1 // pred_check
      _
    $region35: #{tpu_custom_call.1} parent=1 // pred_check_branch
      %82 = sbr.rel (0) target = $region37
    $region36: #{tpu_custom_call.1} parent=1 // pred_region
      %83 = dma.done [#allocation3], 768
    $region37: #{tpu_custom_call.1} parent=1 // pred_fallthru
      _
    // Predicated region
    $region38: #{tpu_custom_call.1} parent=1 // pred_check
      _
    $region39: #{tpu_custom_call.1} parent=1 // pred_check_branch
      %85 = sbr.rel (0) target = $region41
    $region40: #{tpu_custom_call.1} parent=1 // pred_region
      %86 = dma.done [#allocation6], 512
    $region41: #{tpu_custom_call.1} parent=1 // pred_fallthru
      _
    // Predicated region
    $region42: #{tpu_custom_call.1} parent=1 // pred_check
      _
    $region43: #{tpu_custom_call.1} parent=1 // pred_check_branch
      %88 = sbr.rel (0) target = $region45
    $region44: #{tpu_custom_call.1} parent=1 // pred_region
      %89 = dma.done [#allocation6], 2048
    $region45: #{tpu_custom_call.1} parent=1 // pred_fallthru
      _
    // Predicated region
    $region46: #{tpu_custom_call.1} parent=1 // pred_check
      _
    $region47: #{tpu_custom_call.1} parent=1 // pred_check_branch
      %91 = sbr.rel (0) target = $region49
    $region48: #{tpu_custom_call.1} parent=1 // pred_region
      %92 = dma.done [#allocation9], 16384
    $region49: #{tpu_custom_call.1} parent=1 // pred_fallthru
      _
    // Predicated region
    $region50: #{tpu_custom_call.1} parent=1 // pred_check
      _
    $region51: #{tpu_custom_call.1} parent=1 // pred_check_branch
      %94 = sbr.rel (0) target = $region53
    $region52: #{tpu_custom_call.1} parent=1 // pred_region
      %95 = dma.done [#allocation9], 4096
    $region53: #{tpu_custom_call.1} parent=1 // pred_fallthru
      _
    %v97 = vld [vmem:[%s1] sm:$0x3f]
    %v99 = vcombine.high %v97, %v97
    %v101 = vunpack.c.l.s4 1966171168
    %v102 = vunpack.c.0.s8 %v101
    %v103 = vlaneseq
    %v104 = vshrl.u32 %v103, 7
    %v105 = vsub.s32 %v102, %v104
    %v106 = vrot.slane %v97, %v105
    %v108 = vunpack.c.l.s4 1966171168
    %v109 = vunpack.c.0.s8 %v108
    %v110 = vlaneseq
    %v111 = vshrl.u32 %v110, 7
    %v112 = vsub.s32 %v109, %v111
    %v113 = vrot.slane %v99, %v112
    %v114 = vcombine.high %v106, %v106
    %v115 = vcombine.high %v113, %v113
    %v117 = vunpack.c.l.s4 1966171168
    %v118 = vunpack.c.0.s8 %v117
    %v119 = vlaneseq
    %v120 = vshrl.u32 %v119, 7
    %v121 = vsub.s32 %v118, %v120
    %v122 = vrot.slane %v106, %v121
    %v124 = vunpack.c.l.s4 1966171168
    %v125 = vunpack.c.0.s8 %v124
    %v126 = vlaneseq
    %v127 = vshrl.u32 %v126, 7
    %v128 = vsub.s32 %v125, %v127
    %v129 = vrot.slane %v113, %v128
    %v131 = vunpack.c.l.s4 1966171168
    %v132 = vunpack.c.0.s8 %v131
    %v133 = vlaneseq
    %v134 = vshrl.u32 %v133, 7
    %v135 = vsub.s32 %v132, %v134
    %v136 = vrot.slane %v114, %v135
    %v138 = vunpack.c.l.s4 1966171168
    %v139 = vunpack.c.0.s8 %v138
    %v140 = vlaneseq
    %v141 = vshrl.u32 %v140, 7
    %v142 = vsub.s32 %v139, %v141
    %v143 = vrot.slane %v115, %v142
    %v144 = vcombine.high %v122, %v122
    %v145 = vcombine.high %v136, %v136
    %v146 = vld [vmem:[#allocation2] sm:$0xff]
    %v147 = vld [vmem:[#allocation2 + $0x8] sm:$0xff]
    %v148 = vld [vmem:[#allocation2 + $0x10] sm:$0xff]
    %v149 = vld [vmem:[#allocation2 + $0x18] sm:$0xff]
    %v150 = vld [vmem:[#allocation2 + $0x20] sm:$0xff]
    %v151 = vld [vmem:[#allocation2 + $0x28] sm:$0xff]
    %v152 = vlaneseq
    %v153 = vshrl.u32 %v152, 7
    %v154 = vsub.s32 0, %v153
    %v155 = vrot.slane %v122, %v154
    %v156 = vlaneseq
    %v157 = vshrl.u32 %v156, 7
    %v158 = vsub.s32 0, %v157
    %v159 = vrot.slane %v136, %v158
    %v160 = vlaneseq
    %v161 = vshrl.u32 %v160, 7
    %v162 = vsub.s32 0, %v161
    %v163 = vrot.slane %v144, %v162
    %v164 = vlaneseq
    %v165 = vshrl.u32 %v164, 7
    %v166 = vsub.s32 0, %v165
    %v167 = vrot.slane %v145, %v166
    %v168 = vlaneseq
    %v169 = vshrl.u32 %v168, 7
    %v170 = vsub.s32 0, %v169
    %v171 = vrot.slane %v129, %v170
    %v172 = vlaneseq
    %v173 = vshrl.u32 %v172, 7
    %v174 = vsub.s32 0, %v173
    %v175 = vrot.slane %v143, %v174
    %176 = vset.pattern.permute.xlu0 0
    %177 = vperm.xlu0 %176, %v155
    %v178 = vpop.permute.xlu0 %177
    %180 = vset.pattern.permute.xlu0 0
    %181 = vperm.xlu0 %180, %v159
    %v182 = vpop.permute.xlu0 %181
    %184 = vset.pattern.permute.xlu0 0
    %185 = vperm.xlu0 %184, %v163
    %v186 = vpop.permute.xlu0 %185
    %188 = vset.pattern.permute.xlu0 0
    %189 = vperm.xlu0 %188, %v167
    %v190 = vpop.permute.xlu0 %189
    %192 = vset.pattern.permute.xlu0 0
    %193 = vperm.xlu0 %192, %v171
    %v194 = vpop.permute.xlu0 %193
    %196 = vset.pattern.permute.xlu0 0
    %197 = vperm.xlu0 %196, %v175
    %v198 = vpop.permute.xlu0 %197
    %v200 = vmul.f32 %v146, %v178
    %v201 = vmul.f32 %v147, %v182
    %v202 = vmul.f32 %v148, %v186
    %v203 = vmul.f32 %v149, %v190
    %v204 = vmul.f32 %v150, %v194
    %v205 = vmul.f32 %v151, %v198
    %v206 = vpack.c.bf16 %v201, %v200
    %v207 = vpack.c.bf16 %v203, %v202
    %v208 = vpack.c.bf16 %v205, %v204
    %v209 = vld [vmem:[#allocation7] sm:$0xff]
    %v210 = vld [vmem:[#allocation7 + $0x8] sm:$0xff]
    %v211 = vld [vmem:[#allocation7 + $0x10] sm:$0xff]
    %v212 = vld [vmem:[#allocation7 + $0x18] sm:$0xff]
    %v213 = vld [vmem:[#allocation7 + $0x20] sm:$0xff]
    %v214 = vld [vmem:[#allocation7 + $0x28] sm:$0xff]
    %v215 = vld [vmem:[#allocation7 + $0x30] sm:$0xff]
    %v216 = vld [vmem:[#allocation7 + $0x38] sm:$0xff]
    %v217 = vld [vmem:[#allocation7 + $0x40] sm:$0xff]
    %v218 = vld [vmem:[#allocation7 + $0x48] sm:$0xff]
    %v219 = vld [vmem:[#allocation7 + $0x50] sm:$0xff]
    %v220 = vld [vmem:[#allocation7 + $0x58] sm:$0xff]
    %v221 = vld [vmem:[#allocation7 + $0x60] sm:$0xff]
    %v222 = vld [vmem:[#allocation7 + $0x68] sm:$0xff]
    %v223 = vld [vmem:[#allocation7 + $0x70] sm:$0xff]
    %v224 = vld [vmem:[#allocation7 + $0x78] sm:$0xff]
    %v241 = vunpack.c.l.b16 %v209
    %v242 = vunpack.c.h.b16 %v209
    %v243 = vunpack.c.l.b16 %v210
    %v244 = vunpack.c.h.b16 %v210
    %v245 = vunpack.c.l.b16 %v211
    %v246 = vunpack.c.h.b16 %v211
    %v247 = vunpack.c.l.b16 %v212
    %v248 = vunpack.c.h.b16 %v212
    %v249 = vunpack.c.l.b16 %v213
    %v250 = vunpack.c.h.b16 %v213
    %v251 = vunpack.c.l.b16 %v214
    %v252 = vunpack.c.h.b16 %v214
    %v253 = vunpack.c.l.b16 %v215
    %v254 = vunpack.c.h.b16 %v215
    %v255 = vunpack.c.l.b16 %v216
    %v256 = vunpack.c.h.b16 %v216
    %v257 = vunpack.c.l.b16 %v217
    %v258 = vunpack.c.h.b16 %v217
    %v259 = vunpack.c.l.b16 %v218
    %v260 = vunpack.c.h.b16 %v218
    %v261 = vunpack.c.l.b16 %v219
    %v262 = vunpack.c.h.b16 %v219
    %v263 = vunpack.c.l.b16 %v220
    %v264 = vunpack.c.h.b16 %v220
    %v265 = vunpack.c.l.b16 %v221
    %v266 = vunpack.c.h.b16 %v221
    %v267 = vunpack.c.l.b16 %v222
    %v268 = vunpack.c.h.b16 %v222
    %v269 = vunpack.c.l.b16 %v223
    %v270 = vunpack.c.h.b16 %v223
    %v271 = vunpack.c.l.b16 %v224
    %v272 = vunpack.c.h.b16 %v224
    %v273 = vpack.c.b16 %v245, %v241
    %v274 = vpack.c.b16 %v246, %v242
    %v275 = vpack.c.b16 %v247, %v243
    %v276 = vpack.c.b16 %v248, %v244
    %v277 = vpack.c.b16 %v253, %v249
    %v278 = vpack.c.b16 %v254, %v250
    %v279 = vpack.c.b16 %v255, %v251
    %v280 = vpack.c.b16 %v256, %v252
    %v281 = vpack.c.b16 %v261, %v257
    %v282 = vpack.c.b16 %v262, %v258
    %v283 = vpack.c.b16 %v263, %v259
    %v284 = vpack.c.b16 %v264, %v260
    %v285 = vpack.c.b16 %v269, %v265
    %v286 = vpack.c.b16 %v270, %v266
    %v287 = vpack.c.b16 %v271, %v267
    %v288 = vpack.c.b16 %v272, %v268
    %vm305 = vcmask 523264
    %v307 = vsel %vm305, %v206, 0
    %v310 = vsel %vm305, %v207, 0
    %v313 = vsel %vm305, %v208, 0
    %315 = vmatprep.subr.bf16.mxu0 0
    %316 = vmatpush1.bf16.msra.mxu0 0
    %317 = vmatprep.subr.bf16.mxu0 0
    %318 = vmatpush1.bf16.msra.mxu0 0
    %319 = vmatprep.subr.bf16.mxu0 0
    %320 = vmatpush1.bf16.msra.mxu0 0
    %321 = vmatprep.subr.bf16.mxu0 0
    %322 = vmatpush1.bf16.msra.mxu0 0
    %323 = vmatprep.subr.bf16.mxu0 %v286
    %324 = vmatpush1.bf16.msra.mxu0 %v285
    %325 = vmatprep.subr.bf16.mxu0 %v282
    %326 = vmatpush1.bf16.msra.mxu0 %v281
    %327 = vmatprep.subr.bf16.mxu0 %v278
    %328 = vmatpush1.bf16.msra.mxu0 %v277
    %329 = vmatprep.subr.bf16.mxu0 %v274
    %330 = vmatpush1.bf16.msra.mxu0 %v273
    %331 = vmatprep.subr.bf16.mxu0 0
    %332 = vmatpush2.bf16.msra.mxu0 0
    %333 = vmatprep.subr.bf16.mxu0 0
    %334 = vmatpush2.bf16.msra.mxu0 0
    %335 = vmatprep.subr.bf16.mxu0 0
    %336 = vmatpush2.bf16.msra.mxu0 0
    %337 = vmatprep.subr.bf16.mxu0 0
    %338 = vmatpush2.bf16.msra.mxu0 0
    %339 = vmatprep.subr.bf16.mxu0 0
    %340 = vmatpush2.bf16.msra.mxu0 0
    %341 = vmatprep.subr.bf16.mxu0 0
    %342 = vmatpush2.bf16.msra.mxu0 0
    %343 = vmatprep.subr.bf16.mxu0 0
    %344 = vmatpush2.bf16.msra.mxu0 0
    %345 = vmatprep.subr.bf16.mxu0 0
    %346 = vmatpush2.bf16.msra.mxu0 0
    %347 = vmatprep.mubr.bf16.mxu0 0
    %348 = vmatmul.mubr.bf16.gmra.mxu0 %v307
    %v349 = vpop.f32.mrf.mxu0
    %v350 = vadd.f32 0.0, %v349
    %v351 = vpop.f32.mrf.mxu0
    %v352 = vadd.f32 0.0, %v351
    %v353 = vpop.f32.mrf.mxu0
    %v354 = vadd.f32 0.0, %v353
    %v355 = vpop.f32.mrf.mxu0
    %v356 = vadd.f32 0.0, %v355
    %357 = vmatprep.mubr.bf16.mxu0 0
    %358 = vmatmul.mubr.bf16.gmra.mxu0 %v310
    %v359 = vpop.f32.mrf.mxu0
    %v360 = vadd.f32 0.0, %v359
    %v361 = vpop.f32.mrf.mxu0
    %v362 = vadd.f32 0.0, %v361
    %v363 = vpop.f32.mrf.mxu0
    %v364 = vadd.f32 0.0, %v363
    %v365 = vpop.f32.mrf.mxu0
    %v366 = vadd.f32 0.0, %v365
    %367 = vmatprep.mubr.bf16.mxu0 0
    %368 = vmatmul.mubr.bf16.gmra.mxu0 %v313
    %v369 = vpop.f32.mrf.mxu0
    %v370 = vadd.f32 0.0, %v369
    %v371 = vpop.f32.mrf.mxu0
    %v372 = vadd.f32 0.0, %v371
    %v373 = vpop.f32.mrf.mxu0
    %v374 = vadd.f32 0.0, %v373
    %v375 = vpop.f32.mrf.mxu0
    %v376 = vadd.f32 0.0, %v375
    %377 = vdwg.mxu0
    %378 = vmatprep.subr.bf16.mxu0 0
    %379 = vmatpush1.bf16.msra.mxu0 0
    %380 = vmatprep.subr.bf16.mxu0 0
    %381 = vmatpush1.bf16.msra.mxu0 0
    %382 = vmatprep.subr.bf16.mxu0 0
    %383 = vmatpush1.bf16.msra.mxu0 0
    %384 = vmatprep.subr.bf16.mxu0 0
    %385 = vmatpush1.bf16.msra.mxu0 0
    %386 = vmatprep.subr.bf16.mxu0 %v288
    %387 = vmatpush1.bf16.msra.mxu0 %v287
    %388 = vmatprep.subr.bf16.mxu0 %v284
    %389 = vmatpush1.bf16.msra.mxu0 %v283
    %390 = vmatprep.subr.bf16.mxu0 %v280
    %391 = vmatpush1.bf16.msra.mxu0 %v279
    %392 = vmatprep.subr.bf16.mxu0 %v276
    %393 = vmatpush1.bf16.msra.mxu0 %v275
    %394 = vmatprep.subr.bf16.mxu0 0
    %395 = vmatpush2.bf16.msra.mxu0 0
    %396 = vmatprep.subr.bf16.mxu0 0
    %397 = vmatpush2.bf16.msra.mxu0 0
    %398 = vmatprep.subr.bf16.mxu0 0
    %399 = vmatpush2.bf16.msra.mxu0 0
    %400 = vmatprep.subr.bf16.mxu0 0
    %401 = vmatpush2.bf16.msra.mxu0 0
    %402 = vmatprep.subr.bf16.mxu0 0
    %403 = vmatpush2.bf16.msra.mxu0 0
    %404 = vmatprep.subr.bf16.mxu0 0
    %405 = vmatpush2.bf16.msra.mxu0 0
    %406 = vmatprep.subr.bf16.mxu0 0
    %407 = vmatpush2.bf16.msra.mxu0 0
    %408 = vmatprep.subr.bf16.mxu0 0
    %409 = vmatpush2.bf16.msra.mxu0 0
    %410 = vmatprep.mubr.bf16.mxu0 0
    %411 = vmatmul.mubr.bf16.gmra.mxu0 %v307
    %v412 = vpop.f32.mrf.mxu0
    %v413 = vadd.f32 0.0, %v412
    %v414 = vpop.f32.mrf.mxu0
    %v415 = vadd.f32 0.0, %v414
    %v416 = vpop.f32.mrf.mxu0
    %v417 = vadd.f32 0.0, %v416
    %v418 = vpop.f32.mrf.mxu0
    %v419 = vadd.f32 0.0, %v418
    %420 = vmatprep.mubr.bf16.mxu0 0
    %421 = vmatmul.mubr.bf16.gmra.mxu0 %v310
    %v422 = vpop.f32.mrf.mxu0
    %v423 = vadd.f32 0.0, %v422
    %v424 = vpop.f32.mrf.mxu0
    %v425 = vadd.f32 0.0, %v424
    %v426 = vpop.f32.mrf.mxu0
    %v427 = vadd.f32 0.0, %v426
    %v428 = vpop.f32.mrf.mxu0
    %v429 = vadd.f32 0.0, %v428
    %430 = vmatprep.mubr.bf16.mxu0 0
    %431 = vmatmul.mubr.bf16.gmra.mxu0 %v313
    %v432 = vpop.f32.mrf.mxu0
    %v433 = vadd.f32 0.0, %v432
    %v434 = vpop.f32.mrf.mxu0
    %v435 = vadd.f32 0.0, %v434
    %v436 = vpop.f32.mrf.mxu0
    %v437 = vadd.f32 0.0, %v436
    %v438 = vpop.f32.mrf.mxu0
    %v439 = vadd.f32 0.0, %v438
    %440 = vdwg.mxu0
    %v441 = vld [vmem:[#allocation5] sm:$0x3f]
    %v442 = vld [vmem:[#allocation5 + $0x8] sm:$0x3f]
    %v443 = vld [vmem:[#allocation5 + $0x10] sm:$0x3f]
    %v444 = vld [vmem:[#allocation5 + $0x18] sm:$0x3f]
    %v449 = vcombine.low %v441, %v442
    %v450 = vcombine.high %v441, %v442
    %v451 = vcombine.low %v443, %v444
    %v452 = vcombine.high %v443, %v444
    %v454 = vunpack.c.l.s4 1966171168
    %v455 = vunpack.c.0.s8 %v454
    %v456 = vlaneseq
    %v457 = vshrl.u32 %v456, 7
    %v458 = vsub.s32 %v455, %v457
    %v459 = vrot.slane %v449, %v458
    %v461 = vunpack.c.l.s4 1966171168
    %v462 = vunpack.c.0.s8 %v461
    %v463 = vlaneseq
    %v464 = vshrl.u32 %v463, 7
    %v465 = vsub.s32 %v462, %v464
    %v466 = vrot.slane %v450, %v465
    %v468 = vunpack.c.l.s4 1966171168
    %v469 = vunpack.c.0.s8 %v468
    %v470 = vlaneseq
    %v471 = vshrl.u32 %v470, 7
    %v472 = vsub.s32 %v469, %v471
    %v473 = vrot.slane %v451, %v472
    %v475 = vunpack.c.l.s4 1966171168
    %v476 = vunpack.c.0.s8 %v475
    %v477 = vlaneseq
    %v478 = vshrl.u32 %v477, 7
    %v479 = vsub.s32 %v476, %v478
    %v480 = vrot.slane %v452, %v479
    %v481 = vcombine.low %v459, %v473
    %v482 = vcombine.high %v459, %v473
    %v483 = vcombine.low %v466, %v480
    %v484 = vcombine.high %v466, %v480
    %v486 = vunpack.c.l.s4 1966171168
    %v487 = vunpack.c.0.s8 %v486
    %v488 = vlaneseq
    %v489 = vshrl.u32 %v488, 7
    %v490 = vsub.s32 %v487, %v489
    %v491 = vrot.slane %v481, %v490
    %v493 = vunpack.c.l.s4 1966171168
    %v494 = vunpack.c.0.s8 %v493
    %v495 = vlaneseq
    %v496 = vshrl.u32 %v495, 7
    %v497 = vsub.s32 %v494, %v496
    %v498 = vrot.slane %v483, %v497
    %v500 = vunpack.c.l.s4 1966171168
    %v501 = vunpack.c.0.s8 %v500
    %v502 = vlaneseq
    %v503 = vshrl.u32 %v502, 7
    %v504 = vsub.s32 %v501, %v503
    %v505 = vrot.slane %v482, %v504
    %v507 = vunpack.c.l.s4 1966171168
    %v508 = vunpack.c.0.s8 %v507
    %v509 = vlaneseq
    %v510 = vshrl.u32 %v509, 7
    %v511 = vsub.s32 %v508, %v510
    %v512 = vrot.slane %v484, %v511
    %v513 = vcombine.high %v491, %v491
    %v514 = vcombine.high %v505, %v505
    %v515 = vlaneseq
    %v516 = vshrl.u32 %v515, 7
    %v517 = vsub.s32 0, %v516
    %v518 = vrot.slane %v491, %v517
    %v519 = vlaneseq
    %v520 = vshrl.u32 %v519, 7
    %v521 = vsub.s32 1, %v520
    %v522 = vrot.slane %v491, %v521
    %v523 = vlaneseq
    %v524 = vshrl.u32 %v523, 7
    %v525 = vsub.s32 2, %v524
    %v526 = vrot.slane %v491, %v525
    %v527 = vlaneseq
    %v528 = vshrl.u32 %v527, 7
    %v529 = vsub.s32 3, %v528
    %v530 = vrot.slane %v491, %v529
    %v531 = vlaneseq
    %v532 = vshrl.u32 %v531, 7
    %v533 = vsub.s32 0, %v532
    %v534 = vrot.slane %v505, %v533
    %v535 = vlaneseq
    %v536 = vshrl.u32 %v535, 7
    %v537 = vsub.s32 1, %v536
    %v538 = vrot.slane %v505, %v537
    %v539 = vlaneseq
    %v540 = vshrl.u32 %v539, 7
    %v541 = vsub.s32 2, %v540
    %v542 = vrot.slane %v505, %v541
    %v543 = vlaneseq
    %v544 = vshrl.u32 %v543, 7
    %v545 = vsub.s32 3, %v544
    %v546 = vrot.slane %v505, %v545
    %v547 = vlaneseq
    %v548 = vshrl.u32 %v547, 7
    %v549 = vsub.s32 0, %v548
    %v550 = vrot.slane %v513, %v549
    %v551 = vlaneseq
    %v552 = vshrl.u32 %v551, 7
    %v553 = vsub.s32 1, %v552
    %v554 = vrot.slane %v513, %v553
    %v555 = vlaneseq
    %v556 = vshrl.u32 %v555, 7
    %v557 = vsub.s32 2, %v556
    %v558 = vrot.slane %v513, %v557
    %v559 = vlaneseq
    %v560 = vshrl.u32 %v559, 7
    %v561 = vsub.s32 3, %v560
    %v562 = vrot.slane %v513, %v561
    %v563 = vlaneseq
    %v564 = vshrl.u32 %v563, 7
    %v565 = vsub.s32 0, %v564
    %v566 = vrot.slane %v514, %v565
    %v567 = vlaneseq
    %v568 = vshrl.u32 %v567, 7
    %v569 = vsub.s32 1, %v568
    %v570 = vrot.slane %v514, %v569
    %v571 = vlaneseq
    %v572 = vshrl.u32 %v571, 7
    %v573 = vsub.s32 2, %v572
    %v574 = vrot.slane %v514, %v573
    %v575 = vlaneseq
    %v576 = vshrl.u32 %v575, 7
    %v577 = vsub.s32 3, %v576
    %v578 = vrot.slane %v514, %v577
    %v579 = vlaneseq
    %v580 = vshrl.u32 %v579, 7
    %v581 = vsub.s32 0, %v580
    %v582 = vrot.slane %v498, %v581
    %v583 = vlaneseq
    %v584 = vshrl.u32 %v583, 7
    %v585 = vsub.s32 1, %v584
    %v586 = vrot.slane %v498, %v585
    %v587 = vlaneseq
    %v588 = vshrl.u32 %v587, 7
    %v589 = vsub.s32 2, %v588
    %v590 = vrot.slane %v498, %v589
    %v591 = vlaneseq
    %v592 = vshrl.u32 %v591, 7
    %v593 = vsub.s32 3, %v592
    %v594 = vrot.slane %v498, %v593
    %v595 = vlaneseq
    %v596 = vshrl.u32 %v595, 7
    %v597 = vsub.s32 0, %v596
    %v598 = vrot.slane %v512, %v597
    %v599 = vlaneseq
    %v600 = vshrl.u32 %v599, 7
    %v601 = vsub.s32 1, %v600
    %v602 = vrot.slane %v512, %v601
    %v603 = vlaneseq
    %v604 = vshrl.u32 %v603, 7
    %v605 = vsub.s32 2, %v604
    %v606 = vrot.slane %v512, %v605
    %v607 = vlaneseq
    %v608 = vshrl.u32 %v607, 7
    %v609 = vsub.s32 3, %v608
    %v610 = vrot.slane %v512, %v609
    %v635 = vadd.f32 %v350, %v518
    %v636 = vadd.f32 %v352, %v522
    %v637 = vadd.f32 %v413, %v526
    %v638 = vadd.f32 %v415, %v530
    %v639 = vadd.f32 %v354, %v534
    %v640 = vadd.f32 %v356, %v538
    %v641 = vadd.f32 %v417, %v542
    %v642 = vadd.f32 %v419, %v546
    %v643 = vadd.f32 %v360, %v550
    %v644 = vadd.f32 %v362, %v554
    %v645 = vadd.f32 %v423, %v558
    %v646 = vadd.f32 %v425, %v562
    %v647 = vadd.f32 %v364, %v566
    %v648 = vadd.f32 %v366, %v570
    %v649 = vadd.f32 %v427, %v574
    %v650 = vadd.f32 %v429, %v578
    %v651 = vadd.f32 %v370, %v582
    %v652 = vadd.f32 %v372, %v586
    %v653 = vadd.f32 %v433, %v590
    %v654 = vadd.f32 %v435, %v594
    %v655 = vadd.f32 %v374, %v598
    %v656 = vadd.f32 %v376, %v602
    %v657 = vadd.f32 %v437, %v606
    %v658 = vadd.f32 %v439, %v610
    %v659 = vxor.u32 %v635, 2147483648
    %v660 = vxor.u32 %v636, 2147483648
    %v661 = vxor.u32 %v637, 2147483648
    %v662 = vxor.u32 %v638, 2147483648
    %v663 = vxor.u32 %v639, 2147483648
    %v664 = vxor.u32 %v640, 2147483648
    %v665 = vxor.u32 %v641, 2147483648
    %v666 = vxor.u32 %v642, 2147483648
    %v667 = vxor.u32 %v643, 2147483648
    %v668 = vxor.u32 %v644, 2147483648
    %v669 = vxor.u32 %v645, 2147483648
    %v670 = vxor.u32 %v646, 2147483648
    %v671 = vxor.u32 %v647, 2147483648
    %v672 = vxor.u32 %v648, 2147483648
    %v673 = vxor.u32 %v649, 2147483648
    %v674 = vxor.u32 %v650, 2147483648
    %v675 = vxor.u32 %v651, 2147483648
    %v676 = vxor.u32 %v652, 2147483648
    %v677 = vxor.u32 %v653, 2147483648
    %v678 = vxor.u32 %v654, 2147483648
    %v679 = vxor.u32 %v655, 2147483648
    %v680 = vxor.u32 %v656, 2147483648
    %v681 = vxor.u32 %v657, 2147483648
    %v682 = vxor.u32 %v658, 2147483648
    %v683 = vmul.f32 %v659, 1.442695
    %v684 = vpow.pop %v683
    %v685 = vmul.f32 %v660, 1.442695
    %v686 = vpow.pop %v685
    %v687 = vmul.f32 %v661, 1.442695
    %v688 = vpow.pop %v687
    %v689 = vmul.f32 %v662, 1.442695
    %v690 = vpow.pop %v689
    %v691 = vmul.f32 %v663, 1.442695
    %v692 = vpow.pop %v691
    %v693 = vmul.f32 %v664, 1.442695
    %v694 = vpow.pop %v693
    %v695 = vmul.f32 %v665, 1.442695
    %v696 = vpow.pop %v695
    %v697 = vmul.f32 %v666, 1.442695
    %v698 = vpow.pop %v697
    %v699 = vmul.f32 %v667, 1.442695
    %v700 = vpow.pop %v699
    %v701 = vmul.f32 %v668, 1.442695
    %v702 = vpow.pop %v701
    %v703 = vmul.f32 %v669, 1.442695
    %v704 = vpow.pop %v703
    %v705 = vmul.f32 %v670, 1.442695
    %v706 = vpow.pop %v705
    %v707 = vmul.f32 %v671, 1.442695
    %v708 = vpow.pop %v707
    %v709 = vmul.f32 %v672, 1.442695
    %v710 = vpow.pop %v709
    %v711 = vmul.f32 %v673, 1.442695
    %v712 = vpow.pop %v711
    %v713 = vmul.f32 %v674, 1.442695
    %v714 = vpow.pop %v713
    %v715 = vmul.f32 %v675, 1.442695
    %v716 = vpow.pop %v715
    %v717 = vmul.f32 %v676, 1.442695
    %v718 = vpow.pop %v717
    %v719 = vmul.f32 %v677, 1.442695
    %v720 = vpow.pop %v719
    %v721 = vmul.f32 %v678, 1.442695
    %v722 = vpow.pop %v721
    %v723 = vmul.f32 %v679, 1.442695
    %v724 = vpow.pop %v723
    %v725 = vmul.f32 %v680, 1.442695
    %v726 = vpow.pop %v725
    %v727 = vmul.f32 %v681, 1.442695
    %v728 = vpow.pop %v727
    %v729 = vmul.f32 %v682, 1.442695
    %v730 = vpow.pop %v729
    %v731 = vadd.f32 %v684, 1.0
    %v732 = vadd.f32 %v686, 1.0
    %v733 = vadd.f32 %v688, 1.0
    %v734 = vadd.f32 %v690, 1.0
    %v735 = vadd.f32 %v692, 1.0
    %v736 = vadd.f32 %v694, 1.0
    %v737 = vadd.f32 %v696, 1.0
    %v738 = vadd.f32 %v698, 1.0
    %v739 = vadd.f32 %v700, 1.0
    %v740 = vadd.f32 %v702, 1.0
    %v741 = vadd.f32 %v704, 1.0
    %v742 = vadd.f32 %v706, 1.0
    %v743 = vadd.f32 %v708, 1.0
    %v744 = vadd.f32 %v710, 1.0
    %v745 = vadd.f32 %v712, 1.0
    %v746 = vadd.f32 %v714, 1.0
    %v747 = vadd.f32 %v716, 1.0
    %v748 = vadd.f32 %v718, 1.0
    %v749 = vadd.f32 %v720, 1.0
    %v750 = vadd.f32 %v722, 1.0
    %v751 = vadd.f32 %v724, 1.0
    %v752 = vadd.f32 %v726, 1.0
    %v753 = vadd.f32 %v728, 1.0
    %v754 = vadd.f32 %v730, 1.0
    %v755 = vrcp.pop %v731
    %v756 = vmul.f32 1.0, %v755
    %v757 = vrcp.pop %v732
    %v758 = vmul.f32 1.0, %v757
    %v759 = vrcp.pop %v733
    %v760 = vmul.f32 1.0, %v759
    %v761 = vrcp.pop %v734
    %v762 = vmul.f32 1.0, %v761
    %v763 = vrcp.pop %v735
    %v764 = vmul.f32 1.0, %v763
    %v765 = vrcp.pop %v736
    %v766 = vmul.f32 1.0, %v765
    %v767 = vrcp.pop %v737
    %v768 = vmul.f32 1.0, %v767
    %v769 = vrcp.pop %v738
    %v770 = vmul.f32 1.0, %v769
    %v771 = vrcp.pop %v739
    %v772 = vmul.f32 1.0, %v771
    %v773 = vrcp.pop %v740
    %v774 = vmul.f32 1.0, %v773
    %v775 = vrcp.pop %v741
    %v776 = vmul.f32 1.0, %v775
    %v777 = vrcp.pop %v742
    %v778 = vmul.f32 1.0, %v777
    %v779 = vrcp.pop %v743
    %v780 = vmul.f32 1.0, %v779
    %v781 = vrcp.pop %v744
    %v782 = vmul.f32 1.0, %v781
    %v783 = vrcp.pop %v745
    %v784 = vmul.f32 1.0, %v783
    %v785 = vrcp.pop %v746
    %v786 = vmul.f32 1.0, %v785
    %v787 = vrcp.pop %v747
    %v788 = vmul.f32 1.0, %v787
    %v789 = vrcp.pop %v748
    %v790 = vmul.f32 1.0, %v789
    %v791 = vrcp.pop %v749
    %v792 = vmul.f32 1.0, %v791
    %v793 = vrcp.pop %v750
    %v794 = vmul.f32 1.0, %v793
    %v795 = vrcp.pop %v751
    %v796 = vmul.f32 1.0, %v795
    %v797 = vrcp.pop %v752
    %v798 = vmul.f32 1.0, %v797
    %v799 = vrcp.pop %v753
    %v800 = vmul.f32 1.0, %v799
    %v801 = vrcp.pop %v754
    %v802 = vmul.f32 1.0, %v801
    %v803 = vmul.f32 %v635, %v756
    %v804 = vmul.f32 %v636, %v758
    %v805 = vmul.f32 %v637, %v760
    %v806 = vmul.f32 %v638, %v762
    %v807 = vmul.f32 %v639, %v764
    %v808 = vmul.f32 %v640, %v766
    %v809 = vmul.f32 %v641, %v768
    %v810 = vmul.f32 %v642, %v770
    %v811 = vmul.f32 %v643, %v772
    %v812 = vmul.f32 %v644, %v774
    %v813 = vmul.f32 %v645, %v776
    %v814 = vmul.f32 %v646, %v778
    %v815 = vmul.f32 %v647, %v780
    %v816 = vmul.f32 %v648, %v782
    %v817 = vmul.f32 %v649, %v784
    %v818 = vmul.f32 %v650, %v786
    %v819 = vmul.f32 %v651, %v788
    %v820 = vmul.f32 %v652, %v790
    %v821 = vmul.f32 %v653, %v792
    %v822 = vmul.f32 %v654, %v794
    %v823 = vmul.f32 %v655, %v796
    %v824 = vmul.f32 %v656, %v798
    %v825 = vmul.f32 %v657, %v800
    %v826 = vmul.f32 %v658, %v802
    %v827 = vpack.c.bf16 %v807, %v803
    %v828 = vpack.c.bf16 %v808, %v804
    %v829 = vpack.c.bf16 %v809, %v805
    %v830 = vpack.c.bf16 %v810, %v806
    %v831 = vpack.c.bf16 %v815, %v811
    %v832 = vpack.c.bf16 %v816, %v812
    %v833 = vpack.c.bf16 %v817, %v813
    %v834 = vpack.c.bf16 %v818, %v814
    %v835 = vpack.c.bf16 %v823, %v819
    %v836 = vpack.c.bf16 %v824, %v820
    %v837 = vpack.c.bf16 %v825, %v821
    %v838 = vpack.c.bf16 %v826, %v822
    %v839 = vld [vmem:[#allocation8] sm:$0xff]
    %v840 = vld [vmem:[#allocation8 + $0x8] sm:$0xff]
    %v841 = vld [vmem:[#allocation8 + $0x10] sm:$0xff]
    %v842 = vld [vmem:[#allocation8 + $0x18] sm:$0xff]
    %v843 = vld [vmem:[#allocation8 + $0x20] sm:$0xff]
    %v844 = vld [vmem:[#allocation8 + $0x28] sm:$0xff]
    %v845 = vld [vmem:[#allocation8 + $0x30] sm:$0xff]
    %v846 = vld [vmem:[#allocation8 + $0x38] sm:$0xff]
    %v847 = vld [vmem:[#allocation8 + $0x40] sm:$0xff]
    %v848 = vld [vmem:[#allocation8 + $0x48] sm:$0xff]
    %v849 = vld [vmem:[#allocation8 + $0x50] sm:$0xff]
    %v850 = vld [vmem:[#allocation8 + $0x58] sm:$0xff]
    %v851 = vld [vmem:[#allocation8 + $0x60] sm:$0xff]
    %v852 = vld [vmem:[#allocation8 + $0x68] sm:$0xff]
    %v853 = vld [vmem:[#allocation8 + $0x70] sm:$0xff]
    %v854 = vld [vmem:[#allocation8 + $0x78] sm:$0xff]
    %v855 = vld [vmem:[#allocation8 + $0x80] sm:$0xff]
    %v856 = vld [vmem:[#allocation8 + $0x88] sm:$0xff]
    %v857 = vld [vmem:[#allocation8 + $0x90] sm:$0xff]
    %v858 = vld [vmem:[#allocation8 + $0x98] sm:$0xff]
    %v859 = vld [vmem:[#allocation8 + $0xa0] sm:$0xff]
    %v860 = vld [vmem:[#allocation8 + $0xa8] sm:$0xff]
    %v861 = vld [vmem:[#allocation8 + $0xb0] sm:$0xff]
    %v862 = vld [vmem:[#allocation8 + $0xb8] sm:$0xff]
    %v863 = vld [vmem:[#allocation8 + $0xc0] sm:$0xff]
    %v864 = vld [vmem:[#allocation8 + $0xc8] sm:$0xff]
    %v865 = vld [vmem:[#allocation8 + $0xd0] sm:$0xff]
    %v866 = vld [vmem:[#allocation8 + $0xd8] sm:$0xff]
    %v867 = vld [vmem:[#allocation8 + $0xe0] sm:$0xff]
    %v868 = vld [vmem:[#allocation8 + $0xe8] sm:$0xff]
    %v869 = vld [vmem:[#allocation8 + $0xf0] sm:$0xff]
    %v870 = vld [vmem:[#allocation8 + $0xf8] sm:$0xff]
    %v871 = vld [vmem:[#allocation8 + $0x100] sm:$0xff]
    %v872 = vld [vmem:[#allocation8 + $0x108] sm:$0xff]
    %v873 = vld [vmem:[#allocation8 + $0x110] sm:$0xff]
    %v874 = vld [vmem:[#allocation8 + $0x118] sm:$0xff]
    %v875 = vld [vmem:[#allocation8 + $0x120] sm:$0xff]
    %v876 = vld [vmem:[#allocation8 + $0x128] sm:$0xff]
    %v877 = vld [vmem:[#allocation8 + $0x130] sm:$0xff]
    %v878 = vld [vmem:[#allocation8 + $0x138] sm:$0xff]
    %v879 = vld [vmem:[#allocation8 + $0x140] sm:$0xff]
    %v880 = vld [vmem:[#allocation8 + $0x148] sm:$0xff]
    %v881 = vld [vmem:[#allocation8 + $0x150] sm:$0xff]
    %v882 = vld [vmem:[#allocation8 + $0x158] sm:$0xff]
    %v883 = vld [vmem:[#allocation8 + $0x160] sm:$0xff]
    %v884 = vld [vmem:[#allocation8 + $0x168] sm:$0xff]
    %v885 = vld [vmem:[#allocation8 + $0x170] sm:$0xff]
    %v886 = vld [vmem:[#allocation8 + $0x178] sm:$0xff]
    %v887 = vld [vmem:[#allocation8 + $0x180] sm:$0xff]
    %v888 = vld [vmem:[#allocation8 + $0x188] sm:$0xff]
    %v889 = vld [vmem:[#allocation8 + $0x190] sm:$0xff]
    %v890 = vld [vmem:[#allocation8 + $0x198] sm:$0xff]
    %v891 = vld [vmem:[#allocation8 + $0x1a0] sm:$0xff]
    %v892 = vld [vmem:[#allocation8 + $0x1a8] sm:$0xff]
    %v893 = vld [vmem:[#allocation8 + $0x1b0] sm:$0xff]
    %v894 = vld [vmem:[#allocation8 + $0x1b8] sm:$0xff]
    %v895 = vld [vmem:[#allocation8 + $0x1c0] sm:$0xff]
    %v896 = vld [vmem:[#allocation8 + $0x1c8] sm:$0xff]
    %v897 = vld [vmem:[#allocation8 + $0x1d0] sm:$0xff]
    %v898 = vld [vmem:[#allocation8 + $0x1d8] sm:$0xff]
    %v899 = vld [vmem:[#allocation8 + $0x1e0] sm:$0xff]
    %v900 = vld [vmem:[#allocation8 + $0x1e8] sm:$0xff]
    %v901 = vld [vmem:[#allocation8 + $0x1f0] sm:$0xff]
    %v902 = vld [vmem:[#allocation8 + $0x1f8] sm:$0xff]
    %v903 = vld [vmem:[#allocation8 + $0x200] sm:$0xff]
    %v904 = vld [vmem:[#allocation8 + $0x208] sm:$0xff]
    %v905 = vld [vmem:[#allocation8 + $0x210] sm:$0xff]
    %v906 = vld [vmem:[#allocation8 + $0x218] sm:$0xff]
    %v907 = vld [vmem:[#allocation8 + $0x220] sm:$0xff]
    %v908 = vld [vmem:[#allocation8 + $0x228] sm:$0xff]
    %v909 = vld [vmem:[#allocation8 + $0x230] sm:$0xff]
    %v910 = vld [vmem:[#allocation8 + $0x238] sm:$0xff]
    %v911 = vld [vmem:[#allocation8 + $0x240] sm:$0xff]
    %v912 = vld [vmem:[#allocation8 + $0x248] sm:$0xff]
    %v913 = vld [vmem:[#allocation8 + $0x250] sm:$0xff]
    %v914 = vld [vmem:[#allocation8 + $0x258] sm:$0xff]
    %v915 = vld [vmem:[#allocation8 + $0x260] sm:$0xff]
    %v916 = vld [vmem:[#allocation8 + $0x268] sm:$0xff]
    %v917 = vld [vmem:[#allocation8 + $0x270] sm:$0xff]
    %v918 = vld [vmem:[#allocation8 + $0x278] sm:$0xff]
    %v919 = vld [vmem:[#allocation8 + $0x280] sm:$0xff]
    %v920 = vld [vmem:[#allocation8 + $0x288] sm:$0xff]
    %v921 = vld [vmem:[#allocation8 + $0x290] sm:$0xff]
    %v922 = vld [vmem:[#allocation8 + $0x298] sm:$0xff]
    %v923 = vld [vmem:[#allocation8 + $0x2a0] sm:$0xff]
    %v924 = vld [vmem:[#allocation8 + $0x2a8] sm:$0xff]
    %v925 = vld [vmem:[#allocation8 + $0x2b0] sm:$0xff]
    %v926 = vld [vmem:[#allocation8 + $0x2b8] sm:$0xff]
    %v927 = vld [vmem:[#allocation8 + $0x2c0] sm:$0xff]
    %v928 = vld [vmem:[#allocation8 + $0x2c8] sm:$0xff]
    %v929 = vld [vmem:[#allocation8 + $0x2d0] sm:$0xff]
    %v930 = vld [vmem:[#allocation8 + $0x2d8] sm:$0xff]
    %v931 = vld [vmem:[#allocation8 + $0x2e0] sm:$0xff]
    %v932 = vld [vmem:[#allocation8 + $0x2e8] sm:$0xff]
    %v933 = vld [vmem:[#allocation8 + $0x2f0] sm:$0xff]
    %v934 = vld [vmem:[#allocation8 + $0x2f8] sm:$0xff]
    %v935 = vld [vmem:[#allocation8 + $0x300] sm:$0xff]
    %v936 = vld [vmem:[#allocation8 + $0x308] sm:$0xff]
    %v937 = vld [vmem:[#allocation8 + $0x310] sm:$0xff]
    %v938 = vld [vmem:[#allocation8 + $0x318] sm:$0xff]
    %v939 = vld [vmem:[#allocation8 + $0x320] sm:$0xff]
    %v940 = vld [vmem:[#allocation8 + $0x328] sm:$0xff]
    %v941 = vld [vmem:[#allocation8 + $0x330] sm:$0xff]
    %v942 = vld [vmem:[#allocation8 + $0x338] sm:$0xff]
    %v943 = vld [vmem:[#allocation8 + $0x340] sm:$0xff]
    %v944 = vld [vmem:[#allocation8 + $0x348] sm:$0xff]
    %v945 = vld [vmem:[#allocation8 + $0x350] sm:$0xff]
    %v946 = vld [vmem:[#allocation8 + $0x358] sm:$0xff]
    %v947 = vld [vmem:[#allocation8 + $0x360] sm:$0xff]
    %v948 = vld [vmem:[#allocation8 + $0x368] sm:$0xff]
    %v949 = vld [vmem:[#allocation8 + $0x370] sm:$0xff]
    %v950 = vld [vmem:[#allocation8 + $0x378] sm:$0xff]
    %v951 = vld [vmem:[#allocation8 + $0x380] sm:$0xff]
    %v952 = vld [vmem:[#allocation8 + $0x388] sm:$0xff]
    %v953 = vld [vmem:[#allocation8 + $0x390] sm:$0xff]
    %v954 = vld [vmem:[#allocation8 + $0x398] sm:$0xff]
    %v955 = vld [vmem:[#allocation8 + $0x3a0] sm:$0xff]
    %v956 = vld [vmem:[#allocation8 + $0x3a8] sm:$0xff]
    %v957 = vld [vmem:[#allocation8 + $0x3b0] sm:$0xff]
    %v958 = vld [vmem:[#allocation8 + $0x3b8] sm:$0xff]
    %v959 = vld [vmem:[#allocation8 + $0x3c0] sm:$0xff]
    %v960 = vld [vmem:[#allocation8 + $0x3c8] sm:$0xff]
    %v961 = vld [vmem:[#allocation8 + $0x3d0] sm:$0xff]
    %v962 = vld [vmem:[#allocation8 + $0x3d8] sm:$0xff]
    %v963 = vld [vmem:[#allocation8 + $0x3e0] sm:$0xff]
    %v964 = vld [vmem:[#allocation8 + $0x3e8] sm:$0xff]
    %v965 = vld [vmem:[#allocation8 + $0x3f0] sm:$0xff]
    %v966 = vld [vmem:[#allocation8 + $0x3f8] sm:$0xff]
    %v967 = vld [vmem:[%s5] sm:$0xf]
    %v969 = vlaneseq
    %v970 = vshrl.u32 %v969, 7
    %v971 = vsub.s32 0, %v970
    %v972 = vrot.slane %v967, %v971
    %v973 = vlaneseq
    %v974 = vshrl.u32 %v973, 7
    %v975 = vsub.s32 1, %v974
    %v976 = vrot.slane %v967, %v975
    %v977 = vlaneseq
    %v978 = vshrl.u32 %v977, 7
    %v979 = vsub.s32 2, %v978
    %v980 = vrot.slane %v967, %v979
    %v981 = vlaneseq
    %v982 = vshrl.u32 %v981, 7
    %v983 = vsub.s32 3, %v982
    %v984 = vrot.slane %v967, %v983
    %v1117 = vunpack.c.l.b16 %v839
    %v1118 = vunpack.c.h.b16 %v839
    %v1119 = vunpack.c.l.b16 %v840
    %v1120 = vunpack.c.h.b16 %v840
    %v1121 = vunpack.c.l.b16 %v841
    %v1122 = vunpack.c.h.b16 %v841
    %v1123 = vunpack.c.l.b16 %v842
    %v1124 = vunpack.c.h.b16 %v842
    %v1125 = vunpack.c.l.b16 %v843
    %v1126 = vunpack.c.h.b16 %v843
    %v1127 = vunpack.c.l.b16 %v844
    %v1128 = vunpack.c.h.b16 %v844
    %v1129 = vunpack.c.l.b16 %v845
    %v1130 = vunpack.c.h.b16 %v845
    %v1131 = vunpack.c.l.b16 %v846
    %v1132 = vunpack.c.h.b16 %v846
    %v1133 = vunpack.c.l.b16 %v847
    %v1134 = vunpack.c.h.b16 %v847
    %v1135 = vunpack.c.l.b16 %v848
    %v1136 = vunpack.c.h.b16 %v848
    %v1137 = vunpack.c.l.b16 %v849
    %v1138 = vunpack.c.h.b16 %v849
    %v1139 = vunpack.c.l.b16 %v850
    %v1140 = vunpack.c.h.b16 %v850
    %v1141 = vunpack.c.l.b16 %v851
    %v1142 = vunpack.c.h.b16 %v851
    %v1143 = vunpack.c.l.b16 %v852
    %v1144 = vunpack.c.h.b16 %v852
    %v1145 = vunpack.c.l.b16 %v853
    %v1146 = vunpack.c.h.b16 %v853
    %v1147 = vunpack.c.l.b16 %v854
    %v1148 = vunpack.c.h.b16 %v854
    %v1149 = vunpack.c.l.b16 %v855
    %v1150 = vunpack.c.h.b16 %v855
    %v1151 = vunpack.c.l.b16 %v856
    %v1152 = vunpack.c.h.b16 %v856
    %v1153 = vunpack.c.l.b16 %v857
    %v1154 = vunpack.c.h.b16 %v857
    %v1155 = vunpack.c.l.b16 %v858
    %v1156 = vunpack.c.h.b16 %v858
    %v1157 = vunpack.c.l.b16 %v859
    %v1158 = vunpack.c.h.b16 %v859
    %v1159 = vunpack.c.l.b16 %v860
    %v1160 = vunpack.c.h.b16 %v860
    %v1161 = vunpack.c.l.b16 %v861
    %v1162 = vunpack.c.h.b16 %v861
    %v1163 = vunpack.c.l.b16 %v862
    %v1164 = vunpack.c.h.b16 %v862
    %v1165 = vunpack.c.l.b16 %v863
    %v1166 = vunpack.c.h.b16 %v863
    %v1167 = vunpack.c.l.b16 %v864
    %v1168 = vunpack.c.h.b16 %v864
    %v1169 = vunpack.c.l.b16 %v865
    %v1170 = vunpack.c.h.b16 %v865
    %v1171 = vunpack.c.l.b16 %v866
    %v1172 = vunpack.c.h.b16 %v866
    %v1173 = vunpack.c.l.b16 %v867
    %v1174 = vunpack.c.h.b16 %v867
    %v1175 = vunpack.c.l.b16 %v868
    %v1176 = vunpack.c.h.b16 %v868
    %v1177 = vunpack.c.l.b16 %v869
    %v1178 = vunpack.c.h.b16 %v869
    %v1179 = vunpack.c.l.b16 %v870
    %v1180 = vunpack.c.h.b16 %v870
    %v1181 = vunpack.c.l.b16 %v871
    %v1182 = vunpack.c.h.b16 %v871
    %v1183 = vunpack.c.l.b16 %v872
    %v1184 = vunpack.c.h.b16 %v872
    %v1185 = vunpack.c.l.b16 %v873
    %v1186 = vunpack.c.h.b16 %v873
    %v1187 = vunpack.c.l.b16 %v874
    %v1188 = vunpack.c.h.b16 %v874
    %v1189 = vunpack.c.l.b16 %v875
    %v1190 = vunpack.c.h.b16 %v875
    %v1191 = vunpack.c.l.b16 %v876
    %v1192 = vunpack.c.h.b16 %v876
    %v1193 = vunpack.c.l.b16 %v877
    %v1194 = vunpack.c.h.b16 %v877
    %v1195 = vunpack.c.l.b16 %v878
    %v1196 = vunpack.c.h.b16 %v878
    %v1197 = vunpack.c.l.b16 %v879
    %v1198 = vunpack.c.h.b16 %v879
    %v1199 = vunpack.c.l.b16 %v880
    %v1200 = vunpack.c.h.b16 %v880
    %v1201 = vunpack.c.l.b16 %v881
    %v1202 = vunpack.c.h.b16 %v881
    %v1203 = vunpack.c.l.b16 %v882
    %v1204 = vunpack.c.h.b16 %v882
    %v1205 = vunpack.c.l.b16 %v883
    %v1206 = vunpack.c.h.b16 %v883
    %v1207 = vunpack.c.l.b16 %v884
    %v1208 = vunpack.c.h.b16 %v884
    %v1209 = vunpack.c.l.b16 %v885
    %v1210 = vunpack.c.h.b16 %v885
    %v1211 = vunpack.c.l.b16 %v886
    %v1212 = vunpack.c.h.b16 %v886
    %v1213 = vunpack.c.l.b16 %v887
    %v1214 = vunpack.c.h.b16 %v887
    %v1215 = vunpack.c.l.b16 %v888
    %v1216 = vunpack.c.h.b16 %v888
    %v1217 = vunpack.c.l.b16 %v889
    %v1218 = vunpack.c.h.b16 %v889
    %v1219 = vunpack.c.l.b16 %v890
    %v1220 = vunpack.c.h.b16 %v890
    %v1221 = vunpack.c.l.b16 %v891
    %v1222 = vunpack.c.h.b16 %v891
    %v1223 = vunpack.c.l.b16 %v892
    %v1224 = vunpack.c.h.b16 %v892
    %v1225 = vunpack.c.l.b16 %v893
    %v1226 = vunpack.c.h.b16 %v893
    %v1227 = vunpack.c.l.b16 %v894
    %v1228 = vunpack.c.h.b16 %v894
    %v1229 = vunpack.c.l.b16 %v895
    %v1230 = vunpack.c.h.b16 %v895
    %v1231 = vunpack.c.l.b16 %v896
    %v1232 = vunpack.c.h.b16 %v896
    %v1233 = vunpack.c.l.b16 %v897
    %v1234 = vunpack.c.h.b16 %v897
    %v1235 = vunpack.c.l.b16 %v898
    %v1236 = vunpack.c.h.b16 %v898
    %v1237 = vunpack.c.l.b16 %v899
    %v1238 = vunpack.c.h.b16 %v899
    %v1239 = vunpack.c.l.b16 %v900
    %v1240 = vunpack.c.h.b16 %v900
    %v1241 = vunpack.c.l.b16 %v901
    %v1242 = vunpack.c.h.b16 %v901
    %v1243 = vunpack.c.l.b16 %v902
    %v1244 = vunpack.c.h.b16 %v902
    %v1245 = vunpack.c.l.b16 %v903
    %v1246 = vunpack.c.h.b16 %v903
    %v1247 = vunpack.c.l.b16 %v904
    %v1248 = vunpack.c.h.b16 %v904
    %v1249 = vunpack.c.l.b16 %v905
    %v1250 = vunpack.c.h.b16 %v905
    %v1251 = vunpack.c.l.b16 %v906
    %v1252 = vunpack.c.h.b16 %v906
    %v1253 = vunpack.c.l.b16 %v907
    %v1254 = vunpack.c.h.b16 %v907
    %v1255 = vunpack.c.l.b16 %v908
    %v1256 = vunpack.c.h.b16 %v908
    %v1257 = vunpack.c.l.b16 %v909
    %v1258 = vunpack.c.h.b16 %v909
    %v1259 = vunpack.c.l.b16 %v910
    %v1260 = vunpack.c.h.b16 %v910
    %v1261 = vunpack.c.l.b16 %v911
    %v1262 = vunpack.c.h.b16 %v911
    %v1263 = vunpack.c.l.b16 %v912
    %v1264 = vunpack.c.h.b16 %v912
    %v1265 = vunpack.c.l.b16 %v913
    %v1266 = vunpack.c.h.b16 %v913
    %v1267 = vunpack.c.l.b16 %v914
    %v1268 = vunpack.c.h.b16 %v914
    %v1269 = vunpack.c.l.b16 %v915
    %v1270 = vunpack.c.h.b16 %v915
    %v1271 = vunpack.c.l.b16 %v916
    %v1272 = vunpack.c.h.b16 %v916
    %v1273 = vunpack.c.l.b16 %v917
    %v1274 = vunpack.c.h.b16 %v917
    %v1275 = vunpack.c.l.b16 %v918
    %v1276 = vunpack.c.h.b16 %v918
    %v1277 = vunpack.c.l.b16 %v919
    %v1278 = vunpack.c.h.b16 %v919
    %v1279 = vunpack.c.l.b16 %v920
    %v1280 = vunpack.c.h.b16 %v920
    %v1281 = vunpack.c.l.b16 %v921
    %v1282 = vunpack.c.h.b16 %v921
    %v1283 = vunpack.c.l.b16 %v922
    %v1284 = vunpack.c.h.b16 %v922
    %v1285 = vunpack.c.l.b16 %v923
    %v1286 = vunpack.c.h.b16 %v923
    %v1287 = vunpack.c.l.b16 %v924
    %v1288 = vunpack.c.h.b16 %v924
    %v1289 = vunpack.c.l.b16 %v925
    %v1290 = vunpack.c.h.b16 %v925
    %v1291 = vunpack.c.l.b16 %v926
    %v1292 = vunpack.c.h.b16 %v926
    %v1293 = vunpack.c.l.b16 %v927
    %v1294 = vunpack.c.h.b16 %v927
    %v1295 = vunpack.c.l.b16 %v928
    %v1296 = vunpack.c.h.b16 %v928
    %v1297 = vunpack.c.l.b16 %v929
    %v1298 = vunpack.c.h.b16 %v929
    %v1299 = vunpack.c.l.b16 %v930
    %v1300 = vunpack.c.h.b16 %v930
    %v1301 = vunpack.c.l.b16 %v931
    %v1302 = vunpack.c.h.b16 %v931
    %v1303 = vunpack.c.l.b16 %v932
    %v1304 = vunpack.c.h.b16 %v932
    %v1305 = vunpack.c.l.b16 %v933
    %v1306 = vunpack.c.h.b16 %v933
    %v1307 = vunpack.c.l.b16 %v934
    %v1308 = vunpack.c.h.b16 %v934
    %v1309 = vunpack.c.l.b16 %v935
    %v1310 = vunpack.c.h.b16 %v935
    %v1311 = vunpack.c.l.b16 %v936
    %v1312 = vunpack.c.h.b16 %v936
    %v1313 = vunpack.c.l.b16 %v937
    %v1314 = vunpack.c.h.b16 %v937
    %v1315 = vunpack.c.l.b16 %v938
    %v1316 = vunpack.c.h.b16 %v938
    %v1317 = vunpack.c.l.b16 %v939
    %v1318 = vunpack.c.h.b16 %v939
    %v1319 = vunpack.c.l.b16 %v940
    %v1320 = vunpack.c.h.b16 %v940
    %v1321 = vunpack.c.l.b16 %v941
    %v1322 = vunpack.c.h.b16 %v941
    %v1323 = vunpack.c.l.b16 %v942
    %v1324 = vunpack.c.h.b16 %v942
    %v1325 = vunpack.c.l.b16 %v943
    %v1326 = vunpack.c.h.b16 %v943
    %v1327 = vunpack.c.l.b16 %v944
    %v1328 = vunpack.c.h.b16 %v944
    %v1329 = vunpack.c.l.b16 %v945
    %v1330 = vunpack.c.h.b16 %v945
    %v1331 = vunpack.c.l.b16 %v946
    %v1332 = vunpack.c.h.b16 %v946
    %v1333 = vunpack.c.l.b16 %v947
    %v1334 = vunpack.c.h.b16 %v947
    %v1335 = vunpack.c.l.b16 %v948
    %v1336 = vunpack.c.h.b16 %v948
    %v1337 = vunpack.c.l.b16 %v949
    %v1338 = vunpack.c.h.b16 %v949
    %v1339 = vunpack.c.l.b16 %v950
    %v1340 = vunpack.c.h.b16 %v950
    %v1341 = vunpack.c.l.b16 %v951
    %v1342 = vunpack.c.h.b16 %v951
    %v1343 = vunpack.c.l.b16 %v952
    %v1344 = vunpack.c.h.b16 %v952
    %v1345 = vunpack.c.l.b16 %v953
    %v1346 = vunpack.c.h.b16 %v953
    %v1347 = vunpack.c.l.b16 %v954
    %v1348 = vunpack.c.h.b16 %v954
    %v1349 = vunpack.c.l.b16 %v955
    %v1350 = vunpack.c.h.b16 %v955
    %v1351 = vunpack.c.l.b16 %v956
    %v1352 = vunpack.c.h.b16 %v956
    %v1353 = vunpack.c.l.b16 %v957
    %v1354 = vunpack.c.h.b16 %v957
    %v1355 = vunpack.c.l.b16 %v958
    %v1356 = vunpack.c.h.b16 %v958
    %v1357 = vunpack.c.l.b16 %v959
    %v1358 = vunpack.c.h.b16 %v959
    %v1359 = vunpack.c.l.b16 %v960
    %v1360 = vunpack.c.h.b16 %v960
    %v1361 = vunpack.c.l.b16 %v961
    %v1362 = vunpack.c.h.b16 %v961
    %v1363 = vunpack.c.l.b16 %v962
    %v1364 = vunpack.c.h.b16 %v962
    %v1365 = vunpack.c.l.b16 %v963
    %v1366 = vunpack.c.h.b16 %v963
    %v1367 = vunpack.c.l.b16 %v964
    %v1368 = vunpack.c.h.b16 %v964
    %v1369 = vunpack.c.l.b16 %v965
    %v1370 = vunpack.c.h.b16 %v965
    %v1371 = vunpack.c.l.b16 %v966
    %v1372 = vunpack.c.h.b16 %v966
    %v1373 = vpack.c.b16 %v1121, %v1117
    %v1374 = vpack.c.b16 %v1122, %v1118
    %v1375 = vpack.c.b16 %v1123, %v1119
    %v1376 = vpack.c.b16 %v1124, %v1120
    %v1377 = vpack.c.b16 %v1129, %v1125
    %v1378 = vpack.c.b16 %v1130, %v1126
    %v1379 = vpack.c.b16 %v1131, %v1127
    %v1380 = vpack.c.b16 %v1132, %v1128
    %v1381 = vpack.c.b16 %v1137, %v1133
    %v1382 = vpack.c.b16 %v1138, %v1134
    %v1383 = vpack.c.b16 %v1139, %v1135
    %v1384 = vpack.c.b16 %v1140, %v1136
    %v1385 = vpack.c.b16 %v1145, %v1141
    %v1386 = vpack.c.b16 %v1146, %v1142
    %v1387 = vpack.c.b16 %v1147, %v1143
    %v1388 = vpack.c.b16 %v1148, %v1144
    %v1389 = vpack.c.b16 %v1153, %v1149
    %v1390 = vpack.c.b16 %v1154, %v1150
    %v1391 = vpack.c.b16 %v1155, %v1151
    %v1392 = vpack.c.b16 %v1156, %v1152
    %v1393 = vpack.c.b16 %v1161, %v1157
    %v1394 = vpack.c.b16 %v1162, %v1158
    %v1395 = vpack.c.b16 %v1163, %v1159
    %v1396 = vpack.c.b16 %v1164, %v1160
    %v1397 = vpack.c.b16 %v1169, %v1165
    %v1398 = vpack.c.b16 %v1170, %v1166
    %v1399 = vpack.c.b16 %v1171, %v1167
    %v1400 = vpack.c.b16 %v1172, %v1168
    %v1401 = vpack.c.b16 %v1177, %v1173
    %v1402 = vpack.c.b16 %v1178, %v1174
    %v1403 = vpack.c.b16 %v1179, %v1175
    %v1404 = vpack.c.b16 %v1180, %v1176
    %v1405 = vpack.c.b16 %v1185, %v1181
    %v1406 = vpack.c.b16 %v1186, %v1182
    %v1407 = vpack.c.b16 %v1187, %v1183
    %v1408 = vpack.c.b16 %v1188, %v1184
    %v1409 = vpack.c.b16 %v1193, %v1189
    %v1410 = vpack.c.b16 %v1194, %v1190
    %v1411 = vpack.c.b16 %v1195, %v1191
    %v1412 = vpack.c.b16 %v1196, %v1192
    %v1413 = vpack.c.b16 %v1201, %v1197
    %v1414 = vpack.c.b16 %v1202, %v1198
    %v1415 = vpack.c.b16 %v1203, %v1199
    %v1416 = vpack.c.b16 %v1204, %v1200
    %v1417 = vpack.c.b16 %v1209, %v1205
    %v1418 = vpack.c.b16 %v1210, %v1206
    %v1419 = vpack.c.b16 %v1211, %v1207
    %v1420 = vpack.c.b16 %v1212, %v1208
    %v1421 = vpack.c.b16 %v1217, %v1213
    %v1422 = vpack.c.b16 %v1218, %v1214
    %v1423 = vpack.c.b16 %v1219, %v1215
    %v1424 = vpack.c.b16 %v1220, %v1216
    %v1425 = vpack.c.b16 %v1225, %v1221
    %v1426 = vpack.c.b16 %v1226, %v1222
    %v1427 = vpack.c.b16 %v1227, %v1223
    %v1428 = vpack.c.b16 %v1228, %v1224
    %v1429 = vpack.c.b16 %v1233, %v1229
    %v1430 = vpack.c.b16 %v1234, %v1230
    %v1431 = vpack.c.b16 %v1235, %v1231
    %v1432 = vpack.c.b16 %v1236, %v1232
    %v1433 = vpack.c.b16 %v1241, %v1237
    %v1434 = vpack.c.b16 %v1242, %v1238
    %v1435 = vpack.c.b16 %v1243, %v1239
    %v1436 = vpack.c.b16 %v1244, %v1240
    %v1437 = vpack.c.b16 %v1249, %v1245
    %v1438 = vpack.c.b16 %v1250, %v1246
    %v1439 = vpack.c.b16 %v1251, %v1247
    %v1440 = vpack.c.b16 %v1252, %v1248
    %v1441 = vpack.c.b16 %v1257, %v1253
    %v1442 = vpack.c.b16 %v1258, %v1254
    %v1443 = vpack.c.b16 %v1259, %v1255
    %v1444 = vpack.c.b16 %v1260, %v1256
    %v1445 = vpack.c.b16 %v1265, %v1261
    %v1446 = vpack.c.b16 %v1266, %v1262
    %v1447 = vpack.c.b16 %v1267, %v1263
    %v1448 = vpack.c.b16 %v1268, %v1264
    %v1449 = vpack.c.b16 %v1273, %v1269
    %v1450 = vpack.c.b16 %v1274, %v1270
    %v1451 = vpack.c.b16 %v1275, %v1271
    %v1452 = vpack.c.b16 %v1276, %v1272
    %v1453 = vpack.c.b16 %v1281, %v1277
    %v1454 = vpack.c.b16 %v1282, %v1278
    %v1455 = vpack.c.b16 %v1283, %v1279
    %v1456 = vpack.c.b16 %v1284, %v1280
    %v1457 = vpack.c.b16 %v1289, %v1285
    %v1458 = vpack.c.b16 %v1290, %v1286
    %v1459 = vpack.c.b16 %v1291, %v1287
    %v1460 = vpack.c.b16 %v1292, %v1288
    %v1461 = vpack.c.b16 %v1297, %v1293
    %v1462 = vpack.c.b16 %v1298, %v1294
    %v1463 = vpack.c.b16 %v1299, %v1295
    %v1464 = vpack.c.b16 %v1300, %v1296
    %v1465 = vpack.c.b16 %v1305, %v1301
    %v1466 = vpack.c.b16 %v1306, %v1302
    %v1467 = vpack.c.b16 %v1307, %v1303
    %v1468 = vpack.c.b16 %v1308, %v1304
    %v1469 = vpack.c.b16 %v1313, %v1309
    %v1470 = vpack.c.b16 %v1314, %v1310
    %v1471 = vpack.c.b16 %v1315, %v1311
    %v1472 = vpack.c.b16 %v1316, %v1312
    %v1473 = vpack.c.b16 %v1321, %v1317
    %v1474 = vpack.c.b16 %v1322, %v1318
    %v1475 = vpack.c.b16 %v1323, %v1319
    %v1476 = vpack.c.b16 %v1324, %v1320
    %v1477 = vpack.c.b16 %v1329, %v1325
    %v1478 = vpack.c.b16 %v1330, %v1326
    %v1479 = vpack.c.b16 %v1331, %v1327
    %v1480 = vpack.c.b16 %v1332, %v1328
    %v1481 = vpack.c.b16 %v1337, %v1333
    %v1482 = vpack.c.b16 %v1338, %v1334
    %v1483 = vpack.c.b16 %v1339, %v1335
    %v1484 = vpack.c.b16 %v1340, %v1336
    %v1485 = vpack.c.b16 %v1345, %v1341
    %v1486 = vpack.c.b16 %v1346, %v1342
    %v1487 = vpack.c.b16 %v1347, %v1343
    %v1488 = vpack.c.b16 %v1348, %v1344
    %v1489 = vpack.c.b16 %v1353, %v1349
    %v1490 = vpack.c.b16 %v1354, %v1350
    %v1491 = vpack.c.b16 %v1355, %v1351
    %v1492 = vpack.c.b16 %v1356, %v1352
    %v1493 = vpack.c.b16 %v1361, %v1357
    %v1494 = vpack.c.b16 %v1362, %v1358
    %v1495 = vpack.c.b16 %v1363, %v1359
    %v1496 = vpack.c.b16 %v1364, %v1360
    %v1497 = vpack.c.b16 %v1369, %v1365
    %v1498 = vpack.c.b16 %v1370, %v1366
    %v1499 = vpack.c.b16 %v1371, %v1367
    %v1500 = vpack.c.b16 %v1372, %v1368
    %1629 = vmatprep.subr.bf16.mxu0 %v1402
    %1630 = vmatpush1.bf16.msra.mxu0 %v1401
    %1631 = vmatprep.subr.bf16.mxu0 %v1398
    %1632 = vmatpush1.bf16.msra.mxu0 %v1397
    %1633 = vmatprep.subr.bf16.mxu0 %v1394
    %1634 = vmatpush1.bf16.msra.mxu0 %v1393
    %1635 = vmatprep.subr.bf16.mxu0 %v1390
    %1636 = vmatpush1.bf16.msra.mxu0 %v1389
    %1637 = vmatprep.subr.bf16.mxu0 %v1386
    %1638 = vmatpush1.bf16.msra.mxu0 %v1385
    %1639 = vmatprep.subr.bf16.mxu0 %v1382
    %1640 = vmatpush1.bf16.msra.mxu0 %v1381
    %1641 = vmatprep.subr.bf16.mxu0 %v1378
    %1642 = vmatpush1.bf16.msra.mxu0 %v1377
    %1643 = vmatprep.subr.bf16.mxu0 %v1374
    %1644 = vmatpush1.bf16.msra.mxu0 %v1373
    %1645 = vmatprep.subr.bf16.mxu0 %v1434
    %1646 = vmatpush2.bf16.msra.mxu0 %v1433
    %1647 = vmatprep.subr.bf16.mxu0 %v1430
    %1648 = vmatpush2.bf16.msra.mxu0 %v1429
    %1649 = vmatprep.subr.bf16.mxu0 %v1426
    %1650 = vmatpush2.bf16.msra.mxu0 %v1425
    %1651 = vmatprep.subr.bf16.mxu0 %v1422
    %1652 = vmatpush2.bf16.msra.mxu0 %v1421
    %1653 = vmatprep.subr.bf16.mxu0 %v1418
    %1654 = vmatpush2.bf16.msra.mxu0 %v1417
    %1655 = vmatprep.subr.bf16.mxu0 %v1414
    %1656 = vmatpush2.bf16.msra.mxu0 %v1413
    %1657 = vmatprep.subr.bf16.mxu0 %v1410
    %1658 = vmatpush2.bf16.msra.mxu0 %v1409
    %1659 = vmatprep.subr.bf16.mxu0 %v1406
    %1660 = vmatpush2.bf16.msra.mxu0 %v1405
    %1661 = vmatprep.mubr.bf16.mxu0 %v828
    %1662 = vmatmul.mubr.bf16.gmra.mxu0 %v827
    %v1663 = vpop.f32.mrf.mxu0
    %v1664 = vadd.f32 %v972, %v1663
    %v1665 = vpop.f32.mrf.mxu0
    %v1666 = vadd.f32 %v976, %v1665
    %v1667 = vpop.f32.mrf.mxu0
    %v1668 = vadd.f32 %v972, %v1667
    %v1669 = vpop.f32.mrf.mxu0
    %v1670 = vadd.f32 %v976, %v1669
    %1671 = vmatprep.mubr.bf16.mxu0 %v832
    %1672 = vmatmul.mubr.bf16.gmra.mxu0 %v831
    %v1673 = vpop.f32.mrf.mxu0
    %v1674 = vadd.f32 %v972, %v1673
    %v1675 = vpop.f32.mrf.mxu0
    %v1676 = vadd.f32 %v976, %v1675
    %v1677 = vpop.f32.mrf.mxu0
    %v1678 = vadd.f32 %v972, %v1677
    %v1679 = vpop.f32.mrf.mxu0
    %v1680 = vadd.f32 %v976, %v1679
    %1681 = vmatprep.mubr.bf16.mxu0 %v836
    %1682 = vmatmul.mubr.bf16.gmra.mxu0 %v835
    %v1683 = vpop.f32.mrf.mxu0
    %v1684 = vadd.f32 %v972, %v1683
    %v1685 = vpop.f32.mrf.mxu0
    %v1686 = vadd.f32 %v976, %v1685
    %v1687 = vpop.f32.mrf.mxu0
    %v1688 = vadd.f32 %v972, %v1687
    %v1689 = vpop.f32.mrf.mxu0
    %v1690 = vadd.f32 %v976, %v1689
    %1691 = vdwg.mxu0
    %1692 = vmatprep.subr.bf16.mxu0 %v1466
    %1693 = vmatpush1.bf16.msra.mxu0 %v1465
    %1694 = vmatprep.subr.bf16.mxu0 %v1462
    %1695 = vmatpush1.bf16.msra.mxu0 %v1461
    %1696 = vmatprep.subr.bf16.mxu0 %v1458
    %1697 = vmatpush1.bf16.msra.mxu0 %v1457
    %1698 = vmatprep.subr.bf16.mxu0 %v1454
    %1699 = vmatpush1.bf16.msra.mxu0 %v1453
    %1700 = vmatprep.subr.bf16.mxu0 %v1450
    %1701 = vmatpush1.bf16.msra.mxu0 %v1449
    %1702 = vmatprep.subr.bf16.mxu0 %v1446
    %1703 = vmatpush1.bf16.msra.mxu0 %v1445
    %1704 = vmatprep.subr.bf16.mxu0 %v1442
    %1705 = vmatpush1.bf16.msra.mxu0 %v1441
    %1706 = vmatprep.subr.bf16.mxu0 %v1438
    %1707 = vmatpush1.bf16.msra.mxu0 %v1437
    %1708 = vmatprep.subr.bf16.mxu0 %v1498
    %1709 = vmatpush2.bf16.msra.mxu0 %v1497
    %1710 = vmatprep.subr.bf16.mxu0 %v1494
    %1711 = vmatpush2.bf16.msra.mxu0 %v1493
    %1712 = vmatprep.subr.bf16.mxu0 %v1490
    %1713 = vmatpush2.bf16.msra.mxu0 %v1489
    %1714 = vmatprep.subr.bf16.mxu0 %v1486
    %1715 = vmatpush2.bf16.msra.mxu0 %v1485
    %1716 = vmatprep.subr.bf16.mxu0 %v1482
    %1717 = vmatpush2.bf16.msra.mxu0 %v1481
    %1718 = vmatprep.subr.bf16.mxu0 %v1478
    %1719 = vmatpush2.bf16.msra.mxu0 %v1477
    %1720 = vmatprep.subr.bf16.mxu0 %v1474
    %1721 = vmatpush2.bf16.msra.mxu0 %v1473
    %1722 = vmatprep.subr.bf16.mxu0 %v1470
    %1723 = vmatpush2.bf16.msra.mxu0 %v1469
    %1724 = vmatprep.mubr.bf16.mxu0 %v830
    %1725 = vmatmul.mubr.bf16.gmra.mxu0 %v829
    %v1726 = vpop.f32.mrf.mxu0
    %v1727 = vadd.f32 %v1664, %v1726
    %v1728 = vpop.f32.mrf.mxu0
    %v1729 = vadd.f32 %v1666, %v1728
    %v1730 = vpop.f32.mrf.mxu0
    %v1731 = vadd.f32 %v1668, %v1730
    %v1732 = vpop.f32.mrf.mxu0
    %v1733 = vadd.f32 %v1670, %v1732
    %1734 = vmatprep.mubr.bf16.mxu0 %v834
    %1735 = vmatmul.mubr.bf16.gmra.mxu0 %v833
    %v1736 = vpop.f32.mrf.mxu0
    %v1737 = vadd.f32 %v1674, %v1736
    %v1738 = vpop.f32.mrf.mxu0
    %v1739 = vadd.f32 %v1676, %v1738
    %v1740 = vpop.f32.mrf.mxu0
    %v1741 = vadd.f32 %v1678, %v1740
    %v1742 = vpop.f32.mrf.mxu0
    %v1743 = vadd.f32 %v1680, %v1742
    %1744 = vmatprep.mubr.bf16.mxu0 %v838
    %1745 = vmatmul.mubr.bf16.gmra.mxu0 %v837
    %v1746 = vpop.f32.mrf.mxu0
    %v1747 = vadd.f32 %v1684, %v1746
    %v1748 = vpop.f32.mrf.mxu0
    %v1749 = vadd.f32 %v1686, %v1748
    %v1750 = vpop.f32.mrf.mxu0
    %v1751 = vadd.f32 %v1688, %v1750
    %v1752 = vpop.f32.mrf.mxu0
    %v1753 = vadd.f32 %v1690, %v1752
    %1754 = vdwg.mxu0
    %1755 = vmatprep.subr.bf16.mxu0 %v1404
    %1756 = vmatpush1.bf16.msra.mxu0 %v1403
    %1757 = vmatprep.subr.bf16.mxu0 %v1400
    %1758 = vmatpush1.bf16.msra.mxu0 %v1399
    %1759 = vmatprep.subr.bf16.mxu0 %v1396
    %1760 = vmatpush1.bf16.msra.mxu0 %v1395
    %1761 = vmatprep.subr.bf16.mxu0 %v1392
    %1762 = vmatpush1.bf16.msra.mxu0 %v1391
    %1763 = vmatprep.subr.bf16.mxu0 %v1388
    %1764 = vmatpush1.bf16.msra.mxu0 %v1387
    %1765 = vmatprep.subr.bf16.mxu0 %v1384
    %1766 = vmatpush1.bf16.msra.mxu0 %v1383
    %1767 = vmatprep.subr.bf16.mxu0 %v1380
    %1768 = vmatpush1.bf16.msra.mxu0 %v1379
    %1769 = vmatprep.subr.bf16.mxu0 %v1376
    %1770 = vmatpush1.bf16.msra.mxu0 %v1375
    %1771 = vmatprep.subr.bf16.mxu0 %v1436
    %1772 = vmatpush2.bf16.msra.mxu0 %v1435
    %1773 = vmatprep.subr.bf16.mxu0 %v1432
    %1774 = vmatpush2.bf16.msra.mxu0 %v1431
    %1775 = vmatprep.subr.bf16.mxu0 %v1428
    %1776 = vmatpush2.bf16.msra.mxu0 %v1427
    %1777 = vmatprep.subr.bf16.mxu0 %v1424
    %1778 = vmatpush2.bf16.msra.mxu0 %v1423
    %1779 = vmatprep.subr.bf16.mxu0 %v1420
    %1780 = vmatpush2.bf16.msra.mxu0 %v1419
    %1781 = vmatprep.subr.bf16.mxu0 %v1416
    %1782 = vmatpush2.bf16.msra.mxu0 %v1415
    %1783 = vmatprep.subr.bf16.mxu0 %v1412
    %1784 = vmatpush2.bf16.msra.mxu0 %v1411
    %1785 = vmatprep.subr.bf16.mxu0 %v1408
    %1786 = vmatpush2.bf16.msra.mxu0 %v1407
    %1787 = vmatprep.mubr.bf16.mxu0 %v828
    %1788 = vmatmul.mubr.bf16.gmra.mxu0 %v827
    %v1789 = vpop.f32.mrf.mxu0
    %v1790 = vadd.f32 %v980, %v1789
    %v1791 = vpop.f32.mrf.mxu0
    %v1792 = vadd.f32 %v984, %v1791
    %v1793 = vpop.f32.mrf.mxu0
    %v1794 = vadd.f32 %v980, %v1793
    %v1795 = vpop.f32.mrf.mxu0
    %v1796 = vadd.f32 %v984, %v1795
    %1797 = vmatprep.mubr.bf16.mxu0 %v832
    %1798 = vmatmul.mubr.bf16.gmra.mxu0 %v831
    %v1799 = vpop.f32.mrf.mxu0
    %v1800 = vadd.f32 %v980, %v1799
    %v1801 = vpop.f32.mrf.mxu0
    %v1802 = vadd.f32 %v984, %v1801
    %v1803 = vpop.f32.mrf.mxu0
    %v1804 = vadd.f32 %v980, %v1803
    %v1805 = vpop.f32.mrf.mxu0
    %v1806 = vadd.f32 %v984, %v1805
    %1807 = vmatprep.mubr.bf16.mxu0 %v836
    %1808 = vmatmul.mubr.bf16.gmra.mxu0 %v835
    %v1809 = vpop.f32.mrf.mxu0
    %v1810 = vadd.f32 %v980, %v1809
    %v1811 = vpop.f32.mrf.mxu0
    %v1812 = vadd.f32 %v984, %v1811
    %v1813 = vpop.f32.mrf.mxu0
    %v1814 = vadd.f32 %v980, %v1813
    %v1815 = vpop.f32.mrf.mxu0
    %v1816 = vadd.f32 %v984, %v1815
    %1817 = vdwg.mxu0
    %1818 = vmatprep.subr.bf16.mxu0 %v1468
    %1819 = vmatpush1.bf16.msra.mxu0 %v1467
    %1820 = vmatprep.subr.bf16.mxu0 %v1464
    %1821 = vmatpush1.bf16.msra.mxu0 %v1463
    %1822 = vmatprep.subr.bf16.mxu0 %v1460
    %1823 = vmatpush1.bf16.msra.mxu0 %v1459
    %1824 = vmatprep.subr.bf16.mxu0 %v1456
    %1825 = vmatpush1.bf16.msra.mxu0 %v1455
    %1826 = vmatprep.subr.bf16.mxu0 %v1452
    %1827 = vmatpush1.bf16.msra.mxu0 %v1451
    %1828 = vmatprep.subr.bf16.mxu0 %v1448
    %1829 = vmatpush1.bf16.msra.mxu0 %v1447
    %1830 = vmatprep.subr.bf16.mxu0 %v1444
    %1831 = vmatpush1.bf16.msra.mxu0 %v1443
    %1832 = vmatprep.subr.bf16.mxu0 %v1440
    %1833 = vmatpush1.bf16.msra.mxu0 %v1439
    %1834 = vmatprep.subr.bf16.mxu0 %v1500
    %1835 = vmatpush2.bf16.msra.mxu0 %v1499
    %1836 = vmatprep.subr.bf16.mxu0 %v1496
    %1837 = vmatpush2.bf16.msra.mxu0 %v1495
    %1838 = vmatprep.subr.bf16.mxu0 %v1492
    %1839 = vmatpush2.bf16.msra.mxu0 %v1491
    %1840 = vmatprep.subr.bf16.mxu0 %v1488
    %1841 = vmatpush2.bf16.msra.mxu0 %v1487
    %1842 = vmatprep.subr.bf16.mxu0 %v1484
    %1843 = vmatpush2.bf16.msra.mxu0 %v1483
    %1844 = vmatprep.subr.bf16.mxu0 %v1480
    %1845 = vmatpush2.bf16.msra.mxu0 %v1479
    %1846 = vmatprep.subr.bf16.mxu0 %v1476
    %1847 = vmatpush2.bf16.msra.mxu0 %v1475
    %1848 = vmatprep.subr.bf16.mxu0 %v1472
    %1849 = vmatpush2.bf16.msra.mxu0 %v1471
    %1850 = vmatprep.mubr.bf16.mxu0 %v830
    %1851 = vmatmul.mubr.bf16.gmra.mxu0 %v829
    %v1852 = vpop.f32.mrf.mxu0
    %v1853 = vadd.f32 %v1790, %v1852
    %v1854 = vpop.f32.mrf.mxu0
    %v1855 = vadd.f32 %v1792, %v1854
    %v1856 = vpop.f32.mrf.mxu0
    %v1857 = vadd.f32 %v1794, %v1856
    %v1858 = vpop.f32.mrf.mxu0
    %v1859 = vadd.f32 %v1796, %v1858
    %1860 = vmatprep.mubr.bf16.mxu0 %v834
    %1861 = vmatmul.mubr.bf16.gmra.mxu0 %v833
    %v1862 = vpop.f32.mrf.mxu0
    %v1863 = vadd.f32 %v1800, %v1862
    %v1864 = vpop.f32.mrf.mxu0
    %v1865 = vadd.f32 %v1802, %v1864
    %v1866 = vpop.f32.mrf.mxu0
    %v1867 = vadd.f32 %v1804, %v1866
    %v1868 = vpop.f32.mrf.mxu0
    %v1869 = vadd.f32 %v1806, %v1868
    %1870 = vmatprep.mubr.bf16.mxu0 %v838
    %1871 = vmatmul.mubr.bf16.gmra.mxu0 %v837
    %v1872 = vpop.f32.mrf.mxu0
    %v1873 = vadd.f32 %v1810, %v1872
    %v1874 = vpop.f32.mrf.mxu0
    %v1875 = vadd.f32 %v1812, %v1874
    %v1876 = vpop.f32.mrf.mxu0
    %v1877 = vadd.f32 %v1814, %v1876
    %v1878 = vpop.f32.mrf.mxu0
    %v1879 = vadd.f32 %v1816, %v1878
    %1880 = vdwg.mxu0
    %v1881 = vxor.u32 %v1727, 2147483648
    %v1882 = vxor.u32 %v1729, 2147483648
    %v1883 = vxor.u32 %v1853, 2147483648
    %v1884 = vxor.u32 %v1855, 2147483648
    %v1885 = vxor.u32 %v1731, 2147483648
    %v1886 = vxor.u32 %v1733, 2147483648
    %v1887 = vxor.u32 %v1857, 2147483648
    %v1888 = vxor.u32 %v1859, 2147483648
    %v1889 = vxor.u32 %v1737, 2147483648
    %v1890 = vxor.u32 %v1739, 2147483648
    %v1891 = vxor.u32 %v1863, 2147483648
    %v1892 = vxor.u32 %v1865, 2147483648
    %v1893 = vxor.u32 %v1741, 2147483648
    %v1894 = vxor.u32 %v1743, 2147483648
    %v1895 = vxor.u32 %v1867, 2147483648
    %v1896 = vxor.u32 %v1869, 2147483648
    %v1897 = vxor.u32 %v1747, 2147483648
    %v1898 = vxor.u32 %v1749, 2147483648
    %v1899 = vxor.u32 %v1873, 2147483648
    %v1900 = vxor.u32 %v1875, 2147483648
    %v1901 = vxor.u32 %v1751, 2147483648
    %v1902 = vxor.u32 %v1753, 2147483648
    %v1903 = vxor.u32 %v1877, 2147483648
    %v1904 = vxor.u32 %v1879, 2147483648
    %v1905 = vmul.f32 %v1881, 1.442695
    %v1906 = vpow.pop %v1905
    %v1907 = vmul.f32 %v1882, 1.442695
    %v1908 = vpow.pop %v1907
    %v1909 = vmul.f32 %v1883, 1.442695
    %v1910 = vpow.pop %v1909
    %v1911 = vmul.f32 %v1884, 1.442695
    %v1912 = vpow.pop %v1911
    %v1913 = vmul.f32 %v1885, 1.442695
    %v1914 = vpow.pop %v1913
    %v1915 = vmul.f32 %v1886, 1.442695
    %v1916 = vpow.pop %v1915
    %v1917 = vmul.f32 %v1887, 1.442695
    %v1918 = vpow.pop %v1917
    %v1919 = vmul.f32 %v1888, 1.442695
    %v1920 = vpow.pop %v1919
    %v1921 = vmul.f32 %v1889, 1.442695
    %v1922 = vpow.pop %v1921
    %v1923 = vmul.f32 %v1890, 1.442695
    %v1924 = vpow.pop %v1923
    %v1925 = vmul.f32 %v1891, 1.442695
    %v1926 = vpow.pop %v1925
    %v1927 = vmul.f32 %v1892, 1.442695
    %v1928 = vpow.pop %v1927
    %v1929 = vmul.f32 %v1893, 1.442695
    %v1930 = vpow.pop %v1929
    %v1931 = vmul.f32 %v1894, 1.442695
    %v1932 = vpow.pop %v1931
    %v1933 = vmul.f32 %v1895, 1.442695
    %v1934 = vpow.pop %v1933
    %v1935 = vmul.f32 %v1896, 1.442695
    %v1936 = vpow.pop %v1935
    %v1937 = vmul.f32 %v1897, 1.442695
    %v1938 = vpow.pop %v1937
    %v1939 = vmul.f32 %v1898, 1.442695
    %v1940 = vpow.pop %v1939
    %v1941 = vmul.f32 %v1899, 1.442695
    %v1942 = vpow.pop %v1941
    %v1943 = vmul.f32 %v1900, 1.442695
    %v1944 = vpow.pop %v1943
    %v1945 = vmul.f32 %v1901, 1.442695
    %v1946 = vpow.pop %v1945
    %v1947 = vmul.f32 %v1902, 1.442695
    %v1948 = vpow.pop %v1947
    %v1949 = vmul.f32 %v1903, 1.442695
    %v1950 = vpow.pop %v1949
    %v1951 = vmul.f32 %v1904, 1.442695
    %v1952 = vpow.pop %v1951
    %v1953 = vadd.f32 %v1906, 1.0
    %v1954 = vadd.f32 %v1908, 1.0
    %v1955 = vadd.f32 %v1910, 1.0
    %v1956 = vadd.f32 %v1912, 1.0
    %v1957 = vadd.f32 %v1914, 1.0
    %v1958 = vadd.f32 %v1916, 1.0
    %v1959 = vadd.f32 %v1918, 1.0
    %v1960 = vadd.f32 %v1920, 1.0
    %v1961 = vadd.f32 %v1922, 1.0
    %v1962 = vadd.f32 %v1924, 1.0
    %v1963 = vadd.f32 %v1926, 1.0
    %v1964 = vadd.f32 %v1928, 1.0
    %v1965 = vadd.f32 %v1930, 1.0
    %v1966 = vadd.f32 %v1932, 1.0
    %v1967 = vadd.f32 %v1934, 1.0
    %v1968 = vadd.f32 %v1936, 1.0
    %v1969 = vadd.f32 %v1938, 1.0
    %v1970 = vadd.f32 %v1940, 1.0
    %v1971 = vadd.f32 %v1942, 1.0
    %v1972 = vadd.f32 %v1944, 1.0
    %v1973 = vadd.f32 %v1946, 1.0
    %v1974 = vadd.f32 %v1948, 1.0
    %v1975 = vadd.f32 %v1950, 1.0
    %v1976 = vadd.f32 %v1952, 1.0
    %v1977 = vrcp.pop %v1953
    %v1978 = vmul.f32 1.0, %v1977
    %v1979 = vrcp.pop %v1954
    %v1980 = vmul.f32 1.0, %v1979
    %v1981 = vrcp.pop %v1955
    %v1982 = vmul.f32 1.0, %v1981
    %v1983 = vrcp.pop %v1956
    %v1984 = vmul.f32 1.0, %v1983
    %v1985 = vrcp.pop %v1957
    %v1986 = vmul.f32 1.0, %v1985
    %v1987 = vrcp.pop %v1958
    %v1988 = vmul.f32 1.0, %v1987
    %v1989 = vrcp.pop %v1959
    %v1990 = vmul.f32 1.0, %v1989
    %v1991 = vrcp.pop %v1960
    %v1992 = vmul.f32 1.0, %v1991
    %v1993 = vrcp.pop %v1961
    %v1994 = vmul.f32 1.0, %v1993
    %v1995 = vrcp.pop %v1962
    %v1996 = vmul.f32 1.0, %v1995
    %v1997 = vrcp.pop %v1963
    %v1998 = vmul.f32 1.0, %v1997
    %v1999 = vrcp.pop %v1964
    %v2000 = vmul.f32 1.0, %v1999
    %v2001 = vrcp.pop %v1965
    %v2002 = vmul.f32 1.0, %v2001
    %v2003 = vrcp.pop %v1966
    %v2004 = vmul.f32 1.0, %v2003
    %v2005 = vrcp.pop %v1967
    %v2006 = vmul.f32 1.0, %v2005
    %v2007 = vrcp.pop %v1968
    %v2008 = vmul.f32 1.0, %v2007
    %v2009 = vrcp.pop %v1969
    %v2010 = vmul.f32 1.0, %v2009
    %v2011 = vrcp.pop %v1970
    %v2012 = vmul.f32 1.0, %v2011
    %v2013 = vrcp.pop %v1971
    %v2014 = vmul.f32 1.0, %v2013
    %v2015 = vrcp.pop %v1972
    %v2016 = vmul.f32 1.0, %v2015
    %v2017 = vrcp.pop %v1973
    %v2018 = vmul.f32 1.0, %v2017
    %v2019 = vrcp.pop %v1974
    %v2020 = vmul.f32 1.0, %v2019
    %v2021 = vrcp.pop %v1975
    %v2022 = vmul.f32 1.0, %v2021
    %v2023 = vrcp.pop %v1976
    %v2024 = vmul.f32 1.0, %v2023
    %v2025 = vmul.f32 %v1727, %v1978
    %v2026 = vmul.f32 %v1729, %v1980
    %v2027 = vmul.f32 %v1853, %v1982
    %v2028 = vmul.f32 %v1855, %v1984
    %v2029 = vmul.f32 %v1731, %v1986
    %v2030 = vmul.f32 %v1733, %v1988
    %v2031 = vmul.f32 %v1857, %v1990
    %v2032 = vmul.f32 %v1859, %v1992
    %v2033 = vmul.f32 %v1737, %v1994
    %v2034 = vmul.f32 %v1739, %v1996
    %v2035 = vmul.f32 %v1863, %v1998
    %v2036 = vmul.f32 %v1865, %v2000
    %v2037 = vmul.f32 %v1741, %v2002
    %v2038 = vmul.f32 %v1743, %v2004
    %v2039 = vmul.f32 %v1867, %v2006
    %v2040 = vmul.f32 %v1869, %v2008
    %v2041 = vmul.f32 %v1747, %v2010
    %v2042 = vmul.f32 %v1749, %v2012
    %v2043 = vmul.f32 %v1873, %v2014
    %v2044 = vmul.f32 %v1875, %v2016
    %v2045 = vmul.f32 %v1751, %v2018
    %v2046 = vmul.f32 %v1753, %v2020
    %v2047 = vmul.f32 %v1877, %v2022
    %v2048 = vmul.f32 %v1879, %v2024
    %v2049 = vpack.c.bf16 %v2029, %v2025
    %v2050 = vpack.c.bf16 %v2030, %v2026
    %v2051 = vpack.c.bf16 %v2031, %v2027
    %v2052 = vpack.c.bf16 %v2032, %v2028
    %v2053 = vpack.c.bf16 %v2037, %v2033
    %v2054 = vpack.c.bf16 %v2038, %v2034
    %v2055 = vpack.c.bf16 %v2039, %v2035
    %v2056 = vpack.c.bf16 %v2040, %v2036
    %v2057 = vpack.c.bf16 %v2045, %v2041
    %v2058 = vpack.c.bf16 %v2046, %v2042
    %v2059 = vpack.c.bf16 %v2047, %v2043
    %v2060 = vpack.c.bf16 %v2048, %v2044
    %v2061 = vld [vmem:[#allocation10] sm:$0xf]
    %v2062 = vld [vmem:[#allocation10 + $0x4] sm:$0xf]
    %v2063 = vld [vmem:[#allocation10 + $0x8] sm:$0xf]
    %v2064 = vld [vmem:[#allocation10 + $0xc] sm:$0xf]
    %v2065 = vld [vmem:[#allocation10 + $0x10] sm:$0xf]
    %v2066 = vld [vmem:[#allocation10 + $0x14] sm:$0xf]
    %v2067 = vld [vmem:[#allocation10 + $0x18] sm:$0xf]
    %v2068 = vld [vmem:[#allocation10 + $0x1c] sm:$0xf]
    %v2069 = vld [vmem:[#allocation10 + $0x20] sm:$0xf]
    %v2070 = vld [vmem:[#allocation10 + $0x24] sm:$0xf]
    %v2071 = vld [vmem:[#allocation10 + $0x28] sm:$0xf]
    %v2072 = vld [vmem:[#allocation10 + $0x2c] sm:$0xf]
    %v2073 = vld [vmem:[#allocation10 + $0x30] sm:$0xf]
    %v2074 = vld [vmem:[#allocation10 + $0x34] sm:$0xf]
    %v2075 = vld [vmem:[#allocation10 + $0x38] sm:$0xf]
    %v2076 = vld [vmem:[#allocation10 + $0x3c] sm:$0xf]
    %v2077 = vld [vmem:[#allocation10 + $0x40] sm:$0xf]
    %v2078 = vld [vmem:[#allocation10 + $0x44] sm:$0xf]
    %v2079 = vld [vmem:[#allocation10 + $0x48] sm:$0xf]
    %v2080 = vld [vmem:[#allocation10 + $0x4c] sm:$0xf]
    %v2081 = vld [vmem:[#allocation10 + $0x50] sm:$0xf]
    %v2082 = vld [vmem:[#allocation10 + $0x54] sm:$0xf]
    %v2083 = vld [vmem:[#allocation10 + $0x58] sm:$0xf]
    %v2084 = vld [vmem:[#allocation10 + $0x5c] sm:$0xf]
    %v2085 = vld [vmem:[#allocation10 + $0x60] sm:$0xf]
    %v2086 = vld [vmem:[#allocation10 + $0x64] sm:$0xf]
    %v2087 = vld [vmem:[#allocation10 + $0x68] sm:$0xf]
    %v2088 = vld [vmem:[#allocation10 + $0x6c] sm:$0xf]
    %v2089 = vld [vmem:[#allocation10 + $0x70] sm:$0xf]
    %v2090 = vld [vmem:[#allocation10 + $0x74] sm:$0xf]
    %v2091 = vld [vmem:[#allocation10 + $0x78] sm:$0xf]
    %v2092 = vld [vmem:[#allocation10 + $0x7c] sm:$0xf]
    %v2093 = vld [vmem:[#allocation10 + $0x80] sm:$0xf]
    %v2094 = vld [vmem:[#allocation10 + $0x84] sm:$0xf]
    %v2095 = vld [vmem:[#allocation10 + $0x88] sm:$0xf]
    %v2096 = vld [vmem:[#allocation10 + $0x8c] sm:$0xf]
    %v2097 = vld [vmem:[#allocation10 + $0x90] sm:$0xf]
    %v2098 = vld [vmem:[#allocation10 + $0x94] sm:$0xf]
    %v2099 = vld [vmem:[#allocation10 + $0x98] sm:$0xf]
    %v2100 = vld [vmem:[#allocation10 + $0x9c] sm:$0xf]
    %v2101 = vld [vmem:[#allocation10 + $0xa0] sm:$0xf]
    %v2102 = vld [vmem:[#allocation10 + $0xa4] sm:$0xf]
    %v2103 = vld [vmem:[#allocation10 + $0xa8] sm:$0xf]
    %v2104 = vld [vmem:[#allocation10 + $0xac] sm:$0xf]
    %v2105 = vld [vmem:[#allocation10 + $0xb0] sm:$0xf]
    %v2106 = vld [vmem:[#allocation10 + $0xb4] sm:$0xf]
    %v2107 = vld [vmem:[#allocation10 + $0xb8] sm:$0xf]
    %v2108 = vld [vmem:[#allocation10 + $0xbc] sm:$0xf]
    %v2109 = vld [vmem:[#allocation10 + $0xc0] sm:$0xf]
    %v2110 = vld [vmem:[#allocation10 + $0xc4] sm:$0xf]
    %v2111 = vld [vmem:[#allocation10 + $0xc8] sm:$0xf]
    %v2112 = vld [vmem:[#allocation10 + $0xcc] sm:$0xf]
    %v2113 = vld [vmem:[#allocation10 + $0xd0] sm:$0xf]
    %v2114 = vld [vmem:[#allocation10 + $0xd4] sm:$0xf]
    %v2115 = vld [vmem:[#allocation10 + $0xd8] sm:$0xf]
    %v2116 = vld [vmem:[#allocation10 + $0xdc] sm:$0xf]
    %v2117 = vld [vmem:[#allocation10 + $0xe0] sm:$0xf]
    %v2118 = vld [vmem:[#allocation10 + $0xe4] sm:$0xf]
    %v2119 = vld [vmem:[#allocation10 + $0xe8] sm:$0xf]
    %v2120 = vld [vmem:[#allocation10 + $0xec] sm:$0xf]
    %v2121 = vld [vmem:[#allocation10 + $0xf0] sm:$0xf]
    %v2122 = vld [vmem:[#allocation10 + $0xf4] sm:$0xf]
    %v2123 = vld [vmem:[#allocation10 + $0xf8] sm:$0xf]
    %v2124 = vld [vmem:[#allocation10 + $0xfc] sm:$0xf]
    %v2125 = vld [vmem:[%s7] sm:$0x1]
    %v2127 = vlaneseq
    %v2128 = vshrl.u32 %v2127, 7
    %v2129 = vsub.s32 0, %v2128
    %v2130 = vrot.slane %v2125, %v2129
    %v2196 = vunpack.c.l.b16 %v2061
    %v2197 = vunpack.c.l.b16 %v2062
    %v2198 = vunpack.c.l.b16 %v2063
    %v2199 = vunpack.c.l.b16 %v2064
    %v2200 = vunpack.c.l.b16 %v2065
    %v2201 = vunpack.c.l.b16 %v2066
    %v2202 = vunpack.c.l.b16 %v2067
    %v2203 = vunpack.c.l.b16 %v2068
    %v2204 = vunpack.c.l.b16 %v2069
    %v2205 = vunpack.c.l.b16 %v2070
    %v2206 = vunpack.c.l.b16 %v2071
    %v2207 = vunpack.c.l.b16 %v2072
    %v2208 = vunpack.c.l.b16 %v2073
    %v2209 = vunpack.c.l.b16 %v2074
    %v2210 = vunpack.c.l.b16 %v2075
    %v2211 = vunpack.c.l.b16 %v2076
    %v2212 = vunpack.c.l.b16 %v2077
    %v2213 = vunpack.c.l.b16 %v2078
    %v2214 = vunpack.c.l.b16 %v2079
    %v2215 = vunpack.c.l.b16 %v2080
    %v2216 = vunpack.c.l.b16 %v2081
    %v2217 = vunpack.c.l.b16 %v2082
    %v2218 = vunpack.c.l.b16 %v2083
    %v2219 = vunpack.c.l.b16 %v2084
    %v2220 = vunpack.c.l.b16 %v2085
    %v2221 = vunpack.c.l.b16 %v2086
    %v2222 = vunpack.c.l.b16 %v2087
    %v2223 = vunpack.c.l.b16 %v2088
    %v2224 = vunpack.c.l.b16 %v2089
    %v2225 = vunpack.c.l.b16 %v2090
    %v2226 = vunpack.c.l.b16 %v2091
    %v2227 = vunpack.c.l.b16 %v2092
    %v2228 = vunpack.c.l.b16 %v2093
    %v2229 = vunpack.c.l.b16 %v2094
    %v2230 = vunpack.c.l.b16 %v2095
    %v2231 = vunpack.c.l.b16 %v2096
    %v2232 = vunpack.c.l.b16 %v2097
    %v2233 = vunpack.c.l.b16 %v2098
    %v2234 = vunpack.c.l.b16 %v2099
    %v2235 = vunpack.c.l.b16 %v2100
    %v2236 = vunpack.c.l.b16 %v2101
    %v2237 = vunpack.c.l.b16 %v2102
    %v2238 = vunpack.c.l.b16 %v2103
    %v2239 = vunpack.c.l.b16 %v2104
    %v2240 = vunpack.c.l.b16 %v2105
    %v2241 = vunpack.c.l.b16 %v2106
    %v2242 = vunpack.c.l.b16 %v2107
    %v2243 = vunpack.c.l.b16 %v2108
    %v2244 = vunpack.c.l.b16 %v2109
    %v2245 = vunpack.c.l.b16 %v2110
    %v2246 = vunpack.c.l.b16 %v2111
    %v2247 = vunpack.c.l.b16 %v2112
    %v2248 = vunpack.c.l.b16 %v2113
    %v2249 = vunpack.c.l.b16 %v2114
    %v2250 = vunpack.c.l.b16 %v2115
    %v2251 = vunpack.c.l.b16 %v2116
    %v2252 = vunpack.c.l.b16 %v2117
    %v2253 = vunpack.c.l.b16 %v2118
    %v2254 = vunpack.c.l.b16 %v2119
    %v2255 = vunpack.c.l.b16 %v2120
    %v2256 = vunpack.c.l.b16 %v2121
    %v2257 = vunpack.c.l.b16 %v2122
    %v2258 = vunpack.c.l.b16 %v2123
    %v2259 = vunpack.c.l.b16 %v2124
    %v2260 = vpack.c.b16 %v2197, %v2196
    %v2261 = vpack.c.b16 %v2199, %v2198
    %v2262 = vpack.c.b16 %v2201, %v2200
    %v2263 = vpack.c.b16 %v2203, %v2202
    %v2264 = vpack.c.b16 %v2205, %v2204
    %v2265 = vpack.c.b16 %v2207, %v2206
    %v2266 = vpack.c.b16 %v2209, %v2208
    %v2267 = vpack.c.b16 %v2211, %v2210
    %v2268 = vpack.c.b16 %v2213, %v2212
    %v2269 = vpack.c.b16 %v2215, %v2214
    %v2270 = vpack.c.b16 %v2217, %v2216
    %v2271 = vpack.c.b16 %v2219, %v2218
    %v2272 = vpack.c.b16 %v2221, %v2220
    %v2273 = vpack.c.b16 %v2223, %v2222
    %v2274 = vpack.c.b16 %v2225, %v2224
    %v2275 = vpack.c.b16 %v2227, %v2226
    %v2276 = vpack.c.b16 %v2229, %v2228
    %v2277 = vpack.c.b16 %v2231, %v2230
    %v2278 = vpack.c.b16 %v2233, %v2232
    %v2279 = vpack.c.b16 %v2235, %v2234
    %v2280 = vpack.c.b16 %v2237, %v2236
    %v2281 = vpack.c.b16 %v2239, %v2238
    %v2282 = vpack.c.b16 %v2241, %v2240
    %v2283 = vpack.c.b16 %v2243, %v2242
    %v2284 = vpack.c.b16 %v2245, %v2244
    %v2285 = vpack.c.b16 %v2247, %v2246
    %v2286 = vpack.c.b16 %v2249, %v2248
    %v2287 = vpack.c.b16 %v2251, %v2250
    %v2288 = vpack.c.b16 %v2253, %v2252
    %v2289 = vpack.c.b16 %v2255, %v2254
    %v2290 = vpack.c.b16 %v2257, %v2256
    %v2291 = vpack.c.b16 %v2259, %v2258
    %2324 = vmatprep.subr.bf16.mxu0 0
    %2325 = vmatpush1.bf16.msra.mxu0 %v2267
    %2326 = vmatprep.subr.bf16.mxu0 0
    %2327 = vmatpush1.bf16.msra.mxu0 %v2266
    %2328 = vmatprep.subr.bf16.mxu0 0
    %2329 = vmatpush1.bf16.msra.mxu0 %v2265
    %2330 = vmatprep.subr.bf16.mxu0 0
    %2331 = vmatpush1.bf16.msra.mxu0 %v2264
    %2332 = vmatprep.subr.bf16.mxu0 0
    %2333 = vmatpush1.bf16.msra.mxu0 %v2263
    %2334 = vmatprep.subr.bf16.mxu0 0
    %2335 = vmatpush1.bf16.msra.mxu0 %v2262
    %2336 = vmatprep.subr.bf16.mxu0 0
    %2337 = vmatpush1.bf16.msra.mxu0 %v2261
    %2338 = vmatprep.subr.bf16.mxu0 0
    %2339 = vmatpush1.bf16.msra.mxu0 %v2260
    %2340 = vmatprep.subr.bf16.mxu0 0
    %2341 = vmatpush2.bf16.msra.mxu0 %v2275
    %2342 = vmatprep.subr.bf16.mxu0 0
    %2343 = vmatpush2.bf16.msra.mxu0 %v2274
    %2344 = vmatprep.subr.bf16.mxu0 0
    %2345 = vmatpush2.bf16.msra.mxu0 %v2273
    %2346 = vmatprep.subr.bf16.mxu0 0
    %2347 = vmatpush2.bf16.msra.mxu0 %v2272
    %2348 = vmatprep.subr.bf16.mxu0 0
    %2349 = vmatpush2.bf16.msra.mxu0 %v2271
    %2350 = vmatprep.subr.bf16.mxu0 0
    %2351 = vmatpush2.bf16.msra.mxu0 %v2270
    %2352 = vmatprep.subr.bf16.mxu0 0
    %2353 = vmatpush2.bf16.msra.mxu0 %v2269
    %2354 = vmatprep.subr.bf16.mxu0 0
    %2355 = vmatpush2.bf16.msra.mxu0 %v2268
    %2356 = vmatprep.mubr.bf16.mxu0 %v2050
    %2357 = vmatmul.mubr.bf16.gmra.mxu0 %v2049
    %v2358 = vpop.f32.mrf.mxu0
    %v2359 = vadd.f32 %v2130, %v2358
    %v2360 = vpop.f32.mrf.mxu0
    %v2361 = vpop.f32.mrf.mxu0
    %v2362 = vadd.f32 %v2130, %v2361
    %v2363 = vpop.f32.mrf.mxu0
    %2364 = vmatprep.mubr.bf16.mxu0 %v2054
    %2365 = vmatmul.mubr.bf16.gmra.mxu0 %v2053
    %v2366 = vpop.f32.mrf.mxu0
    %v2367 = vadd.f32 %v2130, %v2366
    %v2368 = vpop.f32.mrf.mxu0
    %v2369 = vpop.f32.mrf.mxu0
    %v2370 = vadd.f32 %v2130, %v2369
    %v2371 = vpop.f32.mrf.mxu0
    %2372 = vmatprep.mubr.bf16.mxu0 %v2058
    %2373 = vmatmul.mubr.bf16.gmra.mxu0 %v2057
    %v2374 = vpop.f32.mrf.mxu0
    %v2375 = vadd.f32 %v2130, %v2374
    %v2376 = vpop.f32.mrf.mxu0
    %v2377 = vpop.f32.mrf.mxu0
    %v2378 = vadd.f32 %v2130, %v2377
    %v2379 = vpop.f32.mrf.mxu0
    %2380 = vdwg.mxu0
    %2381 = vmatprep.subr.bf16.mxu0 0
    %2382 = vmatpush1.bf16.msra.mxu0 %v2283
    %2383 = vmatprep.subr.bf16.mxu0 0
    %2384 = vmatpush1.bf16.msra.mxu0 %v2282
    %2385 = vmatprep.subr.bf16.mxu0 0
    %2386 = vmatpush1.bf16.msra.mxu0 %v2281
    %2387 = vmatprep.subr.bf16.mxu0 0
    %2388 = vmatpush1.bf16.msra.mxu0 %v2280
    %2389 = vmatprep.subr.bf16.mxu0 0
    %2390 = vmatpush1.bf16.msra.mxu0 %v2279
    %2391 = vmatprep.subr.bf16.mxu0 0
    %2392 = vmatpush1.bf16.msra.mxu0 %v2278
    %2393 = vmatprep.subr.bf16.mxu0 0
    %2394 = vmatpush1.bf16.msra.mxu0 %v2277
    %2395 = vmatprep.subr.bf16.mxu0 0
    %2396 = vmatpush1.bf16.msra.mxu0 %v2276
    %2397 = vmatprep.subr.bf16.mxu0 0
    %2398 = vmatpush2.bf16.msra.mxu0 %v2291
    %2399 = vmatprep.subr.bf16.mxu0 0
    %2400 = vmatpush2.bf16.msra.mxu0 %v2290
    %2401 = vmatprep.subr.bf16.mxu0 0
    %2402 = vmatpush2.bf16.msra.mxu0 %v2289
    %2403 = vmatprep.subr.bf16.mxu0 0
    %2404 = vmatpush2.bf16.msra.mxu0 %v2288
    %2405 = vmatprep.subr.bf16.mxu0 0
    %2406 = vmatpush2.bf16.msra.mxu0 %v2287
    %2407 = vmatprep.subr.bf16.mxu0 0
    %2408 = vmatpush2.bf16.msra.mxu0 %v2286
    %2409 = vmatprep.subr.bf16.mxu0 0
    %2410 = vmatpush2.bf16.msra.mxu0 %v2285
    %2411 = vmatprep.subr.bf16.mxu0 0
    %2412 = vmatpush2.bf16.msra.mxu0 %v2284
    %2413 = vmatprep.mubr.bf16.mxu0 %v2052
    %2414 = vmatmul.mubr.bf16.gmra.mxu0 %v2051
    %v2415 = vpop.f32.mrf.mxu0
    %v2416 = vadd.f32 %v2359, %v2415
    %v2417 = vpop.f32.mrf.mxu0
    %v2418 = vpop.f32.mrf.mxu0
    %v2419 = vadd.f32 %v2362, %v2418
    %v2420 = vpop.f32.mrf.mxu0
    %2421 = vmatprep.mubr.bf16.mxu0 %v2056
    %2422 = vmatmul.mubr.bf16.gmra.mxu0 %v2055
    %v2423 = vpop.f32.mrf.mxu0
    %v2424 = vadd.f32 %v2367, %v2423
    %v2425 = vpop.f32.mrf.mxu0
    %v2426 = vpop.f32.mrf.mxu0
    %v2427 = vadd.f32 %v2370, %v2426
    %v2428 = vpop.f32.mrf.mxu0
    %2429 = vmatprep.mubr.bf16.mxu0 %v2060
    %2430 = vmatmul.mubr.bf16.gmra.mxu0 %v2059
    %v2431 = vpop.f32.mrf.mxu0
    %v2432 = vadd.f32 %v2375, %v2431
    %v2433 = vpop.f32.mrf.mxu0
    %v2434 = vpop.f32.mrf.mxu0
    %v2435 = vadd.f32 %v2378, %v2434
    %v2436 = vpop.f32.mrf.mxu0
    %2437 = vdwg.mxu0
    %2438 = vst [vmem:[#allocation11] sm:$0xff] %v2416
    %2439 = vst [vmem:[#allocation11 + $0x8] sm:$0xff] %v2419
    %2440 = vst [vmem:[#allocation11 + $0x10] sm:$0xff] %v2424
    %2441 = vst [vmem:[#allocation11 + $0x18] sm:$0xff] %v2427
    %2442 = vst [vmem:[#allocation11 + $0x20] sm:$0xff] %v2432
    %2443 = vst [vmem:[#allocation11 + $0x28] sm:$0xff] %v2435
    // Predicated region
    $region54: #{tpu_custom_call.1} parent=1 // pred_check
      _
    $region55: #{tpu_custom_call.1} parent=1 // pred_check_branch
      %2445 = sbr.rel (0) target = $region57
    $region56: #{tpu_custom_call.1} parent=1 // pred_region
      %s2447 = ssub.s32 768, 768
      %2448 = vsyncadd [#allocation4], %s2447
      %s2449 = sshll.u32 [#allocation11], 4
      %s2450 = int_to_ptr.vmem [resolvable:$true] %s2449
      %2455 = dma.vmem_to_hbm [thread:$0]  %s2450, 768, %s8, [#allocation4], 128, 128, 8
    $region57: #{tpu_custom_call.1} parent=1 // pred_fallthru
      _
    // Predicated region
    $region58: #{tpu_custom_call.1} parent=1 // pred_check
      _
    $region59: #{tpu_custom_call.1} parent=1 // pred_check_branch
      %2457 = sbr.rel (0) target = $region61
    $region60: #{tpu_custom_call.1} parent=1 // pred_region
      %2458 = dma.done [#allocation4], 768
    $region61: #{tpu_custom_call.1} parent=1 // pred_fallthru
      _
    %2459 = vsyncpa [#allocation3], 1
    %2460 = vsyncpa [#allocation6], 1
    %2461 = vsyncpa [#allocation9], 1
    %2462 = vsyncpa [#allocation4], 1

</llo_original>
